<compile_context>
chip_gen: v6e
topology: v6e:2x2x1
jax: 0.10.0
libtpu: 0.0.40
codegen_flags: <defaults>
</compile_context>

<pallas_src>
import math
import functools

import numpy as np
import jax
import jax.numpy as jnp
from jax.experimental import pallas as pl
from jax.experimental.pallas import tpu as pltpu

# ------------------------- configuration -------------------------
D_MODEL = 32          # transformer_d_model
NUM_HEADS = 4         # transformer_num_heads_temporal
NUM_JOINTS = 4        # num_joints
WINDOW_LEN = 8        # transformer_window_length
BATCH = 2
SEQ_LEN = 8
DEPTH = D_MODEL // NUM_HEADS


# ------------------------- positional encoding (numpy, init-time) -------------------------
def positional_encoding(window_len, d_model):
    pos = np.arange(window_len)[:, np.newaxis].astype(np.float64)
    i = np.arange(d_model)[np.newaxis, :].astype(np.float64)
    angle_rates = 1.0 / np.power(10000, 2 * (i // 2) / np.float32(d_model))
    angle_rads = pos * angle_rates
    angle_rads[:, 0::2] = np.sin(angle_rads[:, 0::2])
    angle_rads[:, 1::2] = np.cos(angle_rads[:, 1::2])
    pos_encoding = angle_rads[np.newaxis, :, np.newaxis, :]      # (1, W, 1, D)
    return pos_encoding.astype(np.float32)


# ------------------------- one-time parameter prepack (numpy, NOT per call) ----------------
def prepack_params(params, mask, pos_encoding, batch, seq_len):
    """Packs per-joint Linears + constants into lane-dense slabs, once."""
    wq = np.asarray(params["wq"], np.float32)          # (J, D, D)
    wk = np.asarray(params["wk"], np.float32)
    wv = np.asarray(params["wv"], np.float32)
    bq = np.asarray(params["bq"], np.float32)          # (J, 1, D)
    bk = np.asarray(params["bk"], np.float32)
    bv = np.asarray(params["bv"], np.float32)
    wo = np.asarray(params["wo"], np.float32)          # (D, D)
    bo = np.asarray(params["bo"], np.float32)          # (1, D)

    J, D, _ = wq.shape
    H = NUM_HEADS
    depth = D // H
    N = J * H
    JD = J * D
    S = seq_len
    B = batch
    inv_sqrt_dk = 1.0 / math.sqrt(depth)

    def block_diag(ws):                                 # (J, Din, Dout) -> (J*Din, J*Dout)
        Jn, Din, Dout = ws.shape
        out = np.zeros((Jn * Din, Jn * Dout), np.float32)
        for j in range(Jn):
            out[j * Din:(j + 1) * Din, j * Dout:(j + 1) * Dout] = ws[j]
        return out

    # 1/sqrt(dk) folded into Wq / bq (review item).
    wqkv = np.concatenate([block_diag(wq * inv_sqrt_dk),
                           block_diag(wk),
                           block_diag(wv)], axis=1)                     # (JD, 3*JD)
    bqkv = np.concatenate([(bq * inv_sqrt_dk).reshape(1, JD),
                           bk.reshape(1, JD),
                           bv.reshape(1, JD)], axis=1)                  # (1, 3*JD)
    wo_big = np.kron(np.eye(J, dtype=np.float32), wo)                   # (JD, JD)
    bo_big = np.tile(bo.reshape(1, D), (1, J))                          # (1, JD)

    # Positional encoding slab, pre-flattened to (B*S, JD) so the add fuses in-kernel.
    pe = np.asarray(pos_encoding, np.float32)[0, :S, 0, :]              # (S, D)
    pe = np.tile(pe, (1, J))                                            # (S, JD)
    pe = np.tile(pe, (B, 1))                                            # (B*S, JD)

    # Causal bias tiled across all (joint, head) groups: (S, N*S).
    bias = np.tile(np.asarray(mask, np.float32) * (-1000000000.0), (1, N))

    # 0/1 block masks for the lane-dense block-diagonal attention.
    n_of_jd = np.arange(JD) // depth                                    # (JD,)
    n_of_col = np.arange(N * S) // S                                    # (N*S,)
    kmask = (n_of_jd[:, None] == n_of_col[None, :]).astype(np.float32)  # (JD, N*S)
    vmask = kmask.T.copy()                                              # (N*S, JD)

    return {
        "wqkv": jnp.asarray(wqkv), "bqkv": jnp.asarray(bqkv),
        "wo": jnp.asarray(wo_big), "bo": jnp.asarray(bo_big),
        "pe": jnp.asarray(pe), "bias": jnp.asarray(bias),
        "kmask": jnp.asarray(kmask), "vmask": jnp.asarray(vmask),
    }


# ------------------------- the Pallas kernel (single invocation, no grid) -------------------
def _sep_temporal_attn_kernel(x_ref, pe_ref, wqkv_ref, bqkv_ref, wo_ref, bo_ref,
                              bias_ref, kmask_ref, vmask_ref,
                              out_ref, attn_ref,
                              *, batch, seq_len, num_groups, depth):
    """Whole forward pass for all batch elements / joints / heads in one step.

    x_ref    : (B*S, JD)     activations, joints flattened on lanes
    pe_ref   : (B*S, JD)     positional encoding slab (added in-kernel)
    wqkv_ref : (JD, 3*JD)    block-diag(Wq/sqrt(dk)) | block-diag(Wk) | block-diag(Wv)
    bqkv_ref : (1, 3*JD)
    wo_ref   : (JD, JD)      kron(I_J, Wo)
    bo_ref   : (1, JD)
    bias_ref : (S, N*S)      causal mask * -1e9, tiled over the N (joint, head) groups
    kmask_ref: (JD, N*S)     0/1 block mask for the expanded K operand
    vmask_ref: (N*S, JD)     0/1 block mask for the expanded V operand
    out_ref  : (B*S, JD)     lane-dense output
    attn_ref : (B, N*S)      lane-dense last-query-row attention weights
    """
    B, S, N, d = batch, seq_len, num_groups, depth
    JD = N * d

    # Fused positional-encoding add (VALU slack) + one fused QKV projection
    # for all joints of both batch elements: (B*S, JD) @ (JD, 3*JD) on the MXU.
    x = x_ref[...] + pe_ref[...]                                         # (B*S, JD)
    qkv = jnp.dot(x, wqkv_ref[...], preferred_element_type=jnp.float32) + bqkv_ref[...]
    q = qkv[:, 0 * JD:1 * JD]       # 1/sqrt(dk) already folded into Wq / bq
    k = qkv[:, 1 * JD:2 * JD]
    v = qkv[:, 2 * JD:3 * JD]

    kmask = kmask_ref[...]
    vmask = vmask_ref[...]
    bias = bias_ref[...]
    wo = wo_ref[...]
    bo = bo_ref[...]

    # B = 2 -> unrolled at trace time; still a single grid step (no pipeline overhead).
    for b in range(B):
        rows = slice(b * S, (b + 1) * S)
        qb = q[rows, :]                                                  # (S, JD)
        kb = k[rows, :]
        vb = v[rows, :]

        # Lane-dense block-diagonal attention:
        #   K_exp[jd, n*S+ks] = k[ks, jd] iff jd // depth == n else 0
        #   V_exp[n*S+ks, jd] = v[ks, jd] iff jd // depth == n else 0
        # so a single full-width MXU matmul computes every head's q.k^T / attn.v.
        k_exp = jnp.tile(kb.T, (1, N)) * kmask                           # (JD, N*S)
        v_exp = jnp.tile(vb, (N, 1)) * vmask                             # (N*S, JD)

        logits = jnp.dot(qb, k_exp, preferred_element_type=jnp.float32) + bias  # (S, N*S)

        # Segmented softmax over the S keys of each (joint, head) lane group.
        l3 = logits.reshape(S, N, S)
        m = jnp.max(l3, axis=-1, keepdims=True)
        e = jnp.exp(l3 - m)
        den = jnp.sum(e, axis=-1, keepdims=True)
        w3 = e / den                      # exact normalization (attn weights are an output)
        w = w3.reshape(S, N * S)

        # Context lands directly in the (s, j*H*depth + h*depth + dd) output layout.
        ctx = jnp.dot(w, v_exp, preferred_element_type=jnp.float32)      # (S, JD)
        out_b = jnp.dot(ctx, wo, preferred_element_type=jnp.float32) + bo

        out_ref[rows, :] = out_b
        attn_ref[b:b + 1, :] = w[S - 1:S, :]      # last-query-row attention, lane-dense


# ------------------------- wrapper (thin: reshape + one pallas_call) -------------------------
def sep_temporal_attention(x, packed):
    """x: (B, S, J, D) float32.  Returns (outputs (B,S,J,D), attn (B,J,H,S))."""
    B, S, J, D = x.shape
    H, depth = NUM_HEADS, DEPTH
    N = J * H
    JD = J * D

    x2 = x.reshape(B * S, JD)            # contiguous reshape (metadata only in XLA)

    kernel = functools.partial(_sep_temporal_attn_kernel,
                               batch=B, seq_len=S, num_groups=N, depth=depth)

    vmem = pl.BlockSpec(memory_space=pltpu.MemorySpace.VMEM)
    out_flat, attn_flat = pl.pallas_call(
        kernel,
        out_shape=(jax.ShapeDtypeStruct((B * S, JD), jnp.float32),
                   jax.ShapeDtypeStruct((B, N * S), jnp.float32)),
        in_specs=[vmem] * 9,
        out_specs=(vmem, vmem),
    )(x2, packed["pe"], packed["wqkv"], packed["bqkv"], packed["wo"],
      packed["bo"], packed["bias"], packed["kmask"], packed["vmask"])

    outputs = out_flat.reshape(B, S, J, D)
    attn_weights = attn_flat.reshape(B, J, H, S)
    return outputs, attn_weights


# ------------------------- pure-JAX reference (for verification) -------------------------
def sep_temporal_attention_ref(x, mask, params, pos_encoding):
    B, S, J, D = x.shape
    H, depth = NUM_HEADS, DEPTH
    x = x + pos_encoding[:, :S]
    xp = jnp.transpose(x, (2, 0, 1, 3))                              # (J, B, S, D)
    outs, attns = [], []
    for j in range(J):
        xr = xp[j]                                                   # (B, S, D)
        q = xr @ params["wq"][j] + params["bq"][j]
        k = xr @ params["wk"][j] + params["bk"][j]
        v = xr @ params["wv"][j] + params["bv"][j]

        def split(t):
            return jnp.transpose(t.reshape(B, S, H, depth), (0, 2, 1, 3))
        q, k, v = split(q), split(k), split(v)                       # (B, H, S, depth)

        logits = jnp.einsum("bhqd,bhkd->bhqk", q, k) / math.sqrt(depth)
        logits = logits + mask[None, None] * (-1000000000.0)
        w = jax.nn.softmax(logits, axis=-1)
        ctx = jnp.einsum("bhqk,bhkd->bhqd", w, v)
        concat = jnp.transpose(ctx, (0, 2, 1, 3)).reshape(B, S, D)
        out = concat @ params["wo"] + params["bo"][0]
        outs.append(out[:, :, None, :])
        attns.append(w[:, :, -1, :])
    return jnp.concatenate(outs, axis=2), jnp.stack(attns, axis=1)


# ------------------------- main -------------------------
if __name__ == "__main__":
    key = jax.random.PRNGKey(0)
    keys = jax.random.split(key, 10)

    B, S, J, D = BATCH, SEQ_LEN, NUM_JOINTS, D_MODEL
    scale = 1.0 / math.sqrt(D)

    # Per-joint Q/K/V Linears, shared output Linear. Weights stored as (in, out).
    params = {
        "wq": scale * jax.random.normal(keys[0], (J, D, D), jnp.float32),
        "bq": 0.01 * jax.random.normal(keys[1], (J, 1, D), jnp.float32),
        "wk": scale * jax.random.normal(keys[2], (J, D, D), jnp.float32),
        "bk": 0.01 * jax.random.normal(keys[3], (J, 1, D), jnp.float32),
        "wv": scale * jax.random.normal(keys[4], (J, D, D), jnp.float32),
        "bv": 0.01 * jax.random.normal(keys[5], (J, 1, D), jnp.float32),
        "wo": scale * jax.random.normal(keys[6], (D, D), jnp.float32),
        "bo": 0.01 * jax.random.normal(keys[7], (1, D), jnp.float32),
    }

    pos_enc = jnp.asarray(positional_encoding(WINDOW_LEN, D))       # (1, W, 1, D)

    x = jax.random.normal(keys[8], (B, S, J, D), jnp.float32)
    # Look-ahead mask: 1.0 where the key position is in the future of the query.
    mask = jnp.triu(jnp.ones((S, S), jnp.float32), k=1)

    # One-time prepack (outside the forward path, per perf review).
    packed = prepack_params(params, mask, pos_enc, batch=B, seq_len=S)

    out, attn = sep_temporal_attention(x, packed)
    out = jax.block_until_ready(out)
    attn = jax.block_until_ready(attn)

    out_ref, attn_ref = sep_temporal_attention_ref(x, mask, params, pos_enc)

    assert out.shape == (B, S, J, D)
    assert attn.shape == (B, J, NUM_HEADS, S)
    np.testing.assert_allclose(np.asarray(out), np.asarray(out_ref), rtol=2e-3, atol=2e-3)
    np.testing.assert_allclose(np.asarray(attn), np.asarray(attn_ref), rtol=2e-3, atol=2e-3)

    print("KERNEL_OK")
</pallas_src>

<mosaic_0001>
module attributes {stable_mosaic.version = 11 : i64} {
  func.func @_sep_temporal_attn_kernel(%arg0: memref<16x128xf32, #tpu.memory_space<vmem>>, %arg1: memref<16x128xf32, #tpu.memory_space<vmem>>, %arg2: memref<128x384xf32, #tpu.memory_space<vmem>>, %arg3: memref<1x384xf32, #tpu.memory_space<vmem>>, %arg4: memref<128x128xf32, #tpu.memory_space<vmem>>, %arg5: memref<1x128xf32, #tpu.memory_space<vmem>>, %arg6: memref<8x128xf32, #tpu.memory_space<vmem>>, %arg7: memref<128x128xf32, #tpu.memory_space<vmem>>, %arg8: memref<128x128xf32, #tpu.memory_space<vmem>>, %arg9: memref<16x128xf32, #tpu.memory_space<vmem>>, %arg10: memref<2x128xf32, #tpu.memory_space<vmem>>) attributes {dimension_semantics = [], scalar_prefetch = 0 : i64, scratch_operands = 0 : i64, tpu.core_type = #tpu.core_type<tc>} {
    %c0 = arith.constant 0 : index
    %c0_0 = arith.constant 0 : index
    %0 = vector.load %arg0[%c0, %c0_0] : memref<16x128xf32, #tpu.memory_space<vmem>>, vector<16x128xf32>
    %c0_1 = arith.constant 0 : index
    %c0_2 = arith.constant 0 : index
    %1 = vector.load %arg1[%c0_1, %c0_2] : memref<16x128xf32, #tpu.memory_space<vmem>>, vector<16x128xf32>
    %2 = arith.addf %0, %1 : vector<16x128xf32>
    %c0_3 = arith.constant 0 : index
    %c0_4 = arith.constant 0 : index
    %3 = vector.load %arg2[%c0_3, %c0_4] : memref<128x384xf32, #tpu.memory_space<vmem>>, vector<128x384xf32>
    %cst = arith.constant dense<0.000000e+00> : vector<16x384xf32>
    %4 = tpu.matmul %2, %3, %cst {dimension_numbers = #tpu.dot_dimension_numbers<[1], [0], [0], [1], [0, 0, 1, 1], [], []>} : vector<16x128xf32>, vector<128x384xf32>, vector<16x384xf32> -> vector<16x384xf32>
    %c0_5 = arith.constant 0 : index
    %c0_6 = arith.constant 0 : index
    %5 = vector.load %arg3[%c0_5, %c0_6] : memref<1x384xf32, #tpu.memory_space<vmem>>, vector<1x384xf32>
    %6 = vector.broadcast %5 : vector<1x384xf32> to vector<16x384xf32>
    %7 = arith.addf %4, %6 : vector<16x384xf32>
    %8 = vector.extract_strided_slice %7 {offsets = [0, 0], sizes = [16, 128], strides = [1, 1]} : vector<16x384xf32> to vector<16x128xf32>
    %9 = vector.extract_strided_slice %7 {offsets = [0, 128], sizes = [16, 128], strides = [1, 1]} : vector<16x384xf32> to vector<16x128xf32>
    %10 = vector.extract_strided_slice %7 {offsets = [0, 256], sizes = [16, 128], strides = [1, 1]} : vector<16x384xf32> to vector<16x128xf32>
    %c0_7 = arith.constant 0 : index
    %c0_8 = arith.constant 0 : index
    %11 = vector.load %arg7[%c0_7, %c0_8] : memref<128x128xf32, #tpu.memory_space<vmem>>, vector<128x128xf32>
    %c0_9 = arith.constant 0 : index
    %c0_10 = arith.constant 0 : index
    %12 = vector.load %arg8[%c0_9, %c0_10] : memref<128x128xf32, #tpu.memory_space<vmem>>, vector<128x128xf32>
    %c0_11 = arith.constant 0 : index
    %c0_12 = arith.constant 0 : index
    %13 = vector.load %arg6[%c0_11, %c0_12] : memref<8x128xf32, #tpu.memory_space<vmem>>, vector<8x128xf32>
    %c0_13 = arith.constant 0 : index
    %c0_14 = arith.constant 0 : index
    %14 = vector.load %arg4[%c0_13, %c0_14] : memref<128x128xf32, #tpu.memory_space<vmem>>, vector<128x128xf32>
    %c0_15 = arith.constant 0 : index
    %c0_16 = arith.constant 0 : index
    %15 = vector.load %arg5[%c0_15, %c0_16] : memref<1x128xf32, #tpu.memory_space<vmem>>, vector<1x128xf32>
    %16 = vector.extract_strided_slice %8 {offsets = [0, 0], sizes = [8, 128], strides = [1, 1]} : vector<16x128xf32> to vector<8x128xf32>
    %17 = vector.extract_strided_slice %9 {offsets = [0, 0], sizes = [8, 128], strides = [1, 1]} : vector<16x128xf32> to vector<8x128xf32>
    %18 = vector.extract_strided_slice %10 {offsets = [0, 0], sizes = [8, 128], strides = [1, 1]} : vector<16x128xf32> to vector<8x128xf32>
    %19 = tpu.transpose %17, [1, 0] : vector<8x128xf32> -> vector<128x8xf32>
    %20 = tpu.concatenate %19, %19, %19, %19, %19, %19, %19, %19, %19, %19, %19, %19, %19, %19, %19, %19 in 1 : vector<128x8xf32>, vector<128x8xf32>, vector<128x8xf32>, vector<128x8xf32>, vector<128x8xf32>, vector<128x8xf32>, vector<128x8xf32>, vector<128x8xf32>, vector<128x8xf32>, vector<128x8xf32>, vector<128x8xf32>, vector<128x8xf32>, vector<128x8xf32>, vector<128x8xf32>, vector<128x8xf32>, vector<128x8xf32> -> vector<128x128xf32>
    %21 = arith.mulf %20, %11 : vector<128x128xf32>
    %22 = tpu.concatenate %18, %18, %18, %18, %18, %18, %18, %18, %18, %18, %18, %18, %18, %18, %18, %18 in 0 : vector<8x128xf32>, vector<8x128xf32>, vector<8x128xf32>, vector<8x128xf32>, vector<8x128xf32>, vector<8x128xf32>, vector<8x128xf32>, vector<8x128xf32>, vector<8x128xf32>, vector<8x128xf32>, vector<8x128xf32>, vector<8x128xf32>, vector<8x128xf32>, vector<8x128xf32>, vector<8x128xf32>, vector<8x128xf32> -> vector<128x128xf32>
    %23 = arith.mulf %22, %12 : vector<128x128xf32>
    %cst_17 = arith.constant dense<0.000000e+00> : vector<8x128xf32>
    %24 = tpu.matmul %16, %21, %cst_17 {dimension_numbers = #tpu.dot_dimension_numbers<[1], [0], [0], [1], [0, 0, 1, 1], [], []>} : vector<8x128xf32>, vector<128x128xf32>, vector<8x128xf32> -> vector<8x128xf32>
    %25 = arith.addf %24, %13 : vector<8x128xf32>
    %26 = vector.shape_cast %25 : vector<8x128xf32> to vector<8x16x8xf32>
    %cst_18 = arith.constant dense<0xFF800000> : vector<8x16xf32>
    %27 = vector.multi_reduction <maximumf>, %26, %cst_18 [2] : vector<8x16x8xf32> to vector<8x16xf32>
    %28 = vector.shape_cast %27 : vector<8x16xf32> to vector<8x16x1xf32>
    %29 = vector.broadcast %28 : vector<8x16x1xf32> to vector<8x16x8xf32>
    %30 = arith.subf %26, %29 : vector<8x16x8xf32>
    %31 = math.exp %30 : vector<8x16x8xf32>
    %cst_19 = arith.constant dense<0.000000e+00> : vector<8x16xf32>
    %32 = vector.multi_reduction <add>, %31, %cst_19 [2] : vector<8x16x8xf32> to vector<8x16xf32>
    %33 = vector.shape_cast %32 : vector<8x16xf32> to vector<8x16x1xf32>
    %34 = vector.broadcast %33 : vector<8x16x1xf32> to vector<8x16x8xf32>
    %35 = arith.divf %31, %34 : vector<8x16x8xf32>
    %36 = vector.shape_cast %35 : vector<8x16x8xf32> to vector<8x128xf32>
    %cst_20 = arith.constant dense<0.000000e+00> : vector<8x128xf32>
    %37 = tpu.matmul %36, %23, %cst_20 {dimension_numbers = #tpu.dot_dimension_numbers<[1], [0], [0], [1], [0, 0, 1, 1], [], []>} : vector<8x128xf32>, vector<128x128xf32>, vector<8x128xf32> -> vector<8x128xf32>
    %cst_21 = arith.constant dense<0.000000e+00> : vector<8x128xf32>
    %38 = tpu.matmul %37, %14, %cst_21 {dimension_numbers = #tpu.dot_dimension_numbers<[1], [0], [0], [1], [0, 0, 1, 1], [], []>} : vector<8x128xf32>, vector<128x128xf32>, vector<8x128xf32> -> vector<8x128xf32>
    %39 = vector.broadcast %15 : vector<1x128xf32> to vector<8x128xf32>
    %40 = arith.addf %38, %39 : vector<8x128xf32>
    %c0_22 = arith.constant 0 : index
    %c0_23 = arith.constant 0 : index
    %41 = vector.load %arg9[%c0_22, %c0_23] : memref<16x128xf32, #tpu.memory_space<vmem>>, vector<8x128xf32>
    tpu.vector_store %arg9[%c0_22, %c0_23], %40 {strides = array<i32>} : memref<16x128xf32, #tpu.memory_space<vmem>>, vector<8x128xf32>,
    %42 = vector.extract_strided_slice %36 {offsets = [7, 0], sizes = [1, 128], strides = [1, 1]} : vector<8x128xf32> to vector<1x128xf32>
    %c0_24 = arith.constant 0 : index
    %c0_25 = arith.constant 0 : index
    %43 = vector.load %arg10[%c0_24, %c0_25] : memref<2x128xf32, #tpu.memory_space<vmem>>, vector<1x128xf32>
    tpu.vector_store %arg10[%c0_24, %c0_25], %42 {strides = array<i32>} : memref<2x128xf32, #tpu.memory_space<vmem>>, vector<1x128xf32>,
    %44 = vector.extract_strided_slice %8 {offsets = [8, 0], sizes = [8, 128], strides = [1, 1]} : vector<16x128xf32> to vector<8x128xf32>
    %45 = vector.extract_strided_slice %9 {offsets = [8, 0], sizes = [8, 128], strides = [1, 1]} : vector<16x128xf32> to vector<8x128xf32>
    %46 = vector.extract_strided_slice %10 {offsets = [8, 0], sizes = [8, 128], strides = [1, 1]} : vector<16x128xf32> to vector<8x128xf32>
    %47 = tpu.transpose %45, [1, 0] : vector<8x128xf32> -> vector<128x8xf32>
    %48 = tpu.concatenate %47, %47, %47, %47, %47, %47, %47, %47, %47, %47, %47, %47, %47, %47, %47, %47 in 1 : vector<128x8xf32>, vector<128x8xf32>, vector<128x8xf32>, vector<128x8xf32>, vector<128x8xf32>, vector<128x8xf32>, vector<128x8xf32>, vector<128x8xf32>, vector<128x8xf32>, vector<128x8xf32>, vector<128x8xf32>, vector<128x8xf32>, vector<128x8xf32>, vector<128x8xf32>, vector<128x8xf32>, vector<128x8xf32> -> vector<128x128xf32>
    %49 = arith.mulf %48, %11 : vector<128x128xf32>
    %50 = tpu.concatenate %46, %46, %46, %46, %46, %46, %46, %46, %46, %46, %46, %46, %46, %46, %46, %46 in 0 : vector<8x128xf32>, vector<8x128xf32>, vector<8x128xf32>, vector<8x128xf32>, vector<8x128xf32>, vector<8x128xf32>, vector<8x128xf32>, vector<8x128xf32>, vector<8x128xf32>, vector<8x128xf32>, vector<8x128xf32>, vector<8x128xf32>, vector<8x128xf32>, vector<8x128xf32>, vector<8x128xf32>, vector<8x128xf32> -> vector<128x128xf32>
    %51 = arith.mulf %50, %12 : vector<128x128xf32>
    %cst_26 = arith.constant dense<0.000000e+00> : vector<8x128xf32>
    %52 = tpu.matmul %44, %49, %cst_26 {dimension_numbers = #tpu.dot_dimension_numbers<[1], [0], [0], [1], [0, 0, 1, 1], [], []>} : vector<8x128xf32>, vector<128x128xf32>, vector<8x128xf32> -> vector<8x128xf32>
    %53 = arith.addf %52, %13 : vector<8x128xf32>
    %54 = vector.shape_cast %53 : vector<8x128xf32> to vector<8x16x8xf32>
    %cst_27 = arith.constant dense<0xFF800000> : vector<8x16xf32>
    %55 = vector.multi_reduction <maximumf>, %54, %cst_27 [2] : vector<8x16x8xf32> to vector<8x16xf32>
    %56 = vector.shape_cast %55 : vector<8x16xf32> to vector<8x16x1xf32>
    %57 = vector.broadcast %56 : vector<8x16x1xf32> to vector<8x16x8xf32>
    %58 = arith.subf %54, %57 : vector<8x16x8xf32>
    %59 = math.exp %58 : vector<8x16x8xf32>
    %cst_28 = arith.constant dense<0.000000e+00> : vector<8x16xf32>
    %60 = vector.multi_reduction <add>, %59, %cst_28 [2] : vector<8x16x8xf32> to vector<8x16xf32>
    %61 = vector.shape_cast %60 : vector<8x16xf32> to vector<8x16x1xf32>
    %62 = vector.broadcast %61 : vector<8x16x1xf32> to vector<8x16x8xf32>
    %63 = arith.divf %59, %62 : vector<8x16x8xf32>
    %64 = vector.shape_cast %63 : vector<8x16x8xf32> to vector<8x128xf32>
    %cst_29 = arith.constant dense<0.000000e+00> : vector<8x128xf32>
    %65 = tpu.matmul %64, %51, %cst_29 {dimension_numbers = #tpu.dot_dimension_numbers<[1], [0], [0], [1], [0, 0, 1, 1], [], []>} : vector<8x128xf32>, vector<128x128xf32>, vector<8x128xf32> -> vector<8x128xf32>
    %cst_30 = arith.constant dense<0.000000e+00> : vector<8x128xf32>
    %66 = tpu.matmul %65, %14, %cst_30 {dimension_numbers = #tpu.dot_dimension_numbers<[1], [0], [0], [1], [0, 0, 1, 1], [], []>} : vector<8x128xf32>, vector<128x128xf32>, vector<8x128xf32> -> vector<8x128xf32>
    %67 = vector.broadcast %15 : vector<1x128xf32> to vector<8x128xf32>
    %68 = arith.addf %66, %67 : vector<8x128xf32>
    %c8 = arith.constant 8 : index
    %c0_31 = arith.constant 0 : index
    %69 = vector.load %arg9[%c8, %c0_31] : memref<16x128xf32, #tpu.memory_space<vmem>>, vector<8x128xf32>
    tpu.vector_store %arg9[%c8, %c0_31], %68 {strides = array<i32>} : memref<16x128xf32, #tpu.memory_space<vmem>>, vector<8x128xf32>,
    %70 = vector.extract_strided_slice %64 {offsets = [7, 0], sizes = [1, 128], strides = [1, 1]} : vector<8x128xf32> to vector<1x128xf32>
    %c1 = arith.constant 1 : index
    %c0_32 = arith.constant 0 : index
    %71 = vector.load %arg10[%c1, %c0_32] : memref<2x128xf32, #tpu.memory_space<vmem>>, vector<1x128xf32>
    tpu.vector_store %arg10[%c1, %c0_32], %70 {strides = array<i32>} : memref<2x128xf32, #tpu.memory_space<vmem>>, vector<1x128xf32>,
    return
  }
}

</mosaic_0001>

<llo_original>
// kernel: tpu_custom_call.1
$region0: #{tpu_custom_call.1}
  #allocation0 [shape = 'u32[]', space=smem, size = 0x4, offset = 0x4, fixed_abs, tag = 'smem constant byte address 0x4 - core index']
  #allocation1 [shape = 'u32[144,128]{1,0:T(1,128)}', space=vmem, size = 0x12000, scoped, tag = 'internal scratch']
  %s0 = inlined_call_operand.hbm [shape: f32[16,128], index: 0, kind: input, shape index: {}]
  %s1 = inlined_call_operand.hbm [shape: f32[16,128], index: 1, kind: input, shape index: {}]
  %s2 = inlined_call_operand.hbm [shape: f32[128,384], index: 2, kind: input, shape index: {}]
  %s3 = inlined_call_operand.hbm [shape: f32[1,384], index: 3, kind: input, shape index: {}]
  %s4 = inlined_call_operand.hbm [shape: f32[128,128], index: 4, kind: input, shape index: {}]
  %s5 = inlined_call_operand.vmem [shape: f32[1,128], index: 5, kind: input, shape index: {}]
  %s6 = inlined_call_operand.vmem [shape: f32[8,128], index: 6, kind: input, shape index: {}]
  %s7 = inlined_call_operand.hbm [shape: f32[128,128], index: 7, kind: input, shape index: {}]
  %s8 = inlined_call_operand.hbm [shape: f32[128,128], index: 8, kind: input, shape index: {}]
  %s9 = inlined_call_operand.hbm [shape: f32[16,128], index: 9, kind: output, shape index: {0}]
  %s10 = inlined_call_operand.hbm [shape: f32[2,128], index: 10, kind: output, shape index: {1}]
  %11 = xla_tuple %s9, %s10
  %s12 = sld [smem:[#allocation0]]
  $region82: #{tpu_custom_call.1} parent=0
    _
  %s14 = ssub.s32 1, %s12
  %s15 = scalar_select 0, %s14, %s12
  $region1: #{tpu_custom_call.1} parent=0
    #allocation2 [shape = 'u8[8192]{0}', space=vmem, size = 0x2000, scoped, tag = 'input window, operand 0, single buffered']
    #allocation3 [shape = 's32[1]{0}', space=sflag, size = 0x4, scoped, tag = 'scoped memory for tpu_custom_call.1']
    #allocation4 [shape = 's32[1]{0}', space=sflag, size = 0x4, scoped, tag = 'scoped memory for tpu_custom_call.1']
    #allocation5 [shape = 'u8[8192]{0}', space=vmem, size = 0x2000, scoped, tag = 'input window, operand 1, single buffered']
    #allocation6 [shape = 's32[1]{0}', space=sflag, size = 0x4, scoped, tag = 'scoped memory for tpu_custom_call.1']
    #allocation7 [shape = 'u8[196608]{0}', space=vmem, size = 0x30000, scoped, tag = 'input window, operand 2, single buffered']
    #allocation8 [shape = 'u8[1536]{0}', space=vmem, size = 0x800, scoped, tag = 'input window, operand 3, single buffered']
    #allocation9 [shape = 's32[1]{0}', space=sflag, size = 0x4, scoped, tag = 'scoped memory for tpu_custom_call.1']
    #allocation10 [shape = 'u8[65536]{0}', space=vmem, size = 0x10000, scoped, tag = 'input window, operand 4, single buffered']
    #allocation11 [shape = 'u8[65536]{0}', space=vmem, size = 0x10000, scoped, tag = 'input window, operand 7, single buffered']
    #allocation12 [shape = 's32[1]{0}', space=sflag, size = 0x4, scoped, tag = 'scoped memory for tpu_custom_call.1']
    #allocation13 [shape = 'u8[65536]{0}', space=vmem, size = 0x10000, scoped, tag = 'input window, operand 8, single buffered']
    #allocation14 [shape = 'u8[8192]{0}', space=vmem, size = 0x2000, scoped, tag = 'output window, operand 0, single buffered']
    #allocation15 [shape = 'u8[1024]{0}', space=vmem, size = 0x400, scoped, tag = 'output window, operand 1, single buffered']
    #allocation16 [shape = 's32[1]{0}', space=sflag, size = 0x4, scoped, tag = 'scoped memory for tpu_custom_call.1']
    %16 = vsyncpa [#allocation3], 0
    %17 = vsyncpa [#allocation6], 0
    %18 = vsyncpa [#allocation9], 0
    %19 = vsyncpa [#allocation12], 0
    %20 = vsyncpa [#allocation4], 0
    %21 = vsyncpa [#allocation16], 0
    // Predicated region
    $region2: #{tpu_custom_call.1} parent=1 // pred_check
      _
    $region3: #{tpu_custom_call.1} parent=1 // pred_check_branch
      %23 = sbr.rel (0) target = $region5
    $region4: #{tpu_custom_call.1} parent=1 // pred_region
      %s25 = ssub.s32 256, 256
      %26 = vsyncadd [#allocation3], %s25
      %s27 = sshll.u32 [#allocation2], 4
      %s28 = int_to_ptr.vmem [resolvable:$true] %s27
      %33 = dma.hbm_to_vmem [thread:$0]  %s0, 256, %s28, [#allocation3], 128, 128, 8
    $region5: #{tpu_custom_call.1} parent=1 // pred_fallthru
      _
    // Predicated region
    $region6: #{tpu_custom_call.1} parent=1 // pred_check
      _
    $region7: #{tpu_custom_call.1} parent=1 // pred_check_branch
      %35 = sbr.rel (0) target = $region9
    $region8: #{tpu_custom_call.1} parent=1 // pred_region
      %s37 = ssub.s32 256, 256
      %38 = vsyncadd [#allocation6], %s37
      %s39 = sshll.u32 [#allocation5], 4
      %s40 = int_to_ptr.vmem [resolvable:$true] %s39
      %45 = dma.hbm_to_vmem [thread:$0]  %s1, 256, %s40, [#allocation6], 128, 128, 8
    $region9: #{tpu_custom_call.1} parent=1 // pred_fallthru
      _
    // Predicated region
    $region10: #{tpu_custom_call.1} parent=1 // pred_check
      _
    $region11: #{tpu_custom_call.1} parent=1 // pred_check_branch
      %47 = sbr.rel (0) target = $region13
    $region12: #{tpu_custom_call.1} parent=1 // pred_region
      %s49 = ssub.s32 6144, 6144
      %50 = vsyncadd [#allocation6], %s49
      %s51 = sshll.u32 [#allocation7], 4
      %s52 = int_to_ptr.vmem [resolvable:$true] %s51
      %57 = dma.hbm_to_vmem [thread:$0]  %s2, 6144, %s52, [#allocation6], 384, 384, 24
    $region13: #{tpu_custom_call.1} parent=1 // pred_fallthru
      _
    // Predicated region
    $region14: #{tpu_custom_call.1} parent=1 // pred_check
      _
    $region15: #{tpu_custom_call.1} parent=1 // pred_check_branch
      %59 = sbr.rel (0) target = $region17
    $region16: #{tpu_custom_call.1} parent=1 // pred_region
      %s61 = ssub.s32 48, 48
      %62 = vsyncadd [#allocation9], %s61
      %s64 = sshll.u32 [#allocation8], 4
      %s65 = int_to_ptr.vmem [resolvable:$true] %s64
      %67 = dma.hbm_to_vmem [thread:$0]  %s3, 48, %s65, [#allocation9]
    $region17: #{tpu_custom_call.1} parent=1 // pred_fallthru
      _
    // Predicated region
    $region18: #{tpu_custom_call.1} parent=1 // pred_check
      _
    $region19: #{tpu_custom_call.1} parent=1 // pred_check_branch
      %69 = sbr.rel (0) target = $region21
    $region20: #{tpu_custom_call.1} parent=1 // pred_region
      %s71 = ssub.s32 2048, 2048
      %72 = vsyncadd [#allocation9], %s71
      %s73 = sshll.u32 [#allocation10], 4
      %s74 = int_to_ptr.vmem [resolvable:$true] %s73
      %79 = dma.hbm_to_vmem [thread:$0]  %s4, 2048, %s74, [#allocation9], 128, 128, 8
    $region21: #{tpu_custom_call.1} parent=1 // pred_fallthru
      _
    // Predicated region
    $region22: #{tpu_custom_call.1} parent=1 // pred_check
      _
    $region23: #{tpu_custom_call.1} parent=1 // pred_check_branch
      %81 = sbr.rel (0) target = $region25
    $region24: #{tpu_custom_call.1} parent=1 // pred_region
      _
    $region25: #{tpu_custom_call.1} parent=1 // pred_fallthru
      _
    // Predicated region
    $region26: #{tpu_custom_call.1} parent=1 // pred_check
      _
    $region27: #{tpu_custom_call.1} parent=1 // pred_check_branch
      %83 = sbr.rel (0) target = $region29
    $region28: #{tpu_custom_call.1} parent=1 // pred_region
      _
    $region29: #{tpu_custom_call.1} parent=1 // pred_fallthru
      _
    // Predicated region
    $region30: #{tpu_custom_call.1} parent=1 // pred_check
      _
    $region31: #{tpu_custom_call.1} parent=1 // pred_check_branch
      %85 = sbr.rel (0) target = $region33
    $region32: #{tpu_custom_call.1} parent=1 // pred_region
      %s87 = ssub.s32 2048, 2048
      %88 = vsyncadd [#allocation12], %s87
      %s89 = sshll.u32 [#allocation11], 4
      %s90 = int_to_ptr.vmem [resolvable:$true] %s89
      %95 = dma.hbm_to_vmem [thread:$0]  %s7, 2048, %s90, [#allocation12], 128, 128, 8
    $region33: #{tpu_custom_call.1} parent=1 // pred_fallthru
      _
    // Predicated region
    $region34: #{tpu_custom_call.1} parent=1 // pred_check
      _
    $region35: #{tpu_custom_call.1} parent=1 // pred_check_branch
      %97 = sbr.rel (0) target = $region37
    $region36: #{tpu_custom_call.1} parent=1 // pred_region
      %s99 = ssub.s32 2048, 2048
      %100 = vsyncadd [#allocation12], %s99
      %s101 = sshll.u32 [#allocation13], 4
      %s102 = int_to_ptr.vmem [resolvable:$true] %s101
      %107 = dma.hbm_to_vmem [thread:$0]  %s8, 2048, %s102, [#allocation12], 128, 128, 8
    $region37: #{tpu_custom_call.1} parent=1 // pred_fallthru
      _
    // Predicated region
    $region38: #{tpu_custom_call.1} parent=1 // pred_check
      _
    $region39: #{tpu_custom_call.1} parent=1 // pred_check_branch
      %109 = sbr.rel (0) target = $region41
    $region40: #{tpu_custom_call.1} parent=1 // pred_region
      %110 = dma.done [#allocation3], 256
    $region41: #{tpu_custom_call.1} parent=1 // pred_fallthru
      _
    // Predicated region
    $region42: #{tpu_custom_call.1} parent=1 // pred_check
      _
    $region43: #{tpu_custom_call.1} parent=1 // pred_check_branch
      %112 = sbr.rel (0) target = $region45
    $region44: #{tpu_custom_call.1} parent=1 // pred_region
      %113 = dma.done [#allocation6], 256
    $region45: #{tpu_custom_call.1} parent=1 // pred_fallthru
      _
    // Predicated region
    $region46: #{tpu_custom_call.1} parent=1 // pred_check
      _
    $region47: #{tpu_custom_call.1} parent=1 // pred_check_branch
      %115 = sbr.rel (0) target = $region49
    $region48: #{tpu_custom_call.1} parent=1 // pred_region
      %116 = dma.done [#allocation6], 6144
    $region49: #{tpu_custom_call.1} parent=1 // pred_fallthru
      _
    // Predicated region
    $region50: #{tpu_custom_call.1} parent=1 // pred_check
      _
    $region51: #{tpu_custom_call.1} parent=1 // pred_check_branch
      %118 = sbr.rel (0) target = $region53
    $region52: #{tpu_custom_call.1} parent=1 // pred_region
      %119 = dma.done [#allocation9], 48
    $region53: #{tpu_custom_call.1} parent=1 // pred_fallthru
      _
    // Predicated region
    $region54: #{tpu_custom_call.1} parent=1 // pred_check
      _
    $region55: #{tpu_custom_call.1} parent=1 // pred_check_branch
      %121 = sbr.rel (0) target = $region57
    $region56: #{tpu_custom_call.1} parent=1 // pred_region
      %122 = dma.done [#allocation9], 2048
    $region57: #{tpu_custom_call.1} parent=1 // pred_fallthru
      _
    // Predicated region
    $region58: #{tpu_custom_call.1} parent=1 // pred_check
      _
    $region59: #{tpu_custom_call.1} parent=1 // pred_check_branch
      %124 = sbr.rel (0) target = $region61
    $region60: #{tpu_custom_call.1} parent=1 // pred_region
      %125 = dma.done [#allocation12], 2048
    $region61: #{tpu_custom_call.1} parent=1 // pred_fallthru
      _
    // Predicated region
    $region62: #{tpu_custom_call.1} parent=1 // pred_check
      _
    $region63: #{tpu_custom_call.1} parent=1 // pred_check_branch
      %127 = sbr.rel (0) target = $region65
    $region64: #{tpu_custom_call.1} parent=1 // pred_region
      %128 = dma.done [#allocation12], 2048
    $region65: #{tpu_custom_call.1} parent=1 // pred_fallthru
      _
    %v129 = vld [vmem:[#allocation2] sm:$0xff]
    %v130 = vld [vmem:[#allocation2 + $0x8] sm:$0xff]
    %v131 = vld [vmem:[#allocation5] sm:$0xff]
    %v132 = vld [vmem:[#allocation5 + $0x8] sm:$0xff]
    %v133 = vadd.f32 %v129, %v131
    %v134 = vadd.f32 %v130, %v132
    %v135 = vld [vmem:[#allocation7] sm:$0xff]
    %v136 = vld [vmem:[#allocation7 + $0x8] sm:$0xff]
    %v137 = vld [vmem:[#allocation7 + $0x10] sm:$0xff]
    %v138 = vld [vmem:[#allocation7 + $0x18] sm:$0xff]
    %v139 = vld [vmem:[#allocation7 + $0x20] sm:$0xff]
    %v140 = vld [vmem:[#allocation7 + $0x28] sm:$0xff]
    %v141 = vld [vmem:[#allocation7 + $0x30] sm:$0xff]
    %v142 = vld [vmem:[#allocation7 + $0x38] sm:$0xff]
    %v143 = vld [vmem:[#allocation7 + $0x40] sm:$0xff]
    %v144 = vld [vmem:[#allocation7 + $0x48] sm:$0xff]
    %v145 = vld [vmem:[#allocation7 + $0x50] sm:$0xff]
    %v146 = vld [vmem:[#allocation7 + $0x58] sm:$0xff]
    %v147 = vld [vmem:[#allocation7 + $0x60] sm:$0xff]
    %v148 = vld [vmem:[#allocation7 + $0x68] sm:$0xff]
    %v149 = vld [vmem:[#allocation7 + $0x70] sm:$0xff]
    %v150 = vld [vmem:[#allocation7 + $0x78] sm:$0xff]
    %v151 = vld [vmem:[#allocation7 + $0x80] sm:$0xff]
    %v152 = vld [vmem:[#allocation7 + $0x88] sm:$0xff]
    %v153 = vld [vmem:[#allocation7 + $0x90] sm:$0xff]
    %v154 = vld [vmem:[#allocation7 + $0x98] sm:$0xff]
    %v155 = vld [vmem:[#allocation7 + $0xa0] sm:$0xff]
    %v156 = vld [vmem:[#allocation7 + $0xa8] sm:$0xff]
    %v157 = vld [vmem:[#allocation7 + $0xb0] sm:$0xff]
    %v158 = vld [vmem:[#allocation7 + $0xb8] sm:$0xff]
    %v159 = vld [vmem:[#allocation7 + $0xc0] sm:$0xff]
    %v160 = vld [vmem:[#allocation7 + $0xc8] sm:$0xff]
    %v161 = vld [vmem:[#allocation7 + $0xd0] sm:$0xff]
    %v162 = vld [vmem:[#allocation7 + $0xd8] sm:$0xff]
    %v163 = vld [vmem:[#allocation7 + $0xe0] sm:$0xff]
    %v164 = vld [vmem:[#allocation7 + $0xe8] sm:$0xff]
    %v165 = vld [vmem:[#allocation7 + $0xf0] sm:$0xff]
    %v166 = vld [vmem:[#allocation7 + $0xf8] sm:$0xff]
    %v167 = vld [vmem:[#allocation7 + $0x100] sm:$0xff]
    %v168 = vld [vmem:[#allocation7 + $0x108] sm:$0xff]
    %v169 = vld [vmem:[#allocation7 + $0x110] sm:$0xff]
    %v170 = vld [vmem:[#allocation7 + $0x118] sm:$0xff]
    %v171 = vld [vmem:[#allocation7 + $0x120] sm:$0xff]
    %v172 = vld [vmem:[#allocation7 + $0x128] sm:$0xff]
    %v173 = vld [vmem:[#allocation7 + $0x130] sm:$0xff]
    %v174 = vld [vmem:[#allocation7 + $0x138] sm:$0xff]
    %v175 = vld [vmem:[#allocation7 + $0x140] sm:$0xff]
    %v176 = vld [vmem:[#allocation7 + $0x148] sm:$0xff]
    %v177 = vld [vmem:[#allocation7 + $0x150] sm:$0xff]
    %v178 = vld [vmem:[#allocation7 + $0x158] sm:$0xff]
    %v179 = vld [vmem:[#allocation7 + $0x160] sm:$0xff]
    %v180 = vld [vmem:[#allocation7 + $0x168] sm:$0xff]
    %v181 = vld [vmem:[#allocation7 + $0x170] sm:$0xff]
    %v182 = vld [vmem:[#allocation7 + $0x178] sm:$0xff]
    %v183 = vld [vmem:[#allocation8] sm:$0x7]
    %v185 = vlaneseq
    %v186 = vshrl.u32 %v185, 7
    %v187 = vsub.s32 0, %v186
    %v188 = vrot.slane %v183, %v187
    %v189 = vlaneseq
    %v190 = vshrl.u32 %v189, 7
    %v191 = vsub.s32 1, %v190
    %v192 = vrot.slane %v183, %v191
    %v193 = vlaneseq
    %v194 = vshrl.u32 %v193, 7
    %v195 = vsub.s32 2, %v194
    %v196 = vrot.slane %v183, %v195
    %200 = vmatprep.subr.mxu0 %v181
    %201 = vmatpush1.msra.mxu0 %v180
    %202 = vmatprep.subr.mxu0 %v178
    %203 = vmatpush1.msra.mxu0 %v177
    %204 = vmatprep.subr.mxu0 %v175
    %205 = vmatpush1.msra.mxu0 %v174
    %206 = vmatprep.subr.mxu0 %v172
    %207 = vmatpush1.msra.mxu0 %v171
    %208 = vmatprep.subr.mxu0 %v169
    %209 = vmatpush1.msra.mxu0 %v168
    %210 = vmatprep.subr.mxu0 %v166
    %211 = vmatpush1.msra.mxu0 %v165
    %212 = vmatprep.subr.mxu0 %v163
    %213 = vmatpush1.msra.mxu0 %v162
    %214 = vmatprep.subr.mxu0 %v160
    %215 = vmatpush1.msra.mxu0 %v159
    %216 = vmatprep.subr.mxu0 %v157
    %217 = vmatpush1.msra.mxu0 %v156
    %218 = vmatprep.subr.mxu0 %v154
    %219 = vmatpush1.msra.mxu0 %v153
    %220 = vmatprep.subr.mxu0 %v151
    %221 = vmatpush1.msra.mxu0 %v150
    %222 = vmatprep.subr.mxu0 %v148
    %223 = vmatpush1.msra.mxu0 %v147
    %224 = vmatprep.subr.mxu0 %v145
    %225 = vmatpush1.msra.mxu0 %v144
    %226 = vmatprep.subr.mxu0 %v142
    %227 = vmatpush1.msra.mxu0 %v141
    %228 = vmatprep.subr.mxu0 %v139
    %229 = vmatpush1.msra.mxu0 %v138
    %230 = vmatprep.subr.mxu0 %v136
    %231 = vmatpush1.msra.mxu0 %v135
    %232 = vmatprep.subr.mxu0 0.0
    %233 = vmatpush2.msra.mxu0 0.0
    %234 = vmatprep.subr.mxu0 0.0
    %235 = vmatpush2.msra.mxu0 0.0
    %236 = vmatprep.subr.mxu0 0.0
    %237 = vmatpush2.msra.mxu0 0.0
    %238 = vmatprep.subr.mxu0 0.0
    %239 = vmatpush2.msra.mxu0 0.0
    %240 = vmatprep.subr.mxu0 0.0
    %241 = vmatpush2.msra.mxu0 0.0
    %242 = vmatprep.subr.mxu0 0.0
    %243 = vmatpush2.msra.mxu0 0.0
    %244 = vmatprep.subr.mxu0 0.0
    %245 = vmatpush2.msra.mxu0 0.0
    %246 = vmatprep.subr.mxu0 0.0
    %247 = vmatpush2.msra.mxu0 0.0
    %248 = vmatprep.subr.mxu0 0.0
    %249 = vmatpush2.msra.mxu0 0.0
    %250 = vmatprep.subr.mxu0 0.0
    %251 = vmatpush2.msra.mxu0 0.0
    %252 = vmatprep.subr.mxu0 0.0
    %253 = vmatpush2.msra.mxu0 0.0
    %254 = vmatprep.subr.mxu0 0.0
    %255 = vmatpush2.msra.mxu0 0.0
    %256 = vmatprep.subr.mxu0 0.0
    %257 = vmatpush2.msra.mxu0 0.0
    %258 = vmatprep.subr.mxu0 0.0
    %259 = vmatpush2.msra.mxu0 0.0
    %260 = vmatprep.subr.mxu0 0.0
    %261 = vmatpush2.msra.mxu0 0.0
    %262 = vmatprep.subr.mxu0 0.0
    %263 = vmatpush2.msra.mxu0 0.0
    %264 = vmatprep.mubr.f32.mxu0 0.0
    %265 = vmatmul.mubr.f32.gmra.mxu0 %v133
    %v266 = vpop.f32.mrf.mxu0
    %v267 = vadd.f32 %v188, %v266
    %v268 = vpop.f32.mrf.mxu0
    %v269 = vadd.f32 %v192, %v268
    %270 = vmatprep.mubr.f32.mxu0 0.0
    %271 = vmatmul.mubr.f32.gmra.mxu0 %v134
    %v272 = vpop.f32.mrf.mxu0
    %v273 = vadd.f32 %v188, %v272
    %v274 = vpop.f32.mrf.mxu0
    %v275 = vadd.f32 %v192, %v274
    %276 = vdwg.mxu0
    %277 = vmatprep.subr.mxu0 0.0
    %278 = vmatpush1.msra.mxu0 %v182
    %279 = vmatprep.subr.mxu0 0.0
    %280 = vmatpush1.msra.mxu0 %v179
    %281 = vmatprep.subr.mxu0 0.0
    %282 = vmatpush1.msra.mxu0 %v176
    %283 = vmatprep.subr.mxu0 0.0
    %284 = vmatpush1.msra.mxu0 %v173
    %285 = vmatprep.subr.mxu0 0.0
    %286 = vmatpush1.msra.mxu0 %v170
    %287 = vmatprep.subr.mxu0 0.0
    %288 = vmatpush1.msra.mxu0 %v167
    %289 = vmatprep.subr.mxu0 0.0
    %290 = vmatpush1.msra.mxu0 %v164
    %291 = vmatprep.subr.mxu0 0.0
    %292 = vmatpush1.msra.mxu0 %v161
    %293 = vmatprep.subr.mxu0 0.0
    %294 = vmatpush1.msra.mxu0 %v158
    %295 = vmatprep.subr.mxu0 0.0
    %296 = vmatpush1.msra.mxu0 %v155
    %297 = vmatprep.subr.mxu0 0.0
    %298 = vmatpush1.msra.mxu0 %v152
    %299 = vmatprep.subr.mxu0 0.0
    %300 = vmatpush1.msra.mxu0 %v149
    %301 = vmatprep.subr.mxu0 0.0
    %302 = vmatpush1.msra.mxu0 %v146
    %303 = vmatprep.subr.mxu0 0.0
    %304 = vmatpush1.msra.mxu0 %v143
    %305 = vmatprep.subr.mxu0 0.0
    %306 = vmatpush1.msra.mxu0 %v140
    %307 = vmatprep.subr.mxu0 0.0
    %308 = vmatpush1.msra.mxu0 %v137
    %309 = vmatprep.subr.mxu0 0.0
    %310 = vmatpush2.msra.mxu0 0.0
    %311 = vmatprep.subr.mxu0 0.0
    %312 = vmatpush2.msra.mxu0 0.0
    %313 = vmatprep.subr.mxu0 0.0
    %314 = vmatpush2.msra.mxu0 0.0
    %315 = vmatprep.subr.mxu0 0.0
    %316 = vmatpush2.msra.mxu0 0.0
    %317 = vmatprep.subr.mxu0 0.0
    %318 = vmatpush2.msra.mxu0 0.0
    %319 = vmatprep.subr.mxu0 0.0
    %320 = vmatpush2.msra.mxu0 0.0
    %321 = vmatprep.subr.mxu0 0.0
    %322 = vmatpush2.msra.mxu0 0.0
    %323 = vmatprep.subr.mxu0 0.0
    %324 = vmatpush2.msra.mxu0 0.0
    %325 = vmatprep.subr.mxu0 0.0
    %326 = vmatpush2.msra.mxu0 0.0
    %327 = vmatprep.subr.mxu0 0.0
    %328 = vmatpush2.msra.mxu0 0.0
    %329 = vmatprep.subr.mxu0 0.0
    %330 = vmatpush2.msra.mxu0 0.0
    %331 = vmatprep.subr.mxu0 0.0
    %332 = vmatpush2.msra.mxu0 0.0
    %333 = vmatprep.subr.mxu0 0.0
    %334 = vmatpush2.msra.mxu0 0.0
    %335 = vmatprep.subr.mxu0 0.0
    %336 = vmatpush2.msra.mxu0 0.0
    %337 = vmatprep.subr.mxu0 0.0
    %338 = vmatpush2.msra.mxu0 0.0
    %339 = vmatprep.subr.mxu0 0.0
    %340 = vmatpush2.msra.mxu0 0.0
    %341 = vmatprep.mubr.f32.mxu0 0.0
    %342 = vmatmul.mubr.f32.gmra.mxu0 %v133
    %v343 = vpop.f32.mrf.mxu0
    %v344 = vadd.f32 %v196, %v343
    %v345 = vpop.f32.mrf.mxu0
    %346 = vmatprep.mubr.f32.mxu0 0.0
    %347 = vmatmul.mubr.f32.gmra.mxu0 %v134
    %v348 = vpop.f32.mrf.mxu0
    %v349 = vadd.f32 %v196, %v348
    %v350 = vpop.f32.mrf.mxu0
    %351 = vdwg.mxu0
    %v352 = vld [vmem:[#allocation11] sm:$0xff]
    %v353 = vld [vmem:[#allocation11 + $0x8] sm:$0xff]
    %v354 = vld [vmem:[#allocation11 + $0x10] sm:$0xff]
    %v355 = vld [vmem:[#allocation11 + $0x18] sm:$0xff]
    %v356 = vld [vmem:[#allocation11 + $0x20] sm:$0xff]
    %v357 = vld [vmem:[#allocation11 + $0x28] sm:$0xff]
    %v358 = vld [vmem:[#allocation11 + $0x30] sm:$0xff]
    %v359 = vld [vmem:[#allocation11 + $0x38] sm:$0xff]
    %v360 = vld [vmem:[#allocation11 + $0x40] sm:$0xff]
    %v361 = vld [vmem:[#allocation11 + $0x48] sm:$0xff]
    %v362 = vld [vmem:[#allocation11 + $0x50] sm:$0xff]
    %v363 = vld [vmem:[#allocation11 + $0x58] sm:$0xff]
    %v364 = vld [vmem:[#allocation11 + $0x60] sm:$0xff]
    %v365 = vld [vmem:[#allocation11 + $0x68] sm:$0xff]
    %v366 = vld [vmem:[#allocation11 + $0x70] sm:$0xff]
    %v367 = vld [vmem:[#allocation11 + $0x78] sm:$0xff]
    %v368 = vld [vmem:[#allocation13] sm:$0xff]
    %v369 = vld [vmem:[#allocation13 + $0x8] sm:$0xff]
    %v370 = vld [vmem:[#allocation13 + $0x10] sm:$0xff]
    %v371 = vld [vmem:[#allocation13 + $0x18] sm:$0xff]
    %v372 = vld [vmem:[#allocation13 + $0x20] sm:$0xff]
    %v373 = vld [vmem:[#allocation13 + $0x28] sm:$0xff]
    %v374 = vld [vmem:[#allocation13 + $0x30] sm:$0xff]
    %v375 = vld [vmem:[#allocation13 + $0x38] sm:$0xff]
    %v376 = vld [vmem:[#allocation13 + $0x40] sm:$0xff]
    %v377 = vld [vmem:[#allocation13 + $0x48] sm:$0xff]
    %v378 = vld [vmem:[#allocation13 + $0x50] sm:$0xff]
    %v379 = vld [vmem:[#allocation13 + $0x58] sm:$0xff]
    %v380 = vld [vmem:[#allocation13 + $0x60] sm:$0xff]
    %v381 = vld [vmem:[#allocation13 + $0x68] sm:$0xff]
    %v382 = vld [vmem:[#allocation13 + $0x70] sm:$0xff]
    %v383 = vld [vmem:[#allocation13 + $0x78] sm:$0xff]
    %v384 = vld [vmem:[%s6] sm:$0xff]
    %v385 = vld [vmem:[#allocation10] sm:$0xff]
    %v386 = vld [vmem:[#allocation10 + $0x8] sm:$0xff]
    %v387 = vld [vmem:[#allocation10 + $0x10] sm:$0xff]
    %v388 = vld [vmem:[#allocation10 + $0x18] sm:$0xff]
    %v389 = vld [vmem:[#allocation10 + $0x20] sm:$0xff]
    %v390 = vld [vmem:[#allocation10 + $0x28] sm:$0xff]
    %v391 = vld [vmem:[#allocation10 + $0x30] sm:$0xff]
    %v392 = vld [vmem:[#allocation10 + $0x38] sm:$0xff]
    %v393 = vld [vmem:[#allocation10 + $0x40] sm:$0xff]
    %v394 = vld [vmem:[#allocation10 + $0x48] sm:$0xff]
    %v395 = vld [vmem:[#allocation10 + $0x50] sm:$0xff]
    %v396 = vld [vmem:[#allocation10 + $0x58] sm:$0xff]
    %v397 = vld [vmem:[#allocation10 + $0x60] sm:$0xff]
    %v398 = vld [vmem:[#allocation10 + $0x68] sm:$0xff]
    %v399 = vld [vmem:[#allocation10 + $0x70] sm:$0xff]
    %v400 = vld [vmem:[#allocation10 + $0x78] sm:$0xff]
    %v401 = vld [vmem:[%s5] sm:$0x1]
    %402 = vxpose.xlu0.b32.start [1/16] %v269, 128
    %403 = vxpose.xlu0.b32.cont [2/16] 0.0, 128
    %404 = vxpose.xlu0.b32.cont [3/16] 0.0, 128
    %405 = vxpose.xlu0.b32.cont [4/16] 0.0, 128
    %406 = vxpose.xlu0.b32.cont [5/16] 0.0, 128
    %407 = vxpose.xlu0.b32.cont [6/16] 0.0, 128
    %408 = vxpose.xlu0.b32.cont [7/16] 0.0, 128
    %409 = vxpose.xlu0.b32.cont [8/16] 0.0, 128
    %410 = vxpose.xlu0.b32.cont [9/16] 0.0, 128
    %411 = vxpose.xlu0.b32.cont [10/16] 0.0, 128
    %412 = vxpose.xlu0.b32.cont [11/16] 0.0, 128
    %413 = vxpose.xlu0.b32.cont [12/16] 0.0, 128
    %414 = vxpose.xlu0.b32.cont [13/16] 0.0, 128
    %415 = vxpose.xlu0.b32.cont [14/16] 0.0, 128
    %416 = vxpose.xlu0.b32.cont [15/16] 0.0, 128
    %417 = vxpose.xlu0.b32.end [16/16] 0.0, 128
    %v418 = vpop.trf.xlu0
    %v419 = vpop.trf.xlu0
    %v420 = vpop.trf.xlu0
    %v421 = vpop.trf.xlu0
    %v422 = vpop.trf.xlu0
    %v423 = vpop.trf.xlu0
    %v424 = vpop.trf.xlu0
    %v425 = vpop.trf.xlu0
    %v426 = vpop.trf.xlu0
    %v427 = vpop.trf.xlu0
    %v428 = vpop.trf.xlu0
    %v429 = vpop.trf.xlu0
    %v430 = vpop.trf.xlu0
    %v431 = vpop.trf.xlu0
    %v432 = vpop.trf.xlu0
    %v433 = vpop.trf.xlu0
    %450 = vrot.lane.b32.xlu0 %v418, 8
    %v451 = vpop.permute.xlu0 %450
    %452 = vrot.lane.b32.xlu0 %v419, 8
    %v453 = vpop.permute.xlu0 %452
    %454 = vrot.lane.b32.xlu0 %v420, 8
    %v455 = vpop.permute.xlu0 %454
    %456 = vrot.lane.b32.xlu0 %v421, 8
    %v457 = vpop.permute.xlu0 %456
    %458 = vrot.lane.b32.xlu0 %v422, 8
    %v459 = vpop.permute.xlu0 %458
    %460 = vrot.lane.b32.xlu0 %v423, 8
    %v461 = vpop.permute.xlu0 %460
    %462 = vrot.lane.b32.xlu0 %v424, 8
    %v463 = vpop.permute.xlu0 %462
    %464 = vrot.lane.b32.xlu0 %v425, 8
    %v465 = vpop.permute.xlu0 %464
    %466 = vrot.lane.b32.xlu0 %v426, 8
    %v467 = vpop.permute.xlu0 %466
    %468 = vrot.lane.b32.xlu0 %v427, 8
    %v469 = vpop.permute.xlu0 %468
    %470 = vrot.lane.b32.xlu0 %v428, 8
    %v471 = vpop.permute.xlu0 %470
    %472 = vrot.lane.b32.xlu0 %v429, 8
    %v473 = vpop.permute.xlu0 %472
    %474 = vrot.lane.b32.xlu0 %v430, 8
    %v475 = vpop.permute.xlu0 %474
    %476 = vrot.lane.b32.xlu0 %v431, 8
    %v477 = vpop.permute.xlu0 %476
    %478 = vrot.lane.b32.xlu0 %v432, 8
    %v479 = vpop.permute.xlu0 %478
    %480 = vrot.lane.b32.xlu0 %v433, 8
    %v481 = vpop.permute.xlu0 %480
    %498 = vrot.lane.b32.xlu0 %v418, 16
    %v499 = vpop.permute.xlu0 %498
    %500 = vrot.lane.b32.xlu0 %v419, 16
    %v501 = vpop.permute.xlu0 %500
    %502 = vrot.lane.b32.xlu0 %v420, 16
    %v503 = vpop.permute.xlu0 %502
    %504 = vrot.lane.b32.xlu0 %v421, 16
    %v505 = vpop.permute.xlu0 %504
    %506 = vrot.lane.b32.xlu0 %v422, 16
    %v507 = vpop.permute.xlu0 %506
    %508 = vrot.lane.b32.xlu0 %v423, 16
    %v509 = vpop.permute.xlu0 %508
    %510 = vrot.lane.b32.xlu0 %v424, 16
    %v511 = vpop.permute.xlu0 %510
    %512 = vrot.lane.b32.xlu0 %v425, 16
    %v513 = vpop.permute.xlu0 %512
    %514 = vrot.lane.b32.xlu0 %v426, 16
    %v515 = vpop.permute.xlu0 %514
    %516 = vrot.lane.b32.xlu0 %v427, 16
    %v517 = vpop.permute.xlu0 %516
    %518 = vrot.lane.b32.xlu0 %v428, 16
    %v519 = vpop.permute.xlu0 %518
    %520 = vrot.lane.b32.xlu0 %v429, 16
    %v521 = vpop.permute.xlu0 %520
    %522 = vrot.lane.b32.xlu0 %v430, 16
    %v523 = vpop.permute.xlu0 %522
    %524 = vrot.lane.b32.xlu0 %v431, 16
    %v525 = vpop.permute.xlu0 %524
    %526 = vrot.lane.b32.xlu0 %v432, 16
    %v527 = vpop.permute.xlu0 %526
    %528 = vrot.lane.b32.xlu0 %v433, 16
    %v529 = vpop.permute.xlu0 %528
    %546 = vrot.lane.b32.xlu0 %v418, 24
    %v547 = vpop.permute.xlu0 %546
    %548 = vrot.lane.b32.xlu0 %v419, 24
    %v549 = vpop.permute.xlu0 %548
    %550 = vrot.lane.b32.xlu0 %v420, 24
    %v551 = vpop.permute.xlu0 %550
    %552 = vrot.lane.b32.xlu0 %v421, 24
    %v553 = vpop.permute.xlu0 %552
    %554 = vrot.lane.b32.xlu0 %v422, 24
    %v555 = vpop.permute.xlu0 %554
    %556 = vrot.lane.b32.xlu0 %v423, 24
    %v557 = vpop.permute.xlu0 %556
    %558 = vrot.lane.b32.xlu0 %v424, 24
    %v559 = vpop.permute.xlu0 %558
    %560 = vrot.lane.b32.xlu0 %v425, 24
    %v561 = vpop.permute.xlu0 %560
    %562 = vrot.lane.b32.xlu0 %v426, 24
    %v563 = vpop.permute.xlu0 %562
    %564 = vrot.lane.b32.xlu0 %v427, 24
    %v565 = vpop.permute.xlu0 %564
    %566 = vrot.lane.b32.xlu0 %v428, 24
    %v567 = vpop.permute.xlu0 %566
    %568 = vrot.lane.b32.xlu0 %v429, 24
    %v569 = vpop.permute.xlu0 %568
    %570 = vrot.lane.b32.xlu0 %v430, 24
    %v571 = vpop.permute.xlu0 %570
    %572 = vrot.lane.b32.xlu0 %v431, 24
    %v573 = vpop.permute.xlu0 %572
    %574 = vrot.lane.b32.xlu0 %v432, 24
    %v575 = vpop.permute.xlu0 %574
    %576 = vrot.lane.b32.xlu0 %v433, 24
    %v577 = vpop.permute.xlu0 %576
    %594 = vrot.lane.b32.xlu0 %v418, 32
    %v595 = vpop.permute.xlu0 %594
    %596 = vrot.lane.b32.xlu0 %v419, 32
    %v597 = vpop.permute.xlu0 %596
    %598 = vrot.lane.b32.xlu0 %v420, 32
    %v599 = vpop.permute.xlu0 %598
    %600 = vrot.lane.b32.xlu0 %v421, 32
    %v601 = vpop.permute.xlu0 %600
    %602 = vrot.lane.b32.xlu0 %v422, 32
    %v603 = vpop.permute.xlu0 %602
    %604 = vrot.lane.b32.xlu0 %v423, 32
    %v605 = vpop.permute.xlu0 %604
    %606 = vrot.lane.b32.xlu0 %v424, 32
    %v607 = vpop.permute.xlu0 %606
    %608 = vrot.lane.b32.xlu0 %v425, 32
    %v609 = vpop.permute.xlu0 %608
    %610 = vrot.lane.b32.xlu0 %v426, 32
    %v611 = vpop.permute.xlu0 %610
    %612 = vrot.lane.b32.xlu0 %v427, 32
    %v613 = vpop.permute.xlu0 %612
    %614 = vrot.lane.b32.xlu0 %v428, 32
    %v615 = vpop.permute.xlu0 %614
    %616 = vrot.lane.b32.xlu0 %v429, 32
    %v617 = vpop.permute.xlu0 %616
    %618 = vrot.lane.b32.xlu0 %v430, 32
    %v619 = vpop.permute.xlu0 %618
    %620 = vrot.lane.b32.xlu0 %v431, 32
    %v621 = vpop.permute.xlu0 %620
    %622 = vrot.lane.b32.xlu0 %v432, 32
    %v623 = vpop.permute.xlu0 %622
    %624 = vrot.lane.b32.xlu0 %v433, 32
    %v625 = vpop.permute.xlu0 %624
    %642 = vrot.lane.b32.xlu0 %v418, 40
    %v643 = vpop.permute.xlu0 %642
    %644 = vrot.lane.b32.xlu0 %v419, 40
    %v645 = vpop.permute.xlu0 %644
    %646 = vrot.lane.b32.xlu0 %v420, 40
    %v647 = vpop.permute.xlu0 %646
    %648 = vrot.lane.b32.xlu0 %v421, 40
    %v649 = vpop.permute.xlu0 %648
    %650 = vrot.lane.b32.xlu0 %v422, 40
    %v651 = vpop.permute.xlu0 %650
    %652 = vrot.lane.b32.xlu0 %v423, 40
    %v653 = vpop.permute.xlu0 %652
    %654 = vrot.lane.b32.xlu0 %v424, 40
    %v655 = vpop.permute.xlu0 %654
    %656 = vrot.lane.b32.xlu0 %v425, 40
    %v657 = vpop.permute.xlu0 %656
    %658 = vrot.lane.b32.xlu0 %v426, 40
    %v659 = vpop.permute.xlu0 %658
    %660 = vrot.lane.b32.xlu0 %v427, 40
    %v661 = vpop.permute.xlu0 %660
    %662 = vrot.lane.b32.xlu0 %v428, 40
    %v663 = vpop.permute.xlu0 %662
    %664 = vrot.lane.b32.xlu0 %v429, 40
    %v665 = vpop.permute.xlu0 %664
    %666 = vrot.lane.b32.xlu0 %v430, 40
    %v667 = vpop.permute.xlu0 %666
    %668 = vrot.lane.b32.xlu0 %v431, 40
    %v669 = vpop.permute.xlu0 %668
    %670 = vrot.lane.b32.xlu0 %v432, 40
    %v671 = vpop.permute.xlu0 %670
    %672 = vrot.lane.b32.xlu0 %v433, 40
    %v673 = vpop.permute.xlu0 %672
    %690 = vrot.lane.b32.xlu0 %v418, 48
    %v691 = vpop.permute.xlu0 %690
    %692 = vrot.lane.b32.xlu0 %v419, 48
    %v693 = vpop.permute.xlu0 %692
    %694 = vrot.lane.b32.xlu0 %v420, 48
    %v695 = vpop.permute.xlu0 %694
    %696 = vrot.lane.b32.xlu0 %v421, 48
    %v697 = vpop.permute.xlu0 %696
    %698 = vrot.lane.b32.xlu0 %v422, 48
    %v699 = vpop.permute.xlu0 %698
    %700 = vrot.lane.b32.xlu0 %v423, 48
    %v701 = vpop.permute.xlu0 %700
    %702 = vrot.lane.b32.xlu0 %v424, 48
    %v703 = vpop.permute.xlu0 %702
    %704 = vrot.lane.b32.xlu0 %v425, 48
    %v705 = vpop.permute.xlu0 %704
    %706 = vrot.lane.b32.xlu0 %v426, 48
    %v707 = vpop.permute.xlu0 %706
    %708 = vrot.lane.b32.xlu0 %v427, 48
    %v709 = vpop.permute.xlu0 %708
    %710 = vrot.lane.b32.xlu0 %v428, 48
    %v711 = vpop.permute.xlu0 %710
    %712 = vrot.lane.b32.xlu0 %v429, 48
    %v713 = vpop.permute.xlu0 %712
    %714 = vrot.lane.b32.xlu0 %v430, 48
    %v715 = vpop.permute.xlu0 %714
    %716 = vrot.lane.b32.xlu0 %v431, 48
    %v717 = vpop.permute.xlu0 %716
    %718 = vrot.lane.b32.xlu0 %v432, 48
    %v719 = vpop.permute.xlu0 %718
    %720 = vrot.lane.b32.xlu0 %v433, 48
    %v721 = vpop.permute.xlu0 %720
    %738 = vrot.lane.b32.xlu0 %v418, 56
    %v739 = vpop.permute.xlu0 %738
    %740 = vrot.lane.b32.xlu0 %v419, 56
    %v741 = vpop.permute.xlu0 %740
    %742 = vrot.lane.b32.xlu0 %v420, 56
    %v743 = vpop.permute.xlu0 %742
    %744 = vrot.lane.b32.xlu0 %v421, 56
    %v745 = vpop.permute.xlu0 %744
    %746 = vrot.lane.b32.xlu0 %v422, 56
    %v747 = vpop.permute.xlu0 %746
    %748 = vrot.lane.b32.xlu0 %v423, 56
    %v749 = vpop.permute.xlu0 %748
    %750 = vrot.lane.b32.xlu0 %v424, 56
    %v751 = vpop.permute.xlu0 %750
    %752 = vrot.lane.b32.xlu0 %v425, 56
    %v753 = vpop.permute.xlu0 %752
    %754 = vrot.lane.b32.xlu0 %v426, 56
    %v755 = vpop.permute.xlu0 %754
    %756 = vrot.lane.b32.xlu0 %v427, 56
    %v757 = vpop.permute.xlu0 %756
    %758 = vrot.lane.b32.xlu0 %v428, 56
    %v759 = vpop.permute.xlu0 %758
    %760 = vrot.lane.b32.xlu0 %v429, 56
    %v761 = vpop.permute.xlu0 %760
    %762 = vrot.lane.b32.xlu0 %v430, 56
    %v763 = vpop.permute.xlu0 %762
    %764 = vrot.lane.b32.xlu0 %v431, 56
    %v765 = vpop.permute.xlu0 %764
    %766 = vrot.lane.b32.xlu0 %v432, 56
    %v767 = vpop.permute.xlu0 %766
    %768 = vrot.lane.b32.xlu0 %v433, 56
    %v769 = vpop.permute.xlu0 %768
    %786 = vrot.lane.b32.xlu0 %v418, 64
    %v787 = vpop.permute.xlu0 %786
    %788 = vrot.lane.b32.xlu0 %v419, 64
    %v789 = vpop.permute.xlu0 %788
    %790 = vrot.lane.b32.xlu0 %v420, 64
    %v791 = vpop.permute.xlu0 %790
    %792 = vrot.lane.b32.xlu0 %v421, 64
    %v793 = vpop.permute.xlu0 %792
    %794 = vrot.lane.b32.xlu0 %v422, 64
    %v795 = vpop.permute.xlu0 %794
    %796 = vrot.lane.b32.xlu0 %v423, 64
    %v797 = vpop.permute.xlu0 %796
    %798 = vrot.lane.b32.xlu0 %v424, 64
    %v799 = vpop.permute.xlu0 %798
    %800 = vrot.lane.b32.xlu0 %v425, 64
    %v801 = vpop.permute.xlu0 %800
    %802 = vrot.lane.b32.xlu0 %v426, 64
    %v803 = vpop.permute.xlu0 %802
    %804 = vrot.lane.b32.xlu0 %v427, 64
    %v805 = vpop.permute.xlu0 %804
    %806 = vrot.lane.b32.xlu0 %v428, 64
    %v807 = vpop.permute.xlu0 %806
    %808 = vrot.lane.b32.xlu0 %v429, 64
    %v809 = vpop.permute.xlu0 %808
    %810 = vrot.lane.b32.xlu0 %v430, 64
    %v811 = vpop.permute.xlu0 %810
    %812 = vrot.lane.b32.xlu0 %v431, 64
    %v813 = vpop.permute.xlu0 %812
    %814 = vrot.lane.b32.xlu0 %v432, 64
    %v815 = vpop.permute.xlu0 %814
    %816 = vrot.lane.b32.xlu0 %v433, 64
    %v817 = vpop.permute.xlu0 %816
    %834 = vrot.lane.b32.xlu0 %v418, 72
    %v835 = vpop.permute.xlu0 %834
    %836 = vrot.lane.b32.xlu0 %v419, 72
    %v837 = vpop.permute.xlu0 %836
    %838 = vrot.lane.b32.xlu0 %v420, 72
    %v839 = vpop.permute.xlu0 %838
    %840 = vrot.lane.b32.xlu0 %v421, 72
    %v841 = vpop.permute.xlu0 %840
    %842 = vrot.lane.b32.xlu0 %v422, 72
    %v843 = vpop.permute.xlu0 %842
    %844 = vrot.lane.b32.xlu0 %v423, 72
    %v845 = vpop.permute.xlu0 %844
    %846 = vrot.lane.b32.xlu0 %v424, 72
    %v847 = vpop.permute.xlu0 %846
    %848 = vrot.lane.b32.xlu0 %v425, 72
    %v849 = vpop.permute.xlu0 %848
    %850 = vrot.lane.b32.xlu0 %v426, 72
    %v851 = vpop.permute.xlu0 %850
    %852 = vrot.lane.b32.xlu0 %v427, 72
    %v853 = vpop.permute.xlu0 %852
    %854 = vrot.lane.b32.xlu0 %v428, 72
    %v855 = vpop.permute.xlu0 %854
    %856 = vrot.lane.b32.xlu0 %v429, 72
    %v857 = vpop.permute.xlu0 %856
    %858 = vrot.lane.b32.xlu0 %v430, 72
    %v859 = vpop.permute.xlu0 %858
    %860 = vrot.lane.b32.xlu0 %v431, 72
    %v861 = vpop.permute.xlu0 %860
    %862 = vrot.lane.b32.xlu0 %v432, 72
    %v863 = vpop.permute.xlu0 %862
    %864 = vrot.lane.b32.xlu0 %v433, 72
    %v865 = vpop.permute.xlu0 %864
    %882 = vrot.lane.b32.xlu0 %v418, 80
    %v883 = vpop.permute.xlu0 %882
    %884 = vrot.lane.b32.xlu0 %v419, 80
    %v885 = vpop.permute.xlu0 %884
    %886 = vrot.lane.b32.xlu0 %v420, 80
    %v887 = vpop.permute.xlu0 %886
    %888 = vrot.lane.b32.xlu0 %v421, 80
    %v889 = vpop.permute.xlu0 %888
    %890 = vrot.lane.b32.xlu0 %v422, 80
    %v891 = vpop.permute.xlu0 %890
    %892 = vrot.lane.b32.xlu0 %v423, 80
    %v893 = vpop.permute.xlu0 %892
    %894 = vrot.lane.b32.xlu0 %v424, 80
    %v895 = vpop.permute.xlu0 %894
    %896 = vrot.lane.b32.xlu0 %v425, 80
    %v897 = vpop.permute.xlu0 %896
    %898 = vrot.lane.b32.xlu0 %v426, 80
    %v899 = vpop.permute.xlu0 %898
    %900 = vrot.lane.b32.xlu0 %v427, 80
    %v901 = vpop.permute.xlu0 %900
    %902 = vrot.lane.b32.xlu0 %v428, 80
    %v903 = vpop.permute.xlu0 %902
    %904 = vrot.lane.b32.xlu0 %v429, 80
    %v905 = vpop.permute.xlu0 %904
    %906 = vrot.lane.b32.xlu0 %v430, 80
    %v907 = vpop.permute.xlu0 %906
    %908 = vrot.lane.b32.xlu0 %v431, 80
    %v909 = vpop.permute.xlu0 %908
    %910 = vrot.lane.b32.xlu0 %v432, 80
    %v911 = vpop.permute.xlu0 %910
    %912 = vrot.lane.b32.xlu0 %v433, 80
    %v913 = vpop.permute.xlu0 %912
    %930 = vrot.lane.b32.xlu0 %v418, 88
    %v931 = vpop.permute.xlu0 %930
    %932 = vrot.lane.b32.xlu0 %v419, 88
    %v933 = vpop.permute.xlu0 %932
    %934 = vrot.lane.b32.xlu0 %v420, 88
    %v935 = vpop.permute.xlu0 %934
    %936 = vrot.lane.b32.xlu0 %v421, 88
    %v937 = vpop.permute.xlu0 %936
    %938 = vrot.lane.b32.xlu0 %v422, 88
    %v939 = vpop.permute.xlu0 %938
    %940 = vrot.lane.b32.xlu0 %v423, 88
    %v941 = vpop.permute.xlu0 %940
    %942 = vrot.lane.b32.xlu0 %v424, 88
    %v943 = vpop.permute.xlu0 %942
    %944 = vrot.lane.b32.xlu0 %v425, 88
    %v945 = vpop.permute.xlu0 %944
    %946 = vrot.lane.b32.xlu0 %v426, 88
    %v947 = vpop.permute.xlu0 %946
    %948 = vrot.lane.b32.xlu0 %v427, 88
    %v949 = vpop.permute.xlu0 %948
    %950 = vrot.lane.b32.xlu0 %v428, 88
    %v951 = vpop.permute.xlu0 %950
    %952 = vrot.lane.b32.xlu0 %v429, 88
    %v953 = vpop.permute.xlu0 %952
    %954 = vrot.lane.b32.xlu0 %v430, 88
    %v955 = vpop.permute.xlu0 %954
    %956 = vrot.lane.b32.xlu0 %v431, 88
    %v957 = vpop.permute.xlu0 %956
    %958 = vrot.lane.b32.xlu0 %v432, 88
    %v959 = vpop.permute.xlu0 %958
    %960 = vrot.lane.b32.xlu0 %v433, 88
    %v961 = vpop.permute.xlu0 %960
    %978 = vrot.lane.b32.xlu0 %v418, 96
    %v979 = vpop.permute.xlu0 %978
    %980 = vrot.lane.b32.xlu0 %v419, 96
    %v981 = vpop.permute.xlu0 %980
    %982 = vrot.lane.b32.xlu0 %v420, 96
    %v983 = vpop.permute.xlu0 %982
    %984 = vrot.lane.b32.xlu0 %v421, 96
    %v985 = vpop.permute.xlu0 %984
    %986 = vrot.lane.b32.xlu0 %v422, 96
    %v987 = vpop.permute.xlu0 %986
    %988 = vrot.lane.b32.xlu0 %v423, 96
    %v989 = vpop.permute.xlu0 %988
    %990 = vrot.lane.b32.xlu0 %v424, 96
    %v991 = vpop.permute.xlu0 %990
    %992 = vrot.lane.b32.xlu0 %v425, 96
    %v993 = vpop.permute.xlu0 %992
    %994 = vrot.lane.b32.xlu0 %v426, 96
    %v995 = vpop.permute.xlu0 %994
    %996 = vrot.lane.b32.xlu0 %v427, 96
    %v997 = vpop.permute.xlu0 %996
    %998 = vrot.lane.b32.xlu0 %v428, 96
    %v999 = vpop.permute.xlu0 %998
    %1000 = vrot.lane.b32.xlu0 %v429, 96
    %v1001 = vpop.permute.xlu0 %1000
    %1002 = vrot.lane.b32.xlu0 %v430, 96
    %v1003 = vpop.permute.xlu0 %1002
    %1004 = vrot.lane.b32.xlu0 %v431, 96
    %v1005 = vpop.permute.xlu0 %1004
    %1006 = vrot.lane.b32.xlu0 %v432, 96
    %v1007 = vpop.permute.xlu0 %1006
    %1008 = vrot.lane.b32.xlu0 %v433, 96
    %v1009 = vpop.permute.xlu0 %1008
    %1026 = vrot.lane.b32.xlu0 %v418, 104
    %v1027 = vpop.permute.xlu0 %1026
    %1028 = vrot.lane.b32.xlu0 %v419, 104
    %v1029 = vpop.permute.xlu0 %1028
    %1030 = vrot.lane.b32.xlu0 %v420, 104
    %v1031 = vpop.permute.xlu0 %1030
    %1032 = vrot.lane.b32.xlu0 %v421, 104
    %v1033 = vpop.permute.xlu0 %1032
    %1034 = vrot.lane.b32.xlu0 %v422, 104
    %v1035 = vpop.permute.xlu0 %1034
    %1036 = vrot.lane.b32.xlu0 %v423, 104
    %v1037 = vpop.permute.xlu0 %1036
    %1038 = vrot.lane.b32.xlu0 %v424, 104
    %v1039 = vpop.permute.xlu0 %1038
    %1040 = vrot.lane.b32.xlu0 %v425, 104
    %v1041 = vpop.permute.xlu0 %1040
    %1042 = vrot.lane.b32.xlu0 %v426, 104
    %v1043 = vpop.permute.xlu0 %1042
    %1044 = vrot.lane.b32.xlu0 %v427, 104
    %v1045 = vpop.permute.xlu0 %1044
    %1046 = vrot.lane.b32.xlu0 %v428, 104
    %v1047 = vpop.permute.xlu0 %1046
    %1048 = vrot.lane.b32.xlu0 %v429, 104
    %v1049 = vpop.permute.xlu0 %1048
    %1050 = vrot.lane.b32.xlu0 %v430, 104
    %v1051 = vpop.permute.xlu0 %1050
    %1052 = vrot.lane.b32.xlu0 %v431, 104
    %v1053 = vpop.permute.xlu0 %1052
    %1054 = vrot.lane.b32.xlu0 %v432, 104
    %v1055 = vpop.permute.xlu0 %1054
    %1056 = vrot.lane.b32.xlu0 %v433, 104
    %v1057 = vpop.permute.xlu0 %1056
    %1074 = vrot.lane.b32.xlu0 %v418, 112
    %v1075 = vpop.permute.xlu0 %1074
    %1076 = vrot.lane.b32.xlu0 %v419, 112
    %v1077 = vpop.permute.xlu0 %1076
    %1078 = vrot.lane.b32.xlu0 %v420, 112
    %v1079 = vpop.permute.xlu0 %1078
    %1080 = vrot.lane.b32.xlu0 %v421, 112
    %v1081 = vpop.permute.xlu0 %1080
    %1082 = vrot.lane.b32.xlu0 %v422, 112
    %v1083 = vpop.permute.xlu0 %1082
    %1084 = vrot.lane.b32.xlu0 %v423, 112
    %v1085 = vpop.permute.xlu0 %1084
    %1086 = vrot.lane.b32.xlu0 %v424, 112
    %v1087 = vpop.permute.xlu0 %1086
    %1088 = vrot.lane.b32.xlu0 %v425, 112
    %v1089 = vpop.permute.xlu0 %1088
    %1090 = vrot.lane.b32.xlu0 %v426, 112
    %v1091 = vpop.permute.xlu0 %1090
    %1092 = vrot.lane.b32.xlu0 %v427, 112
    %v1093 = vpop.permute.xlu0 %1092
    %1094 = vrot.lane.b32.xlu0 %v428, 112
    %v1095 = vpop.permute.xlu0 %1094
    %1096 = vrot.lane.b32.xlu0 %v429, 112
    %v1097 = vpop.permute.xlu0 %1096
    %1098 = vrot.lane.b32.xlu0 %v430, 112
    %v1099 = vpop.permute.xlu0 %1098
    %1100 = vrot.lane.b32.xlu0 %v431, 112
    %v1101 = vpop.permute.xlu0 %1100
    %1102 = vrot.lane.b32.xlu0 %v432, 112
    %v1103 = vpop.permute.xlu0 %1102
    %1104 = vrot.lane.b32.xlu0 %v433, 112
    %v1105 = vpop.permute.xlu0 %1104
    %1122 = vrot.lane.b32.xlu0 %v418, 120
    %v1123 = vpop.permute.xlu0 %1122
    %1124 = vrot.lane.b32.xlu0 %v419, 120
    %v1125 = vpop.permute.xlu0 %1124
    %1126 = vrot.lane.b32.xlu0 %v420, 120
    %v1127 = vpop.permute.xlu0 %1126
    %1128 = vrot.lane.b32.xlu0 %v421, 120
    %v1129 = vpop.permute.xlu0 %1128
    %1130 = vrot.lane.b32.xlu0 %v422, 120
    %v1131 = vpop.permute.xlu0 %1130
    %1132 = vrot.lane.b32.xlu0 %v423, 120
    %v1133 = vpop.permute.xlu0 %1132
    %1134 = vrot.lane.b32.xlu0 %v424, 120
    %v1135 = vpop.permute.xlu0 %1134
    %1136 = vrot.lane.b32.xlu0 %v425, 120
    %v1137 = vpop.permute.xlu0 %1136
    %1138 = vrot.lane.b32.xlu0 %v426, 120
    %v1139 = vpop.permute.xlu0 %1138
    %1140 = vrot.lane.b32.xlu0 %v427, 120
    %v1141 = vpop.permute.xlu0 %1140
    %1142 = vrot.lane.b32.xlu0 %v428, 120
    %v1143 = vpop.permute.xlu0 %1142
    %1144 = vrot.lane.b32.xlu0 %v429, 120
    %v1145 = vpop.permute.xlu0 %1144
    %1146 = vrot.lane.b32.xlu0 %v430, 120
    %v1147 = vpop.permute.xlu0 %1146
    %1148 = vrot.lane.b32.xlu0 %v431, 120
    %v1149 = vpop.permute.xlu0 %1148
    %1150 = vrot.lane.b32.xlu0 %v432, 120
    %v1151 = vpop.permute.xlu0 %1150
    %1152 = vrot.lane.b32.xlu0 %v433, 120
    %v1153 = vpop.permute.xlu0 %1152
    %vm1170 = vcmask 64512
    %v1171 = vsel %vm1170, %v418, %v451
    %v1172 = vsel %vm1170, %v419, %v453
    %v1173 = vsel %vm1170, %v420, %v455
    %v1174 = vsel %vm1170, %v421, %v457
    %v1175 = vsel %vm1170, %v422, %v459
    %v1176 = vsel %vm1170, %v423, %v461
    %v1177 = vsel %vm1170, %v424, %v463
    %v1178 = vsel %vm1170, %v425, %v465
    %v1179 = vsel %vm1170, %v426, %v467
    %v1180 = vsel %vm1170, %v427, %v469
    %v1181 = vsel %vm1170, %v428, %v471
    %v1182 = vsel %vm1170, %v429, %v473
    %v1183 = vsel %vm1170, %v430, %v475
    %v1184 = vsel %vm1170, %v431, %v477
    %v1185 = vsel %vm1170, %v432, %v479
    %v1186 = vsel %vm1170, %v433, %v481
    %vm1187 = vcmask 130048
    %v1188 = vsel %vm1187, %v1171, %v499
    %v1189 = vsel %vm1187, %v1172, %v501
    %v1190 = vsel %vm1187, %v1173, %v503
    %v1191 = vsel %vm1187, %v1174, %v505
    %v1192 = vsel %vm1187, %v1175, %v507
    %v1193 = vsel %vm1187, %v1176, %v509
    %v1194 = vsel %vm1187, %v1177, %v511
    %v1195 = vsel %vm1187, %v1178, %v513
    %v1196 = vsel %vm1187, %v1179, %v515
    %v1197 = vsel %vm1187, %v1180, %v517
    %v1198 = vsel %vm1187, %v1181, %v519
    %v1199 = vsel %vm1187, %v1182, %v521
    %v1200 = vsel %vm1187, %v1183, %v523
    %v1201 = vsel %vm1187, %v1184, %v525
    %v1202 = vsel %vm1187, %v1185, %v527
    %v1203 = vsel %vm1187, %v1186, %v529
    %vm1204 = vcmask 195584
    %v1205 = vsel %vm1204, %v1188, %v547
    %v1206 = vsel %vm1204, %v1189, %v549
    %v1207 = vsel %vm1204, %v1190, %v551
    %v1208 = vsel %vm1204, %v1191, %v553
    %v1209 = vsel %vm1204, %v1192, %v555
    %v1210 = vsel %vm1204, %v1193, %v557
    %v1211 = vsel %vm1204, %v1194, %v559
    %v1212 = vsel %vm1204, %v1195, %v561
    %v1213 = vsel %vm1204, %v1196, %v563
    %v1214 = vsel %vm1204, %v1197, %v565
    %v1215 = vsel %vm1204, %v1198, %v567
    %v1216 = vsel %vm1204, %v1199, %v569
    %v1217 = vsel %vm1204, %v1200, %v571
    %v1218 = vsel %vm1204, %v1201, %v573
    %v1219 = vsel %vm1204, %v1202, %v575
    %v1220 = vsel %vm1204, %v1203, %v577
    %vm1221 = vcmask 261120
    %v1222 = vsel %vm1221, %v1205, %v595
    %v1223 = vsel %vm1221, %v1206, %v597
    %v1224 = vsel %vm1221, %v1207, %v599
    %v1225 = vsel %vm1221, %v1208, %v601
    %v1226 = vsel %vm1221, %v1209, %v603
    %v1227 = vsel %vm1221, %v1210, %v605
    %v1228 = vsel %vm1221, %v1211, %v607
    %v1229 = vsel %vm1221, %v1212, %v609
    %v1230 = vsel %vm1221, %v1213, %v611
    %v1231 = vsel %vm1221, %v1214, %v613
    %v1232 = vsel %vm1221, %v1215, %v615
    %v1233 = vsel %vm1221, %v1216, %v617
    %v1234 = vsel %vm1221, %v1217, %v619
    %v1235 = vsel %vm1221, %v1218, %v621
    %v1236 = vsel %vm1221, %v1219, %v623
    %v1237 = vsel %vm1221, %v1220, %v625
    %vm1238 = vcmask 326656
    %v1239 = vsel %vm1238, %v1222, %v643
    %v1240 = vsel %vm1238, %v1223, %v645
    %v1241 = vsel %vm1238, %v1224, %v647
    %v1242 = vsel %vm1238, %v1225, %v649
    %v1243 = vsel %vm1238, %v1226, %v651
    %v1244 = vsel %vm1238, %v1227, %v653
    %v1245 = vsel %vm1238, %v1228, %v655
    %v1246 = vsel %vm1238, %v1229, %v657
    %v1247 = vsel %vm1238, %v1230, %v659
    %v1248 = vsel %vm1238, %v1231, %v661
    %v1249 = vsel %vm1238, %v1232, %v663
    %v1250 = vsel %vm1238, %v1233, %v665
    %v1251 = vsel %vm1238, %v1234, %v667
    %v1252 = vsel %vm1238, %v1235, %v669
    %v1253 = vsel %vm1238, %v1236, %v671
    %v1254 = vsel %vm1238, %v1237, %v673
    %vm1255 = vcmask 392192
    %v1256 = vsel %vm1255, %v1239, %v691
    %v1257 = vsel %vm1255, %v1240, %v693
    %v1258 = vsel %vm1255, %v1241, %v695
    %v1259 = vsel %vm1255, %v1242, %v697
    %v1260 = vsel %vm1255, %v1243, %v699
    %v1261 = vsel %vm1255, %v1244, %v701
    %v1262 = vsel %vm1255, %v1245, %v703
    %v1263 = vsel %vm1255, %v1246, %v705
    %v1264 = vsel %vm1255, %v1247, %v707
    %v1265 = vsel %vm1255, %v1248, %v709
    %v1266 = vsel %vm1255, %v1249, %v711
    %v1267 = vsel %vm1255, %v1250, %v713
    %v1268 = vsel %vm1255, %v1251, %v715
    %v1269 = vsel %vm1255, %v1252, %v717
    %v1270 = vsel %vm1255, %v1253, %v719
    %v1271 = vsel %vm1255, %v1254, %v721
    %vm1272 = vcmask 457728
    %v1273 = vsel %vm1272, %v1256, %v739
    %v1274 = vsel %vm1272, %v1257, %v741
    %v1275 = vsel %vm1272, %v1258, %v743
    %v1276 = vsel %vm1272, %v1259, %v745
    %v1277 = vsel %vm1272, %v1260, %v747
    %v1278 = vsel %vm1272, %v1261, %v749
    %v1279 = vsel %vm1272, %v1262, %v751
    %v1280 = vsel %vm1272, %v1263, %v753
    %v1281 = vsel %vm1272, %v1264, %v755
    %v1282 = vsel %vm1272, %v1265, %v757
    %v1283 = vsel %vm1272, %v1266, %v759
    %v1284 = vsel %vm1272, %v1267, %v761
    %v1285 = vsel %vm1272, %v1268, %v763
    %v1286 = vsel %vm1272, %v1269, %v765
    %v1287 = vsel %vm1272, %v1270, %v767
    %v1288 = vsel %vm1272, %v1271, %v769
    %vm1289 = vcmask 523264
    %v1290 = vsel %vm1289, %v1273, %v787
    %v1291 = vsel %vm1289, %v1274, %v789
    %v1292 = vsel %vm1289, %v1275, %v791
    %v1293 = vsel %vm1289, %v1276, %v793
    %v1294 = vsel %vm1289, %v1277, %v795
    %v1295 = vsel %vm1289, %v1278, %v797
    %v1296 = vsel %vm1289, %v1279, %v799
    %v1297 = vsel %vm1289, %v1280, %v801
    %v1298 = vsel %vm1289, %v1281, %v803
    %v1299 = vsel %vm1289, %v1282, %v805
    %v1300 = vsel %vm1289, %v1283, %v807
    %v1301 = vsel %vm1289, %v1284, %v809
    %v1302 = vsel %vm1289, %v1285, %v811
    %v1303 = vsel %vm1289, %v1286, %v813
    %v1304 = vsel %vm1289, %v1287, %v815
    %v1305 = vsel %vm1289, %v1288, %v817
    %vm1306 = vcmask 588800
    %v1307 = vsel %vm1306, %v1290, %v835
    %v1308 = vsel %vm1306, %v1291, %v837
    %v1309 = vsel %vm1306, %v1292, %v839
    %v1310 = vsel %vm1306, %v1293, %v841
    %v1311 = vsel %vm1306, %v1294, %v843
    %v1312 = vsel %vm1306, %v1295, %v845
    %v1313 = vsel %vm1306, %v1296, %v847
    %v1314 = vsel %vm1306, %v1297, %v849
    %v1315 = vsel %vm1306, %v1298, %v851
    %v1316 = vsel %vm1306, %v1299, %v853
    %v1317 = vsel %vm1306, %v1300, %v855
    %v1318 = vsel %vm1306, %v1301, %v857
    %v1319 = vsel %vm1306, %v1302, %v859
    %v1320 = vsel %vm1306, %v1303, %v861
    %v1321 = vsel %vm1306, %v1304, %v863
    %v1322 = vsel %vm1306, %v1305, %v865
    %vm1323 = vcmask 654336
    %v1324 = vsel %vm1323, %v1307, %v883
    %v1325 = vsel %vm1323, %v1308, %v885
    %v1326 = vsel %vm1323, %v1309, %v887
    %v1327 = vsel %vm1323, %v1310, %v889
    %v1328 = vsel %vm1323, %v1311, %v891
    %v1329 = vsel %vm1323, %v1312, %v893
    %v1330 = vsel %vm1323, %v1313, %v895
    %v1331 = vsel %vm1323, %v1314, %v897
    %v1332 = vsel %vm1323, %v1315, %v899
    %v1333 = vsel %vm1323, %v1316, %v901
    %v1334 = vsel %vm1323, %v1317, %v903
    %v1335 = vsel %vm1323, %v1318, %v905
    %v1336 = vsel %vm1323, %v1319, %v907
    %v1337 = vsel %vm1323, %v1320, %v909
    %v1338 = vsel %vm1323, %v1321, %v911
    %v1339 = vsel %vm1323, %v1322, %v913
    %vm1340 = vcmask 719872
    %v1341 = vsel %vm1340, %v1324, %v931
    %v1342 = vsel %vm1340, %v1325, %v933
    %v1343 = vsel %vm1340, %v1326, %v935
    %v1344 = vsel %vm1340, %v1327, %v937
    %v1345 = vsel %vm1340, %v1328, %v939
    %v1346 = vsel %vm1340, %v1329, %v941
    %v1347 = vsel %vm1340, %v1330, %v943
    %v1348 = vsel %vm1340, %v1331, %v945
    %v1349 = vsel %vm1340, %v1332, %v947
    %v1350 = vsel %vm1340, %v1333, %v949
    %v1351 = vsel %vm1340, %v1334, %v951
    %v1352 = vsel %vm1340, %v1335, %v953
    %v1353 = vsel %vm1340, %v1336, %v955
    %v1354 = vsel %vm1340, %v1337, %v957
    %v1355 = vsel %vm1340, %v1338, %v959
    %v1356 = vsel %vm1340, %v1339, %v961
    %vm1357 = vcmask 785408
    %v1358 = vsel %vm1357, %v1341, %v979
    %v1359 = vsel %vm1357, %v1342, %v981
    %v1360 = vsel %vm1357, %v1343, %v983
    %v1361 = vsel %vm1357, %v1344, %v985
    %v1362 = vsel %vm1357, %v1345, %v987
    %v1363 = vsel %vm1357, %v1346, %v989
    %v1364 = vsel %vm1357, %v1347, %v991
    %v1365 = vsel %vm1357, %v1348, %v993
    %v1366 = vsel %vm1357, %v1349, %v995
    %v1367 = vsel %vm1357, %v1350, %v997
    %v1368 = vsel %vm1357, %v1351, %v999
    %v1369 = vsel %vm1357, %v1352, %v1001
    %v1370 = vsel %vm1357, %v1353, %v1003
    %v1371 = vsel %vm1357, %v1354, %v1005
    %v1372 = vsel %vm1357, %v1355, %v1007
    %v1373 = vsel %vm1357, %v1356, %v1009
    %vm1374 = vcmask 850944
    %v1375 = vsel %vm1374, %v1358, %v1027
    %v1376 = vsel %vm1374, %v1359, %v1029
    %v1377 = vsel %vm1374, %v1360, %v1031
    %v1378 = vsel %vm1374, %v1361, %v1033
    %v1379 = vsel %vm1374, %v1362, %v1035
    %v1380 = vsel %vm1374, %v1363, %v1037
    %v1381 = vsel %vm1374, %v1364, %v1039
    %v1382 = vsel %vm1374, %v1365, %v1041
    %v1383 = vsel %vm1374, %v1366, %v1043
    %v1384 = vsel %vm1374, %v1367, %v1045
    %v1385 = vsel %vm1374, %v1368, %v1047
    %v1386 = vsel %vm1374, %v1369, %v1049
    %v1387 = vsel %vm1374, %v1370, %v1051
    %v1388 = vsel %vm1374, %v1371, %v1053
    %v1389 = vsel %vm1374, %v1372, %v1055
    %v1390 = vsel %vm1374, %v1373, %v1057
    %vm1391 = vcmask 916480
    %v1392 = vsel %vm1391, %v1375, %v1075
    %v1393 = vsel %vm1391, %v1376, %v1077
    %v1394 = vsel %vm1391, %v1377, %v1079
    %v1395 = vsel %vm1391, %v1378, %v1081
    %v1396 = vsel %vm1391, %v1379, %v1083
    %v1397 = vsel %vm1391, %v1380, %v1085
    %v1398 = vsel %vm1391, %v1381, %v1087
    %v1399 = vsel %vm1391, %v1382, %v1089
    %v1400 = vsel %vm1391, %v1383, %v1091
    %v1401 = vsel %vm1391, %v1384, %v1093
    %v1402 = vsel %vm1391, %v1385, %v1095
    %v1403 = vsel %vm1391, %v1386, %v1097
    %v1404 = vsel %vm1391, %v1387, %v1099
    %v1405 = vsel %vm1391, %v1388, %v1101
    %v1406 = vsel %vm1391, %v1389, %v1103
    %v1407 = vsel %vm1391, %v1390, %v1105
    %vm1408 = vcmask 982016
    %v1409 = vsel %vm1408, %v1392, %v1123
    %v1410 = vsel %vm1408, %v1393, %v1125
    %v1411 = vsel %vm1408, %v1394, %v1127
    %v1412 = vsel %vm1408, %v1395, %v1129
    %v1413 = vsel %vm1408, %v1396, %v1131
    %v1414 = vsel %vm1408, %v1397, %v1133
    %v1415 = vsel %vm1408, %v1398, %v1135
    %v1416 = vsel %vm1408, %v1399, %v1137
    %v1417 = vsel %vm1408, %v1400, %v1139
    %v1418 = vsel %vm1408, %v1401, %v1141
    %v1419 = vsel %vm1408, %v1402, %v1143
    %v1420 = vsel %vm1408, %v1403, %v1145
    %v1421 = vsel %vm1408, %v1404, %v1147
    %v1422 = vsel %vm1408, %v1405, %v1149
    %v1423 = vsel %vm1408, %v1406, %v1151
    %v1424 = vsel %vm1408, %v1407, %v1153
    %v1425 = vmul.f32 %v1409, %v352
    %v1426 = vmul.f32 %v1410, %v353
    %v1427 = vmul.f32 %v1411, %v354
    %v1428 = vmul.f32 %v1412, %v355
    %v1429 = vmul.f32 %v1413, %v356
    %v1430 = vmul.f32 %v1414, %v357
    %v1431 = vmul.f32 %v1415, %v358
    %v1432 = vmul.f32 %v1416, %v359
    %v1433 = vmul.f32 %v1417, %v360
    %v1434 = vmul.f32 %v1418, %v361
    %v1435 = vmul.f32 %v1419, %v362
    %v1436 = vmul.f32 %v1420, %v363
    %v1437 = vmul.f32 %v1421, %v364
    %v1438 = vmul.f32 %v1422, %v365
    %v1439 = vmul.f32 %v1423, %v366
    %v1440 = vmul.f32 %v1424, %v367
    %v1441 = vmul.f32 %v344, %v368
    %v1442 = vmul.f32 %v344, %v369
    %v1443 = vmul.f32 %v344, %v370
    %v1444 = vmul.f32 %v344, %v371
    %v1445 = vmul.f32 %v344, %v372
    %v1446 = vmul.f32 %v344, %v373
    %v1447 = vmul.f32 %v344, %v374
    %v1448 = vmul.f32 %v344, %v375
    %v1449 = vmul.f32 %v344, %v376
    %v1450 = vmul.f32 %v344, %v377
    %v1451 = vmul.f32 %v344, %v378
    %v1452 = vmul.f32 %v344, %v379
    %v1453 = vmul.f32 %v344, %v380
    %v1454 = vmul.f32 %v344, %v381
    %v1455 = vmul.f32 %v344, %v382
    %v1456 = vmul.f32 %v344, %v383
    %1457 = vmatprep.subr.mxu0 0.0
    %1458 = vmatpush1.msra.mxu0 %v1440
    %1459 = vmatprep.subr.mxu0 0.0
    %1460 = vmatpush1.msra.mxu0 %v1439
    %1461 = vmatprep.subr.mxu0 0.0
    %1462 = vmatpush1.msra.mxu0 %v1438
    %1463 = vmatprep.subr.mxu0 0.0
    %1464 = vmatpush1.msra.mxu0 %v1437
    %1465 = vmatprep.subr.mxu0 0.0
    %1466 = vmatpush1.msra.mxu0 %v1436
    %1467 = vmatprep.subr.mxu0 0.0
    %1468 = vmatpush1.msra.mxu0 %v1435
    %1469 = vmatprep.subr.mxu0 0.0
    %1470 = vmatpush1.msra.mxu0 %v1434
    %1471 = vmatprep.subr.mxu0 0.0
    %1472 = vmatpush1.msra.mxu0 %v1433
    %1473 = vmatprep.subr.mxu0 0.0
    %1474 = vmatpush1.msra.mxu0 %v1432
    %1475 = vmatprep.subr.mxu0 0.0
    %1476 = vmatpush1.msra.mxu0 %v1431
    %1477 = vmatprep.subr.mxu0 0.0
    %1478 = vmatpush1.msra.mxu0 %v1430
    %1479 = vmatprep.subr.mxu0 0.0
    %1480 = vmatpush1.msra.mxu0 %v1429
    %1481 = vmatprep.subr.mxu0 0.0
    %1482 = vmatpush1.msra.mxu0 %v1428
    %1483 = vmatprep.subr.mxu0 0.0
    %1484 = vmatpush1.msra.mxu0 %v1427
    %1485 = vmatprep.subr.mxu0 0.0
    %1486 = vmatpush1.msra.mxu0 %v1426
    %1487 = vmatprep.subr.mxu0 0.0
    %1488 = vmatpush1.msra.mxu0 %v1425
    %1489 = vmatprep.subr.mxu0 0.0
    %1490 = vmatpush2.msra.mxu0 0.0
    %1491 = vmatprep.subr.mxu0 0.0
    %1492 = vmatpush2.msra.mxu0 0.0
    %1493 = vmatprep.subr.mxu0 0.0
    %1494 = vmatpush2.msra.mxu0 0.0
    %1495 = vmatprep.subr.mxu0 0.0
    %1496 = vmatpush2.msra.mxu0 0.0
    %1497 = vmatprep.subr.mxu0 0.0
    %1498 = vmatpush2.msra.mxu0 0.0
    %1499 = vmatprep.subr.mxu0 0.0
    %1500 = vmatpush2.msra.mxu0 0.0
    %1501 = vmatprep.subr.mxu0 0.0
    %1502 = vmatpush2.msra.mxu0 0.0
    %1503 = vmatprep.subr.mxu0 0.0
    %1504 = vmatpush2.msra.mxu0 0.0
    %1505 = vmatprep.subr.mxu0 0.0
    %1506 = vmatpush2.msra.mxu0 0.0
    %1507 = vmatprep.subr.mxu0 0.0
    %1508 = vmatpush2.msra.mxu0 0.0
    %1509 = vmatprep.subr.mxu0 0.0
    %1510 = vmatpush2.msra.mxu0 0.0
    %1511 = vmatprep.subr.mxu0 0.0
    %1512 = vmatpush2.msra.mxu0 0.0
    %1513 = vmatprep.subr.mxu0 0.0
    %1514 = vmatpush2.msra.mxu0 0.0
    %1515 = vmatprep.subr.mxu0 0.0
    %1516 = vmatpush2.msra.mxu0 0.0
    %1517 = vmatprep.subr.mxu0 0.0
    %1518 = vmatpush2.msra.mxu0 0.0
    %1519 = vmatprep.subr.mxu0 0.0
    %1520 = vmatpush2.msra.mxu0 0.0
    %1521 = vmatprep.mubr.f32.mxu0 0.0
    %1522 = vmatmul.mubr.f32.gmra.mxu0 %v267
    %v1523 = vpop.f32.mrf.mxu0
    %v1524 = vadd.f32 %v384, %v1523
    %v1525 = vpop.f32.mrf.mxu0
    %1526 = vdwg.mxu0
    %1528 = vrot.lane.b32.xlu0 %v1524, 120
    %v1529 = vpop.permute.xlu0 %1528
    %1531 = vrot.lane.b32.xlu0 %v1524, 112
    %v1532 = vpop.permute.xlu0 %1531
    %1534 = vrot.lane.b32.xlu0 %v1524, 104
    %v1535 = vpop.permute.xlu0 %1534
    %1537 = vrot.lane.b32.xlu0 %v1524, 96
    %v1538 = vpop.permute.xlu0 %1537
    %1540 = vrot.lane.b32.xlu0 %v1524, 88
    %v1541 = vpop.permute.xlu0 %1540
    %1543 = vrot.lane.b32.xlu0 %v1524, 80
    %v1544 = vpop.permute.xlu0 %1543
    %1546 = vrot.lane.b32.xlu0 %v1524, 72
    %v1547 = vpop.permute.xlu0 %1546
    %1549 = vrot.lane.b32.xlu0 %v1524, 64
    %v1550 = vpop.permute.xlu0 %1549
    %1552 = vrot.lane.b32.xlu0 %v1524, 56
    %v1553 = vpop.permute.xlu0 %1552
    %1555 = vrot.lane.b32.xlu0 %v1524, 48
    %v1556 = vpop.permute.xlu0 %1555
    %1558 = vrot.lane.b32.xlu0 %v1524, 40
    %v1559 = vpop.permute.xlu0 %1558
    %1561 = vrot.lane.b32.xlu0 %v1524, 32
    %v1562 = vpop.permute.xlu0 %1561
    %1564 = vrot.lane.b32.xlu0 %v1524, 24
    %v1565 = vpop.permute.xlu0 %1564
    %1567 = vrot.lane.b32.xlu0 %v1524, 16
    %v1568 = vpop.permute.xlu0 %1567
    %1570 = vrot.lane.b32.xlu0 %v1524, 8
    %v1571 = vpop.permute.xlu0 %1570
    %v1573 = vcombine.low %v1524, %v1532
    %v1574 = vcombine.high %v1524, %v1532
    %v1576 = vunpack.c.l.s4 1983009808
    %v1577 = vunpack.c.0.s8 %v1576
    %v1578 = vlaneseq
    %v1579 = vshrl.u32 %v1578, 7
    %v1580 = vsub.s32 %v1577, %v1579
    %v1581 = vrot.slane %v1573, %v1580
    %v1583 = vunpack.c.l.s4 1983009808
    %v1584 = vunpack.c.0.s8 %v1583
    %v1585 = vlaneseq
    %v1586 = vshrl.u32 %v1585, 7
    %v1587 = vsub.s32 %v1584, %v1586
    %v1588 = vrot.slane %v1574, %v1587
    %v1589 = vcombine.low %v1529, %v1535
    %v1590 = vcombine.high %v1529, %v1535
    %v1592 = vunpack.c.l.s4 1983009808
    %v1593 = vunpack.c.0.s8 %v1592
    %v1594 = vlaneseq
    %v1595 = vshrl.u32 %v1594, 7
    %v1596 = vsub.s32 %v1593, %v1595
    %v1597 = vrot.slane %v1589, %v1596
    %v1599 = vunpack.c.l.s4 1983009808
    %v1600 = vunpack.c.0.s8 %v1599
    %v1601 = vlaneseq
    %v1602 = vshrl.u32 %v1601, 7
    %v1603 = vsub.s32 %v1600, %v1602
    %v1604 = vrot.slane %v1590, %v1603
    %v1605 = vcombine.low %v1538, %v1544
    %v1606 = vcombine.high %v1538, %v1544
    %v1608 = vunpack.c.l.s4 1983009808
    %v1609 = vunpack.c.0.s8 %v1608
    %v1610 = vlaneseq
    %v1611 = vshrl.u32 %v1610, 7
    %v1612 = vsub.s32 %v1609, %v1611
    %v1613 = vrot.slane %v1605, %v1612
    %v1615 = vunpack.c.l.s4 1983009808
    %v1616 = vunpack.c.0.s8 %v1615
    %v1617 = vlaneseq
    %v1618 = vshrl.u32 %v1617, 7
    %v1619 = vsub.s32 %v1616, %v1618
    %v1620 = vrot.slane %v1606, %v1619
    %v1621 = vcombine.low %v1541, %v1547
    %v1622 = vcombine.high %v1541, %v1547
    %v1624 = vunpack.c.l.s4 1983009808
    %v1625 = vunpack.c.0.s8 %v1624
    %v1626 = vlaneseq
    %v1627 = vshrl.u32 %v1626, 7
    %v1628 = vsub.s32 %v1625, %v1627
    %v1629 = vrot.slane %v1621, %v1628
    %v1631 = vunpack.c.l.s4 1983009808
    %v1632 = vunpack.c.0.s8 %v1631
    %v1633 = vlaneseq
    %v1634 = vshrl.u32 %v1633, 7
    %v1635 = vsub.s32 %v1632, %v1634
    %v1636 = vrot.slane %v1622, %v1635
    %v1637 = vcombine.low %v1581, %v1597
    %v1638 = vcombine.high %v1581, %v1597
    %v1640 = vunpack.c.l.s4 1934713408
    %v1641 = vunpack.c.0.s8 %v1640
    %v1642 = vlaneseq
    %v1643 = vshrl.u32 %v1642, 7
    %v1644 = vsub.s32 %v1641, %v1643
    %v1645 = vrot.slane %v1637, %v1644
    %v1647 = vunpack.c.l.s4 1934713408
    %v1648 = vunpack.c.0.s8 %v1647
    %v1649 = vlaneseq
    %v1650 = vshrl.u32 %v1649, 7
    %v1651 = vsub.s32 %v1648, %v1650
    %v1652 = vrot.slane %v1638, %v1651
    %v1653 = vcombine.low %v1588, %v1604
    %v1654 = vcombine.high %v1588, %v1604
    %v1656 = vunpack.c.l.s4 1934713408
    %v1657 = vunpack.c.0.s8 %v1656
    %v1658 = vlaneseq
    %v1659 = vshrl.u32 %v1658, 7
    %v1660 = vsub.s32 %v1657, %v1659
    %v1661 = vrot.slane %v1653, %v1660
    %v1663 = vunpack.c.l.s4 1934713408
    %v1664 = vunpack.c.0.s8 %v1663
    %v1665 = vlaneseq
    %v1666 = vshrl.u32 %v1665, 7
    %v1667 = vsub.s32 %v1664, %v1666
    %v1668 = vrot.slane %v1654, %v1667
    %v1669 = vcombine.low %v1613, %v1629
    %v1670 = vcombine.high %v1613, %v1629
    %v1672 = vunpack.c.l.s4 1934713408
    %v1673 = vunpack.c.0.s8 %v1672
    %v1674 = vlaneseq
    %v1675 = vshrl.u32 %v1674, 7
    %v1676 = vsub.s32 %v1673, %v1675
    %v1677 = vrot.slane %v1669, %v1676
    %v1679 = vunpack.c.l.s4 1934713408
    %v1680 = vunpack.c.0.s8 %v1679
    %v1681 = vlaneseq
    %v1682 = vshrl.u32 %v1681, 7
    %v1683 = vsub.s32 %v1680, %v1682
    %v1684 = vrot.slane %v1670, %v1683
    %v1685 = vcombine.low %v1620, %v1636
    %v1686 = vcombine.high %v1620, %v1636
    %v1688 = vunpack.c.l.s4 1934713408
    %v1689 = vunpack.c.0.s8 %v1688
    %v1690 = vlaneseq
    %v1691 = vshrl.u32 %v1690, 7
    %v1692 = vsub.s32 %v1689, %v1691
    %v1693 = vrot.slane %v1685, %v1692
    %v1695 = vunpack.c.l.s4 1934713408
    %v1696 = vunpack.c.0.s8 %v1695
    %v1697 = vlaneseq
    %v1698 = vshrl.u32 %v1697, 7
    %v1699 = vsub.s32 %v1696, %v1698
    %v1700 = vrot.slane %v1686, %v1699
    %v1701 = vcombine.low %v1645, %v1677
    %v1702 = vcombine.high %v1645, %v1677
    %v1703 = vcombine.low %v1652, %v1684
    %v1704 = vcombine.high %v1652, %v1684
    %v1705 = vcombine.low %v1661, %v1693
    %v1706 = vcombine.high %v1661, %v1693
    %v1707 = vcombine.low %v1668, %v1700
    %v1708 = vcombine.high %v1668, %v1700
    %v1709 = vcombine.low %v1550, %v1556
    %v1710 = vcombine.high %v1550, %v1556
    %v1712 = vunpack.c.l.s4 1983009808
    %v1713 = vunpack.c.0.s8 %v1712
    %v1714 = vlaneseq
    %v1715 = vshrl.u32 %v1714, 7
    %v1716 = vsub.s32 %v1713, %v1715
    %v1717 = vrot.slane %v1709, %v1716
    %v1719 = vunpack.c.l.s4 1983009808
    %v1720 = vunpack.c.0.s8 %v1719
    %v1721 = vlaneseq
    %v1722 = vshrl.u32 %v1721, 7
    %v1723 = vsub.s32 %v1720, %v1722
    %v1724 = vrot.slane %v1710, %v1723
    %v1725 = vcombine.low %v1553, %v1559
    %v1726 = vcombine.high %v1553, %v1559
    %v1728 = vunpack.c.l.s4 1983009808
    %v1729 = vunpack.c.0.s8 %v1728
    %v1730 = vlaneseq
    %v1731 = vshrl.u32 %v1730, 7
    %v1732 = vsub.s32 %v1729, %v1731
    %v1733 = vrot.slane %v1725, %v1732
    %v1735 = vunpack.c.l.s4 1983009808
    %v1736 = vunpack.c.0.s8 %v1735
    %v1737 = vlaneseq
    %v1738 = vshrl.u32 %v1737, 7
    %v1739 = vsub.s32 %v1736, %v1738
    %v1740 = vrot.slane %v1726, %v1739
    %v1741 = vcombine.low %v1562, %v1568
    %v1742 = vcombine.high %v1562, %v1568
    %v1744 = vunpack.c.l.s4 1983009808
    %v1745 = vunpack.c.0.s8 %v1744
    %v1746 = vlaneseq
    %v1747 = vshrl.u32 %v1746, 7
    %v1748 = vsub.s32 %v1745, %v1747
    %v1749 = vrot.slane %v1741, %v1748
    %v1751 = vunpack.c.l.s4 1983009808
    %v1752 = vunpack.c.0.s8 %v1751
    %v1753 = vlaneseq
    %v1754 = vshrl.u32 %v1753, 7
    %v1755 = vsub.s32 %v1752, %v1754
    %v1756 = vrot.slane %v1742, %v1755
    %v1757 = vcombine.low %v1565, %v1571
    %v1758 = vcombine.high %v1565, %v1571
    %v1760 = vunpack.c.l.s4 1983009808
    %v1761 = vunpack.c.0.s8 %v1760
    %v1762 = vlaneseq
    %v1763 = vshrl.u32 %v1762, 7
    %v1764 = vsub.s32 %v1761, %v1763
    %v1765 = vrot.slane %v1757, %v1764
    %v1767 = vunpack.c.l.s4 1983009808
    %v1768 = vunpack.c.0.s8 %v1767
    %v1769 = vlaneseq
    %v1770 = vshrl.u32 %v1769, 7
    %v1771 = vsub.s32 %v1768, %v1770
    %v1772 = vrot.slane %v1758, %v1771
    %v1773 = vcombine.low %v1717, %v1733
    %v1774 = vcombine.high %v1717, %v1733
    %v1776 = vunpack.c.l.s4 1934713408
    %v1777 = vunpack.c.0.s8 %v1776
    %v1778 = vlaneseq
    %v1779 = vshrl.u32 %v1778, 7
    %v1780 = vsub.s32 %v1777, %v1779
    %v1781 = vrot.slane %v1773, %v1780
    %v1783 = vunpack.c.l.s4 1934713408
    %v1784 = vunpack.c.0.s8 %v1783
    %v1785 = vlaneseq
    %v1786 = vshrl.u32 %v1785, 7
    %v1787 = vsub.s32 %v1784, %v1786
    %v1788 = vrot.slane %v1774, %v1787
    %v1789 = vcombine.low %v1724, %v1740
    %v1790 = vcombine.high %v1724, %v1740
    %v1792 = vunpack.c.l.s4 1934713408
    %v1793 = vunpack.c.0.s8 %v1792
    %v1794 = vlaneseq
    %v1795 = vshrl.u32 %v1794, 7
    %v1796 = vsub.s32 %v1793, %v1795
    %v1797 = vrot.slane %v1789, %v1796
    %v1799 = vunpack.c.l.s4 1934713408
    %v1800 = vunpack.c.0.s8 %v1799
    %v1801 = vlaneseq
    %v1802 = vshrl.u32 %v1801, 7
    %v1803 = vsub.s32 %v1800, %v1802
    %v1804 = vrot.slane %v1790, %v1803
    %v1805 = vcombine.low %v1749, %v1765
    %v1806 = vcombine.high %v1749, %v1765
    %v1808 = vunpack.c.l.s4 1934713408
    %v1809 = vunpack.c.0.s8 %v1808
    %v1810 = vlaneseq
    %v1811 = vshrl.u32 %v1810, 7
    %v1812 = vsub.s32 %v1809, %v1811
    %v1813 = vrot.slane %v1805, %v1812
    %v1815 = vunpack.c.l.s4 1934713408
    %v1816 = vunpack.c.0.s8 %v1815
    %v1817 = vlaneseq
    %v1818 = vshrl.u32 %v1817, 7
    %v1819 = vsub.s32 %v1816, %v1818
    %v1820 = vrot.slane %v1806, %v1819
    %v1821 = vcombine.low %v1756, %v1772
    %v1822 = vcombine.high %v1756, %v1772
    %v1824 = vunpack.c.l.s4 1934713408
    %v1825 = vunpack.c.0.s8 %v1824
    %v1826 = vlaneseq
    %v1827 = vshrl.u32 %v1826, 7
    %v1828 = vsub.s32 %v1825, %v1827
    %v1829 = vrot.slane %v1821, %v1828
    %v1831 = vunpack.c.l.s4 1934713408
    %v1832 = vunpack.c.0.s8 %v1831
    %v1833 = vlaneseq
    %v1834 = vshrl.u32 %v1833, 7
    %v1835 = vsub.s32 %v1832, %v1834
    %v1836 = vrot.slane %v1822, %v1835
    %v1837 = vcombine.low %v1781, %v1813
    %v1838 = vcombine.high %v1781, %v1813
    %v1839 = vcombine.low %v1788, %v1820
    %v1840 = vcombine.high %v1788, %v1820
    %v1841 = vcombine.low %v1797, %v1829
    %v1842 = vcombine.high %v1797, %v1829
    %v1843 = vcombine.low %v1804, %v1836
    %v1844 = vcombine.high %v1804, %v1836
    %v1845 = vsel %vm1170, %v1701, -inf
    %1846 = vmax.xlane.f32.xlu0 %v1845
    %v1847 = vpop.xlane.xlu0 %1846
    %v1848 = vsel %vm1170, %v1837, -inf
    %1849 = vmax.xlane.f32.xlu0 %v1848
    %v1850 = vpop.xlane.xlu0 %1849
    %v1851 = vsel %vm1170, %v1702, -inf
    %1852 = vmax.xlane.f32.xlu0 %v1851
    %v1853 = vpop.xlane.xlu0 %1852
    %v1854 = vsel %vm1170, %v1838, -inf
    %1855 = vmax.xlane.f32.xlu0 %v1854
    %v1856 = vpop.xlane.xlu0 %1855
    %v1857 = vsel %vm1170, %v1703, -inf
    %1858 = vmax.xlane.f32.xlu0 %v1857
    %v1859 = vpop.xlane.xlu0 %1858
    %v1860 = vsel %vm1170, %v1839, -inf
    %1861 = vmax.xlane.f32.xlu0 %v1860
    %v1862 = vpop.xlane.xlu0 %1861
    %v1863 = vsel %vm1170, %v1704, -inf
    %1864 = vmax.xlane.f32.xlu0 %v1863
    %v1865 = vpop.xlane.xlu0 %1864
    %v1866 = vsel %vm1170, %v1840, -inf
    %1867 = vmax.xlane.f32.xlu0 %v1866
    %v1868 = vpop.xlane.xlu0 %1867
    %v1869 = vsel %vm1170, %v1705, -inf
    %1870 = vmax.xlane.f32.xlu0 %v1869
    %v1871 = vpop.xlane.xlu0 %1870
    %v1872 = vsel %vm1170, %v1841, -inf
    %1873 = vmax.xlane.f32.xlu0 %v1872
    %v1874 = vpop.xlane.xlu0 %1873
    %v1875 = vsel %vm1170, %v1706, -inf
    %1876 = vmax.xlane.f32.xlu0 %v1875
    %v1877 = vpop.xlane.xlu0 %1876
    %v1878 = vsel %vm1170, %v1842, -inf
    %1879 = vmax.xlane.f32.xlu0 %v1878
    %v1880 = vpop.xlane.xlu0 %1879
    %v1881 = vsel %vm1170, %v1707, -inf
    %1882 = vmax.xlane.f32.xlu0 %v1881
    %v1883 = vpop.xlane.xlu0 %1882
    %v1884 = vsel %vm1170, %v1843, -inf
    %1885 = vmax.xlane.f32.xlu0 %v1884
    %v1886 = vpop.xlane.xlu0 %1885
    %v1887 = vsel %vm1170, %v1708, -inf
    %1888 = vmax.xlane.f32.xlu0 %v1887
    %v1889 = vpop.xlane.xlu0 %1888
    %v1890 = vsel %vm1170, %v1844, -inf
    %1891 = vmax.xlane.f32.xlu0 %v1890
    %v1892 = vpop.xlane.xlu0 %1891
    %v1893 = vsub.f32 %v1701, %v1847
    %v1894 = vsub.f32 %v1837, %v1850
    %v1895 = vsub.f32 %v1702, %v1853
    %v1896 = vsub.f32 %v1838, %v1856
    %v1897 = vsub.f32 %v1703, %v1859
    %v1898 = vsub.f32 %v1839, %v1862
    %v1899 = vsub.f32 %v1704, %v1865
    %v1900 = vsub.f32 %v1840, %v1868
    %v1901 = vsub.f32 %v1705, %v1871
    %v1902 = vsub.f32 %v1841, %v1874
    %v1903 = vsub.f32 %v1706, %v1877
    %v1904 = vsub.f32 %v1842, %v1880
    %v1905 = vsub.f32 %v1707, %v1883
    %v1906 = vsub.f32 %v1843, %v1886
    %v1907 = vsub.f32 %v1708, %v1889
    %v1908 = vsub.f32 %v1844, %v1892
    %v1909 = vmul.f32 %v1893, 1.442695
    %v1910 = vpow.pop %v1909
    %v1911 = vmul.f32 %v1894, 1.442695
    %v1912 = vpow.pop %v1911
    %v1913 = vmul.f32 %v1895, 1.442695
    %v1914 = vpow.pop %v1913
    %v1915 = vmul.f32 %v1896, 1.442695
    %v1916 = vpow.pop %v1915
    %v1917 = vmul.f32 %v1897, 1.442695
    %v1918 = vpow.pop %v1917
    %v1919 = vmul.f32 %v1898, 1.442695
    %v1920 = vpow.pop %v1919
    %v1921 = vmul.f32 %v1899, 1.442695
    %v1922 = vpow.pop %v1921
    %v1923 = vmul.f32 %v1900, 1.442695
    %v1924 = vpow.pop %v1923
    %v1925 = vmul.f32 %v1901, 1.442695
    %v1926 = vpow.pop %v1925
    %v1927 = vmul.f32 %v1902, 1.442695
    %v1928 = vpow.pop %v1927
    %v1929 = vmul.f32 %v1903, 1.442695
    %v1930 = vpow.pop %v1929
    %v1931 = vmul.f32 %v1904, 1.442695
    %v1932 = vpow.pop %v1931
    %v1933 = vmul.f32 %v1905, 1.442695
    %v1934 = vpow.pop %v1933
    %v1935 = vmul.f32 %v1906, 1.442695
    %v1936 = vpow.pop %v1935
    %v1937 = vmul.f32 %v1907, 1.442695
    %v1938 = vpow.pop %v1937
    %v1939 = vmul.f32 %v1908, 1.442695
    %v1940 = vpow.pop %v1939
    %v1941 = vsel %vm1170, %v1910, 0.0
    %1942 = vadd.xlane.f32.xlu0 %v1941
    %v1943 = vpop.xlane.xlu0 %1942
    %v1944 = vsel %vm1170, %v1912, 0.0
    %1945 = vadd.xlane.f32.xlu0 %v1944
    %v1946 = vpop.xlane.xlu0 %1945
    %v1947 = vsel %vm1170, %v1914, 0.0
    %1948 = vadd.xlane.f32.xlu0 %v1947
    %v1949 = vpop.xlane.xlu0 %1948
    %v1950 = vsel %vm1170, %v1916, 0.0
    %1951 = vadd.xlane.f32.xlu0 %v1950
    %v1952 = vpop.xlane.xlu0 %1951
    %v1953 = vsel %vm1170, %v1918, 0.0
    %1954 = vadd.xlane.f32.xlu0 %v1953
    %v1955 = vpop.xlane.xlu0 %1954
    %v1956 = vsel %vm1170, %v1920, 0.0
    %1957 = vadd.xlane.f32.xlu0 %v1956
    %v1958 = vpop.xlane.xlu0 %1957
    %v1959 = vsel %vm1170, %v1922, 0.0
    %1960 = vadd.xlane.f32.xlu0 %v1959
    %v1961 = vpop.xlane.xlu0 %1960
    %v1962 = vsel %vm1170, %v1924, 0.0
    %1963 = vadd.xlane.f32.xlu0 %v1962
    %v1964 = vpop.xlane.xlu0 %1963
    %v1965 = vsel %vm1170, %v1926, 0.0
    %1966 = vadd.xlane.f32.xlu0 %v1965
    %v1967 = vpop.xlane.xlu0 %1966
    %v1968 = vsel %vm1170, %v1928, 0.0
    %1969 = vadd.xlane.f32.xlu0 %v1968
    %v1970 = vpop.xlane.xlu0 %1969
    %v1971 = vsel %vm1170, %v1930, 0.0
    %1972 = vadd.xlane.f32.xlu0 %v1971
    %v1973 = vpop.xlane.xlu0 %1972
    %v1974 = vsel %vm1170, %v1932, 0.0
    %1975 = vadd.xlane.f32.xlu0 %v1974
    %v1976 = vpop.xlane.xlu0 %1975
    %v1977 = vsel %vm1170, %v1934, 0.0
    %1978 = vadd.xlane.f32.xlu0 %v1977
    %v1979 = vpop.xlane.xlu0 %1978
    %v1980 = vsel %vm1170, %v1936, 0.0
    %1981 = vadd.xlane.f32.xlu0 %v1980
    %v1982 = vpop.xlane.xlu0 %1981
    %v1983 = vsel %vm1170, %v1938, 0.0
    %1984 = vadd.xlane.f32.xlu0 %v1983
    %v1985 = vpop.xlane.xlu0 %1984
    %v1986 = vsel %vm1170, %v1940, 0.0
    %1987 = vadd.xlane.f32.xlu0 %v1986
    %v1988 = vpop.xlane.xlu0 %1987
    %v1989 = vrcp.pop %v1943
    %v1990 = vmul.f32 %v1910, %v1989
    %v1991 = vrcp.pop %v1946
    %v1992 = vmul.f32 %v1912, %v1991
    %v1993 = vrcp.pop %v1949
    %v1994 = vmul.f32 %v1914, %v1993
    %v1995 = vrcp.pop %v1952
    %v1996 = vmul.f32 %v1916, %v1995
    %v1997 = vrcp.pop %v1955
    %v1998 = vmul.f32 %v1918, %v1997
    %v1999 = vrcp.pop %v1958
    %v2000 = vmul.f32 %v1920, %v1999
    %v2001 = vrcp.pop %v1961
    %v2002 = vmul.f32 %v1922, %v2001
    %v2003 = vrcp.pop %v1964
    %v2004 = vmul.f32 %v1924, %v2003
    %v2005 = vrcp.pop %v1967
    %v2006 = vmul.f32 %v1926, %v2005
    %v2007 = vrcp.pop %v1970
    %v2008 = vmul.f32 %v1928, %v2007
    %v2009 = vrcp.pop %v1973
    %v2010 = vmul.f32 %v1930, %v2009
    %v2011 = vrcp.pop %v1976
    %v2012 = vmul.f32 %v1932, %v2011
    %v2013 = vrcp.pop %v1979
    %v2014 = vmul.f32 %v1934, %v2013
    %v2015 = vrcp.pop %v1982
    %v2016 = vmul.f32 %v1936, %v2015
    %v2017 = vrcp.pop %v1985
    %v2018 = vmul.f32 %v1938, %v2017
    %v2019 = vrcp.pop %v1988
    %v2020 = vmul.f32 %v1940, %v2019
    %v2021 = vcombine.low %v1990, %v1998
    %v2022 = vcombine.high %v1990, %v1998
    %v2024 = vunpack.c.l.s4 1983009808
    %v2025 = vunpack.c.0.s8 %v2024
    %v2026 = vlaneseq
    %v2027 = vshrl.u32 %v2026, 7
    %v2028 = vsub.s32 %v2025, %v2027
    %v2029 = vrot.slane %v2021, %v2028
    %v2031 = vunpack.c.l.s4 1983009808
    %v2032 = vunpack.c.0.s8 %v2031
    %v2033 = vlaneseq
    %v2034 = vshrl.u32 %v2033, 7
    %v2035 = vsub.s32 %v2032, %v2034
    %v2036 = vrot.slane %v2022, %v2035
    %v2037 = vcombine.low %v1994, %v2002
    %v2038 = vcombine.high %v1994, %v2002
    %v2040 = vunpack.c.l.s4 1983009808
    %v2041 = vunpack.c.0.s8 %v2040
    %v2042 = vlaneseq
    %v2043 = vshrl.u32 %v2042, 7
    %v2044 = vsub.s32 %v2041, %v2043
    %v2045 = vrot.slane %v2037, %v2044
    %v2047 = vunpack.c.l.s4 1983009808
    %v2048 = vunpack.c.0.s8 %v2047
    %v2049 = vlaneseq
    %v2050 = vshrl.u32 %v2049, 7
    %v2051 = vsub.s32 %v2048, %v2050
    %v2052 = vrot.slane %v2038, %v2051
    %v2053 = vcombine.low %v2006, %v2014
    %v2054 = vcombine.high %v2006, %v2014
    %v2056 = vunpack.c.l.s4 1983009808
    %v2057 = vunpack.c.0.s8 %v2056
    %v2058 = vlaneseq
    %v2059 = vshrl.u32 %v2058, 7
    %v2060 = vsub.s32 %v2057, %v2059
    %v2061 = vrot.slane %v2053, %v2060
    %v2063 = vunpack.c.l.s4 1983009808
    %v2064 = vunpack.c.0.s8 %v2063
    %v2065 = vlaneseq
    %v2066 = vshrl.u32 %v2065, 7
    %v2067 = vsub.s32 %v2064, %v2066
    %v2068 = vrot.slane %v2054, %v2067
    %v2069 = vcombine.low %v2010, %v2018
    %v2070 = vcombine.high %v2010, %v2018
    %v2072 = vunpack.c.l.s4 1983009808
    %v2073 = vunpack.c.0.s8 %v2072
    %v2074 = vlaneseq
    %v2075 = vshrl.u32 %v2074, 7
    %v2076 = vsub.s32 %v2073, %v2075
    %v2077 = vrot.slane %v2069, %v2076
    %v2079 = vunpack.c.l.s4 1983009808
    %v2080 = vunpack.c.0.s8 %v2079
    %v2081 = vlaneseq
    %v2082 = vshrl.u32 %v2081, 7
    %v2083 = vsub.s32 %v2080, %v2082
    %v2084 = vrot.slane %v2070, %v2083
    %v2085 = vcombine.low %v2029, %v2045
    %v2086 = vcombine.high %v2029, %v2045
    %v2088 = vunpack.c.l.s4 1934713408
    %v2089 = vunpack.c.0.s8 %v2088
    %v2090 = vlaneseq
    %v2091 = vshrl.u32 %v2090, 7
    %v2092 = vsub.s32 %v2089, %v2091
    %v2093 = vrot.slane %v2085, %v2092
    %v2095 = vunpack.c.l.s4 1934713408
    %v2096 = vunpack.c.0.s8 %v2095
    %v2097 = vlaneseq
    %v2098 = vshrl.u32 %v2097, 7
    %v2099 = vsub.s32 %v2096, %v2098
    %v2100 = vrot.slane %v2086, %v2099
    %v2101 = vcombine.low %v2036, %v2052
    %v2102 = vcombine.high %v2036, %v2052
    %v2104 = vunpack.c.l.s4 1934713408
    %v2105 = vunpack.c.0.s8 %v2104
    %v2106 = vlaneseq
    %v2107 = vshrl.u32 %v2106, 7
    %v2108 = vsub.s32 %v2105, %v2107
    %v2109 = vrot.slane %v2101, %v2108
    %v2111 = vunpack.c.l.s4 1934713408
    %v2112 = vunpack.c.0.s8 %v2111
    %v2113 = vlaneseq
    %v2114 = vshrl.u32 %v2113, 7
    %v2115 = vsub.s32 %v2112, %v2114
    %v2116 = vrot.slane %v2102, %v2115
    %v2117 = vcombine.low %v2061, %v2077
    %v2118 = vcombine.high %v2061, %v2077
    %v2120 = vunpack.c.l.s4 1934713408
    %v2121 = vunpack.c.0.s8 %v2120
    %v2122 = vlaneseq
    %v2123 = vshrl.u32 %v2122, 7
    %v2124 = vsub.s32 %v2121, %v2123
    %v2125 = vrot.slane %v2117, %v2124
    %v2127 = vunpack.c.l.s4 1934713408
    %v2128 = vunpack.c.0.s8 %v2127
    %v2129 = vlaneseq
    %v2130 = vshrl.u32 %v2129, 7
    %v2131 = vsub.s32 %v2128, %v2130
    %v2132 = vrot.slane %v2118, %v2131
    %v2133 = vcombine.low %v2068, %v2084
    %v2134 = vcombine.high %v2068, %v2084
    %v2136 = vunpack.c.l.s4 1934713408
    %v2137 = vunpack.c.0.s8 %v2136
    %v2138 = vlaneseq
    %v2139 = vshrl.u32 %v2138, 7
    %v2140 = vsub.s32 %v2137, %v2139
    %v2141 = vrot.slane %v2133, %v2140
    %v2143 = vunpack.c.l.s4 1934713408
    %v2144 = vunpack.c.0.s8 %v2143
    %v2145 = vlaneseq
    %v2146 = vshrl.u32 %v2145, 7
    %v2147 = vsub.s32 %v2144, %v2146
    %v2148 = vrot.slane %v2134, %v2147
    %v2149 = vcombine.low %v2093, %v2125
    %v2150 = vcombine.high %v2093, %v2125
    %v2151 = vcombine.low %v2100, %v2132
    %v2152 = vcombine.high %v2100, %v2132
    %v2153 = vcombine.low %v2109, %v2141
    %v2154 = vcombine.high %v2109, %v2141
    %v2155 = vcombine.low %v2116, %v2148
    %v2156 = vcombine.high %v2116, %v2148
    %v2157 = vcombine.low %v1992, %v2000
    %v2158 = vcombine.high %v1992, %v2000
    %v2160 = vunpack.c.l.s4 1983009808
    %v2161 = vunpack.c.0.s8 %v2160
    %v2162 = vlaneseq
    %v2163 = vshrl.u32 %v2162, 7
    %v2164 = vsub.s32 %v2161, %v2163
    %v2165 = vrot.slane %v2157, %v2164
    %v2167 = vunpack.c.l.s4 1983009808
    %v2168 = vunpack.c.0.s8 %v2167
    %v2169 = vlaneseq
    %v2170 = vshrl.u32 %v2169, 7
    %v2171 = vsub.s32 %v2168, %v2170
    %v2172 = vrot.slane %v2158, %v2171
    %v2173 = vcombine.low %v1996, %v2004
    %v2174 = vcombine.high %v1996, %v2004
    %v2176 = vunpack.c.l.s4 1983009808
    %v2177 = vunpack.c.0.s8 %v2176
    %v2178 = vlaneseq
    %v2179 = vshrl.u32 %v2178, 7
    %v2180 = vsub.s32 %v2177, %v2179
    %v2181 = vrot.slane %v2173, %v2180
    %v2183 = vunpack.c.l.s4 1983009808
    %v2184 = vunpack.c.0.s8 %v2183
    %v2185 = vlaneseq
    %v2186 = vshrl.u32 %v2185, 7
    %v2187 = vsub.s32 %v2184, %v2186
    %v2188 = vrot.slane %v2174, %v2187
    %v2189 = vcombine.low %v2008, %v2016
    %v2190 = vcombine.high %v2008, %v2016
    %v2192 = vunpack.c.l.s4 1983009808
    %v2193 = vunpack.c.0.s8 %v2192
    %v2194 = vlaneseq
    %v2195 = vshrl.u32 %v2194, 7
    %v2196 = vsub.s32 %v2193, %v2195
    %v2197 = vrot.slane %v2189, %v2196
    %v2199 = vunpack.c.l.s4 1983009808
    %v2200 = vunpack.c.0.s8 %v2199
    %v2201 = vlaneseq
    %v2202 = vshrl.u32 %v2201, 7
    %v2203 = vsub.s32 %v2200, %v2202
    %v2204 = vrot.slane %v2190, %v2203
    %v2205 = vcombine.low %v2012, %v2020
    %v2206 = vcombine.high %v2012, %v2020
    %v2208 = vunpack.c.l.s4 1983009808
    %v2209 = vunpack.c.0.s8 %v2208
    %v2210 = vlaneseq
    %v2211 = vshrl.u32 %v2210, 7
    %v2212 = vsub.s32 %v2209, %v2211
    %v2213 = vrot.slane %v2205, %v2212
    %v2215 = vunpack.c.l.s4 1983009808
    %v2216 = vunpack.c.0.s8 %v2215
    %v2217 = vlaneseq
    %v2218 = vshrl.u32 %v2217, 7
    %v2219 = vsub.s32 %v2216, %v2218
    %v2220 = vrot.slane %v2206, %v2219
    %v2221 = vcombine.low %v2165, %v2181
    %v2222 = vcombine.high %v2165, %v2181
    %v2224 = vunpack.c.l.s4 1934713408
    %v2225 = vunpack.c.0.s8 %v2224
    %v2226 = vlaneseq
    %v2227 = vshrl.u32 %v2226, 7
    %v2228 = vsub.s32 %v2225, %v2227
    %v2229 = vrot.slane %v2221, %v2228
    %v2231 = vunpack.c.l.s4 1934713408
    %v2232 = vunpack.c.0.s8 %v2231
    %v2233 = vlaneseq
    %v2234 = vshrl.u32 %v2233, 7
    %v2235 = vsub.s32 %v2232, %v2234
    %v2236 = vrot.slane %v2222, %v2235
    %v2237 = vcombine.low %v2172, %v2188
    %v2238 = vcombine.high %v2172, %v2188
    %v2240 = vunpack.c.l.s4 1934713408
    %v2241 = vunpack.c.0.s8 %v2240
    %v2242 = vlaneseq
    %v2243 = vshrl.u32 %v2242, 7
    %v2244 = vsub.s32 %v2241, %v2243
    %v2245 = vrot.slane %v2237, %v2244
    %v2247 = vunpack.c.l.s4 1934713408
    %v2248 = vunpack.c.0.s8 %v2247
    %v2249 = vlaneseq
    %v2250 = vshrl.u32 %v2249, 7
    %v2251 = vsub.s32 %v2248, %v2250
    %v2252 = vrot.slane %v2238, %v2251
    %v2253 = vcombine.low %v2197, %v2213
    %v2254 = vcombine.high %v2197, %v2213
    %v2256 = vunpack.c.l.s4 1934713408
    %v2257 = vunpack.c.0.s8 %v2256
    %v2258 = vlaneseq
    %v2259 = vshrl.u32 %v2258, 7
    %v2260 = vsub.s32 %v2257, %v2259
    %v2261 = vrot.slane %v2253, %v2260
    %v2263 = vunpack.c.l.s4 1934713408
    %v2264 = vunpack.c.0.s8 %v2263
    %v2265 = vlaneseq
    %v2266 = vshrl.u32 %v2265, 7
    %v2267 = vsub.s32 %v2264, %v2266
    %v2268 = vrot.slane %v2254, %v2267
    %v2269 = vcombine.low %v2204, %v2220
    %v2270 = vcombine.high %v2204, %v2220
    %v2272 = vunpack.c.l.s4 1934713408
    %v2273 = vunpack.c.0.s8 %v2272
    %v2274 = vlaneseq
    %v2275 = vshrl.u32 %v2274, 7
    %v2276 = vsub.s32 %v2273, %v2275
    %v2277 = vrot.slane %v2269, %v2276
    %v2279 = vunpack.c.l.s4 1934713408
    %v2280 = vunpack.c.0.s8 %v2279
    %v2281 = vlaneseq
    %v2282 = vshrl.u32 %v2281, 7
    %v2283 = vsub.s32 %v2280, %v2282
    %v2284 = vrot.slane %v2270, %v2283
    %v2285 = vcombine.low %v2229, %v2261
    %v2286 = vcombine.high %v2229, %v2261
    %v2287 = vcombine.low %v2236, %v2268
    %v2288 = vcombine.high %v2236, %v2268
    %v2289 = vcombine.low %v2245, %v2277
    %v2290 = vcombine.high %v2245, %v2277
    %v2291 = vcombine.low %v2252, %v2284
    %v2292 = vcombine.high %v2252, %v2284
    %2294 = vrot.lane.b32.xlu0 %v2150, 8
    %v2295 = vpop.permute.xlu0 %2294
    %2298 = vrot.lane.b32.xlu0 %v2151, 16
    %v2299 = vpop.permute.xlu0 %2298
    %2302 = vrot.lane.b32.xlu0 %v2152, 24
    %v2303 = vpop.permute.xlu0 %2302
    %2306 = vrot.lane.b32.xlu0 %v2153, 32
    %v2307 = vpop.permute.xlu0 %2306
    %2310 = vrot.lane.b32.xlu0 %v2154, 40
    %v2311 = vpop.permute.xlu0 %2310
    %2314 = vrot.lane.b32.xlu0 %v2155, 48
    %v2315 = vpop.permute.xlu0 %2314
    %2318 = vrot.lane.b32.xlu0 %v2156, 56
    %v2319 = vpop.permute.xlu0 %2318
    %2322 = vrot.lane.b32.xlu0 %v2285, 64
    %v2323 = vpop.permute.xlu0 %2322
    %2326 = vrot.lane.b32.xlu0 %v2286, 72
    %v2327 = vpop.permute.xlu0 %2326
    %2330 = vrot.lane.b32.xlu0 %v2287, 80
    %v2331 = vpop.permute.xlu0 %2330
    %2334 = vrot.lane.b32.xlu0 %v2288, 88
    %v2335 = vpop.permute.xlu0 %2334
    %2338 = vrot.lane.b32.xlu0 %v2289, 96
    %v2339 = vpop.permute.xlu0 %2338
    %2342 = vrot.lane.b32.xlu0 %v2290, 104
    %v2343 = vpop.permute.xlu0 %2342
    %2346 = vrot.lane.b32.xlu0 %v2291, 112
    %v2347 = vpop.permute.xlu0 %2346
    %2350 = vrot.lane.b32.xlu0 %v2292, 120
    %v2351 = vpop.permute.xlu0 %2350
    %v2353 = vsel %vm1170, %v2149, %v2295
    %v2354 = vsel %vm1187, %v2353, %v2299
    %v2355 = vsel %vm1204, %v2354, %v2303
    %v2356 = vsel %vm1221, %v2355, %v2307
    %v2357 = vsel %vm1238, %v2356, %v2311
    %v2358 = vsel %vm1255, %v2357, %v2315
    %v2359 = vsel %vm1272, %v2358, %v2319
    %v2360 = vsel %vm1289, %v2359, %v2323
    %v2361 = vsel %vm1306, %v2360, %v2327
    %v2362 = vsel %vm1323, %v2361, %v2331
    %v2363 = vsel %vm1340, %v2362, %v2335
    %v2364 = vsel %vm1357, %v2363, %v2339
    %v2365 = vsel %vm1374, %v2364, %v2343
    %v2366 = vsel %vm1391, %v2365, %v2347
    %v2367 = vsel %vm1408, %v2366, %v2351
    %2368 = vmatprep.subr.mxu0 0.0
    %2369 = vmatpush1.msra.mxu0 %v1456
    %2370 = vmatprep.subr.mxu0 0.0
    %2371 = vmatpush1.msra.mxu0 %v1455
    %2372 = vmatprep.subr.mxu0 0.0
    %2373 = vmatpush1.msra.mxu0 %v1454
    %2374 = vmatprep.subr.mxu0 0.0
    %2375 = vmatpush1.msra.mxu0 %v1453
    %2376 = vmatprep.subr.mxu0 0.0
    %2377 = vmatpush1.msra.mxu0 %v1452
    %2378 = vmatprep.subr.mxu0 0.0
    %2379 = vmatpush1.msra.mxu0 %v1451
    %2380 = vmatprep.subr.mxu0 0.0
    %2381 = vmatpush1.msra.mxu0 %v1450
    %2382 = vmatprep.subr.mxu0 0.0
    %2383 = vmatpush1.msra.mxu0 %v1449
    %2384 = vmatprep.subr.mxu0 0.0
    %2385 = vmatpush1.msra.mxu0 %v1448
    %2386 = vmatprep.subr.mxu0 0.0
    %2387 = vmatpush1.msra.mxu0 %v1447
    %2388 = vmatprep.subr.mxu0 0.0
    %2389 = vmatpush1.msra.mxu0 %v1446
    %2390 = vmatprep.subr.mxu0 0.0
    %2391 = vmatpush1.msra.mxu0 %v1445
    %2392 = vmatprep.subr.mxu0 0.0
    %2393 = vmatpush1.msra.mxu0 %v1444
    %2394 = vmatprep.subr.mxu0 0.0
    %2395 = vmatpush1.msra.mxu0 %v1443
    %2396 = vmatprep.subr.mxu0 0.0
    %2397 = vmatpush1.msra.mxu0 %v1442
    %2398 = vmatprep.subr.mxu0 0.0
    %2399 = vmatpush1.msra.mxu0 %v1441
    %2400 = vmatprep.subr.mxu0 0.0
    %2401 = vmatpush2.msra.mxu0 0.0
    %2402 = vmatprep.subr.mxu0 0.0
    %2403 = vmatpush2.msra.mxu0 0.0
    %2404 = vmatprep.subr.mxu0 0.0
    %2405 = vmatpush2.msra.mxu0 0.0
    %2406 = vmatprep.subr.mxu0 0.0
    %2407 = vmatpush2.msra.mxu0 0.0
    %2408 = vmatprep.subr.mxu0 0.0
    %2409 = vmatpush2.msra.mxu0 0.0
    %2410 = vmatprep.subr.mxu0 0.0
    %2411 = vmatpush2.msra.mxu0 0.0
    %2412 = vmatprep.subr.mxu0 0.0
    %2413 = vmatpush2.msra.mxu0 0.0
    %2414 = vmatprep.subr.mxu0 0.0
    %2415 = vmatpush2.msra.mxu0 0.0
    %2416 = vmatprep.subr.mxu0 0.0
    %2417 = vmatpush2.msra.mxu0 0.0
    %2418 = vmatprep.subr.mxu0 0.0
    %2419 = vmatpush2.msra.mxu0 0.0
    %2420 = vmatprep.subr.mxu0 0.0
    %2421 = vmatpush2.msra.mxu0 0.0
    %2422 = vmatprep.subr.mxu0 0.0
    %2423 = vmatpush2.msra.mxu0 0.0
    %2424 = vmatprep.subr.mxu0 0.0
    %2425 = vmatpush2.msra.mxu0 0.0
    %2426 = vmatprep.subr.mxu0 0.0
    %2427 = vmatpush2.msra.mxu0 0.0
    %2428 = vmatprep.subr.mxu0 0.0
    %2429 = vmatpush2.msra.mxu0 0.0
    %2430 = vmatprep.subr.mxu0 0.0
    %2431 = vmatpush2.msra.mxu0 0.0
    %2432 = vmatprep.mubr.f32.mxu0 0.0
    %2433 = vmatmul.mubr.f32.gmra.mxu0 %v2367
    %v2434 = vpop.f32.mrf.mxu0
    %v2435 = vadd.f32 0.0, %v2434
    %v2436 = vpop.f32.mrf.mxu0
    %2437 = vdwg.mxu0
    %v2439 = vlaneseq
    %v2440 = vshrl.u32 %v2439, 7
    %v2441 = vsub.s32 0, %v2440
    %v2442 = vrot.slane %v401, %v2441
    %2444 = vmatprep.subr.mxu0 0.0
    %2445 = vmatpush1.msra.mxu0 %v400
    %2446 = vmatprep.subr.mxu0 0.0
    %2447 = vmatpush1.msra.mxu0 %v399
    %2448 = vmatprep.subr.mxu0 0.0
    %2449 = vmatpush1.msra.mxu0 %v398
    %2450 = vmatprep.subr.mxu0 0.0
    %2451 = vmatpush1.msra.mxu0 %v397
    %2452 = vmatprep.subr.mxu0 0.0
    %2453 = vmatpush1.msra.mxu0 %v396
    %2454 = vmatprep.subr.mxu0 0.0
    %2455 = vmatpush1.msra.mxu0 %v395
    %2456 = vmatprep.subr.mxu0 0.0
    %2457 = vmatpush1.msra.mxu0 %v394
    %2458 = vmatprep.subr.mxu0 0.0
    %2459 = vmatpush1.msra.mxu0 %v393
    %2460 = vmatprep.subr.mxu0 0.0
    %2461 = vmatpush1.msra.mxu0 %v392
    %2462 = vmatprep.subr.mxu0 0.0
    %2463 = vmatpush1.msra.mxu0 %v391
    %2464 = vmatprep.subr.mxu0 0.0
    %2465 = vmatpush1.msra.mxu0 %v390
    %2466 = vmatprep.subr.mxu0 0.0
    %2467 = vmatpush1.msra.mxu0 %v389
    %2468 = vmatprep.subr.mxu0 0.0
    %2469 = vmatpush1.msra.mxu0 %v388
    %2470 = vmatprep.subr.mxu0 0.0
    %2471 = vmatpush1.msra.mxu0 %v387
    %2472 = vmatprep.subr.mxu0 0.0
    %2473 = vmatpush1.msra.mxu0 %v386
    %2474 = vmatprep.subr.mxu0 0.0
    %2475 = vmatpush1.msra.mxu0 %v385
    %2476 = vmatprep.subr.mxu0 0.0
    %2477 = vmatpush2.msra.mxu0 0.0
    %2478 = vmatprep.subr.mxu0 0.0
    %2479 = vmatpush2.msra.mxu0 0.0
    %2480 = vmatprep.subr.mxu0 0.0
    %2481 = vmatpush2.msra.mxu0 0.0
    %2482 = vmatprep.subr.mxu0 0.0
    %2483 = vmatpush2.msra.mxu0 0.0
    %2484 = vmatprep.subr.mxu0 0.0
    %2485 = vmatpush2.msra.mxu0 0.0
    %2486 = vmatprep.subr.mxu0 0.0
    %2487 = vmatpush2.msra.mxu0 0.0
    %2488 = vmatprep.subr.mxu0 0.0
    %2489 = vmatpush2.msra.mxu0 0.0
    %2490 = vmatprep.subr.mxu0 0.0
    %2491 = vmatpush2.msra.mxu0 0.0
    %2492 = vmatprep.subr.mxu0 0.0
    %2493 = vmatpush2.msra.mxu0 0.0
    %2494 = vmatprep.subr.mxu0 0.0
    %2495 = vmatpush2.msra.mxu0 0.0
    %2496 = vmatprep.subr.mxu0 0.0
    %2497 = vmatpush2.msra.mxu0 0.0
    %2498 = vmatprep.subr.mxu0 0.0
    %2499 = vmatpush2.msra.mxu0 0.0
    %2500 = vmatprep.subr.mxu0 0.0
    %2501 = vmatpush2.msra.mxu0 0.0
    %2502 = vmatprep.subr.mxu0 0.0
    %2503 = vmatpush2.msra.mxu0 0.0
    %2504 = vmatprep.subr.mxu0 0.0
    %2505 = vmatpush2.msra.mxu0 0.0
    %2506 = vmatprep.subr.mxu0 0.0
    %2507 = vmatpush2.msra.mxu0 0.0
    %2508 = vmatprep.mubr.f32.mxu0 0.0
    %2509 = vmatmul.mubr.f32.gmra.mxu0 %v2435
    %v2510 = vpop.f32.mrf.mxu0
    %v2511 = vadd.f32 %v2442, %v2510
    %v2512 = vpop.f32.mrf.mxu0
    %2513 = vdwg.mxu0
    %2514 = vst [vmem:[#allocation14] sm:$0xff] %v2511
    %2515 = vst [vmem:[#allocation15 - $0x7] sm:$0x80] %v2367
    %2516 = vxpose.xlu0.b32.start [1/16] %v275, 128
    %2517 = vxpose.xlu0.b32.cont [2/16] 0.0, 128
    %2518 = vxpose.xlu0.b32.cont [3/16] 0.0, 128
    %2519 = vxpose.xlu0.b32.cont [4/16] 0.0, 128
    %2520 = vxpose.xlu0.b32.cont [5/16] 0.0, 128
    %2521 = vxpose.xlu0.b32.cont [6/16] 0.0, 128
    %2522 = vxpose.xlu0.b32.cont [7/16] 0.0, 128
    %2523 = vxpose.xlu0.b32.cont [8/16] 0.0, 128
    %2524 = vxpose.xlu0.b32.cont [9/16] 0.0, 128
    %2525 = vxpose.xlu0.b32.cont [10/16] 0.0, 128
    %2526 = vxpose.xlu0.b32.cont [11/16] 0.0, 128
    %2527 = vxpose.xlu0.b32.cont [12/16] 0.0, 128
    %2528 = vxpose.xlu0.b32.cont [13/16] 0.0, 128
    %2529 = vxpose.xlu0.b32.cont [14/16] 0.0, 128
    %2530 = vxpose.xlu0.b32.cont [15/16] 0.0, 128
    %2531 = vxpose.xlu0.b32.end [16/16] 0.0, 128
    %v2532 = vpop.trf.xlu0
    %v2533 = vpop.trf.xlu0
    %v2534 = vpop.trf.xlu0
    %v2535 = vpop.trf.xlu0
    %v2536 = vpop.trf.xlu0
    %v2537 = vpop.trf.xlu0
    %v2538 = vpop.trf.xlu0
    %v2539 = vpop.trf.xlu0
    %v2540 = vpop.trf.xlu0
    %v2541 = vpop.trf.xlu0
    %v2542 = vpop.trf.xlu0
    %v2543 = vpop.trf.xlu0
    %v2544 = vpop.trf.xlu0
    %v2545 = vpop.trf.xlu0
    %v2546 = vpop.trf.xlu0
    %v2547 = vpop.trf.xlu0
    %2564 = vrot.lane.b32.xlu0 %v2532, 8
    %v2565 = vpop.permute.xlu0 %2564
    %2566 = vrot.lane.b32.xlu0 %v2533, 8
    %v2567 = vpop.permute.xlu0 %2566
    %2568 = vrot.lane.b32.xlu0 %v2534, 8
    %v2569 = vpop.permute.xlu0 %2568
    %2570 = vrot.lane.b32.xlu0 %v2535, 8
    %v2571 = vpop.permute.xlu0 %2570
    %2572 = vrot.lane.b32.xlu0 %v2536, 8
    %v2573 = vpop.permute.xlu0 %2572
    %2574 = vrot.lane.b32.xlu0 %v2537, 8
    %v2575 = vpop.permute.xlu0 %2574
    %2576 = vrot.lane.b32.xlu0 %v2538, 8
    %v2577 = vpop.permute.xlu0 %2576
    %2578 = vrot.lane.b32.xlu0 %v2539, 8
    %v2579 = vpop.permute.xlu0 %2578
    %2580 = vrot.lane.b32.xlu0 %v2540, 8
    %v2581 = vpop.permute.xlu0 %2580
    %2582 = vrot.lane.b32.xlu0 %v2541, 8
    %v2583 = vpop.permute.xlu0 %2582
    %2584 = vrot.lane.b32.xlu0 %v2542, 8
    %v2585 = vpop.permute.xlu0 %2584
    %2586 = vrot.lane.b32.xlu0 %v2543, 8
    %v2587 = vpop.permute.xlu0 %2586
    %2588 = vrot.lane.b32.xlu0 %v2544, 8
    %v2589 = vpop.permute.xlu0 %2588
    %2590 = vrot.lane.b32.xlu0 %v2545, 8
    %v2591 = vpop.permute.xlu0 %2590
    %2592 = vrot.lane.b32.xlu0 %v2546, 8
    %v2593 = vpop.permute.xlu0 %2592
    %2594 = vrot.lane.b32.xlu0 %v2547, 8
    %v2595 = vpop.permute.xlu0 %2594
    %2612 = vrot.lane.b32.xlu0 %v2532, 16
    %v2613 = vpop.permute.xlu0 %2612
    %2614 = vrot.lane.b32.xlu0 %v2533, 16
    %v2615 = vpop.permute.xlu0 %2614
    %2616 = vrot.lane.b32.xlu0 %v2534, 16
    %v2617 = vpop.permute.xlu0 %2616
    %2618 = vrot.lane.b32.xlu0 %v2535, 16
    %v2619 = vpop.permute.xlu0 %2618
    %2620 = vrot.lane.b32.xlu0 %v2536, 16
    %v2621 = vpop.permute.xlu0 %2620
    %2622 = vrot.lane.b32.xlu0 %v2537, 16
    %v2623 = vpop.permute.xlu0 %2622
    %2624 = vrot.lane.b32.xlu0 %v2538, 16
    %v2625 = vpop.permute.xlu0 %2624
    %2626 = vrot.lane.b32.xlu0 %v2539, 16
    %v2627 = vpop.permute.xlu0 %2626
    %2628 = vrot.lane.b32.xlu0 %v2540, 16
    %v2629 = vpop.permute.xlu0 %2628
    %2630 = vrot.lane.b32.xlu0 %v2541, 16
    %v2631 = vpop.permute.xlu0 %2630
    %2632 = vrot.lane.b32.xlu0 %v2542, 16
    %v2633 = vpop.permute.xlu0 %2632
    %2634 = vrot.lane.b32.xlu0 %v2543, 16
    %v2635 = vpop.permute.xlu0 %2634
    %2636 = vrot.lane.b32.xlu0 %v2544, 16
    %v2637 = vpop.permute.xlu0 %2636
    %2638 = vrot.lane.b32.xlu0 %v2545, 16
    %v2639 = vpop.permute.xlu0 %2638
    %2640 = vrot.lane.b32.xlu0 %v2546, 16
    %v2641 = vpop.permute.xlu0 %2640
    %2642 = vrot.lane.b32.xlu0 %v2547, 16
    %v2643 = vpop.permute.xlu0 %2642
    %2660 = vrot.lane.b32.xlu0 %v2532, 24
    %v2661 = vpop.permute.xlu0 %2660
    %2662 = vrot.lane.b32.xlu0 %v2533, 24
    %v2663 = vpop.permute.xlu0 %2662
    %2664 = vrot.lane.b32.xlu0 %v2534, 24
    %v2665 = vpop.permute.xlu0 %2664
    %2666 = vrot.lane.b32.xlu0 %v2535, 24
    %v2667 = vpop.permute.xlu0 %2666
    %2668 = vrot.lane.b32.xlu0 %v2536, 24
    %v2669 = vpop.permute.xlu0 %2668
    %2670 = vrot.lane.b32.xlu0 %v2537, 24
    %v2671 = vpop.permute.xlu0 %2670
    %2672 = vrot.lane.b32.xlu0 %v2538, 24
    %v2673 = vpop.permute.xlu0 %2672
    %2674 = vrot.lane.b32.xlu0 %v2539, 24
    %v2675 = vpop.permute.xlu0 %2674
    %2676 = vrot.lane.b32.xlu0 %v2540, 24
    %v2677 = vpop.permute.xlu0 %2676
    %2678 = vrot.lane.b32.xlu0 %v2541, 24
    %v2679 = vpop.permute.xlu0 %2678
    %2680 = vrot.lane.b32.xlu0 %v2542, 24
    %v2681 = vpop.permute.xlu0 %2680
    %2682 = vrot.lane.b32.xlu0 %v2543, 24
    %v2683 = vpop.permute.xlu0 %2682
    %2684 = vrot.lane.b32.xlu0 %v2544, 24
    %v2685 = vpop.permute.xlu0 %2684
    %2686 = vrot.lane.b32.xlu0 %v2545, 24
    %v2687 = vpop.permute.xlu0 %2686
    %2688 = vrot.lane.b32.xlu0 %v2546, 24
    %v2689 = vpop.permute.xlu0 %2688
    %2690 = vrot.lane.b32.xlu0 %v2547, 24
    %v2691 = vpop.permute.xlu0 %2690
    %2708 = vrot.lane.b32.xlu0 %v2532, 32
    %v2709 = vpop.permute.xlu0 %2708
    %2710 = vrot.lane.b32.xlu0 %v2533, 32
    %v2711 = vpop.permute.xlu0 %2710
    %2712 = vrot.lane.b32.xlu0 %v2534, 32
    %v2713 = vpop.permute.xlu0 %2712
    %2714 = vrot.lane.b32.xlu0 %v2535, 32
    %v2715 = vpop.permute.xlu0 %2714
    %2716 = vrot.lane.b32.xlu0 %v2536, 32
    %v2717 = vpop.permute.xlu0 %2716
    %2718 = vrot.lane.b32.xlu0 %v2537, 32
    %v2719 = vpop.permute.xlu0 %2718
    %2720 = vrot.lane.b32.xlu0 %v2538, 32
    %v2721 = vpop.permute.xlu0 %2720
    %2722 = vrot.lane.b32.xlu0 %v2539, 32
    %v2723 = vpop.permute.xlu0 %2722
    %2724 = vrot.lane.b32.xlu0 %v2540, 32
    %v2725 = vpop.permute.xlu0 %2724
    %2726 = vrot.lane.b32.xlu0 %v2541, 32
    %v2727 = vpop.permute.xlu0 %2726
    %2728 = vrot.lane.b32.xlu0 %v2542, 32
    %v2729 = vpop.permute.xlu0 %2728
    %2730 = vrot.lane.b32.xlu0 %v2543, 32
    %v2731 = vpop.permute.xlu0 %2730
    %2732 = vrot.lane.b32.xlu0 %v2544, 32
    %v2733 = vpop.permute.xlu0 %2732
    %2734 = vrot.lane.b32.xlu0 %v2545, 32
    %v2735 = vpop.permute.xlu0 %2734
    %2736 = vrot.lane.b32.xlu0 %v2546, 32
    %v2737 = vpop.permute.xlu0 %2736
    %2738 = vrot.lane.b32.xlu0 %v2547, 32
    %v2739 = vpop.permute.xlu0 %2738
    %2756 = vrot.lane.b32.xlu0 %v2532, 40
    %v2757 = vpop.permute.xlu0 %2756
    %2758 = vrot.lane.b32.xlu0 %v2533, 40
    %v2759 = vpop.permute.xlu0 %2758
    %2760 = vrot.lane.b32.xlu0 %v2534, 40
    %v2761 = vpop.permute.xlu0 %2760
    %2762 = vrot.lane.b32.xlu0 %v2535, 40
    %v2763 = vpop.permute.xlu0 %2762
    %2764 = vrot.lane.b32.xlu0 %v2536, 40
    %v2765 = vpop.permute.xlu0 %2764
    %2766 = vrot.lane.b32.xlu0 %v2537, 40
    %v2767 = vpop.permute.xlu0 %2766
    %2768 = vrot.lane.b32.xlu0 %v2538, 40
    %v2769 = vpop.permute.xlu0 %2768
    %2770 = vrot.lane.b32.xlu0 %v2539, 40
    %v2771 = vpop.permute.xlu0 %2770
    %2772 = vrot.lane.b32.xlu0 %v2540, 40
    %v2773 = vpop.permute.xlu0 %2772
    %2774 = vrot.lane.b32.xlu0 %v2541, 40
    %v2775 = vpop.permute.xlu0 %2774
    %2776 = vrot.lane.b32.xlu0 %v2542, 40
    %v2777 = vpop.permute.xlu0 %2776
    %2778 = vrot.lane.b32.xlu0 %v2543, 40
    %v2779 = vpop.permute.xlu0 %2778
    %2780 = vrot.lane.b32.xlu0 %v2544, 40
    %v2781 = vpop.permute.xlu0 %2780
    %2782 = vrot.lane.b32.xlu0 %v2545, 40
    %v2783 = vpop.permute.xlu0 %2782
    %2784 = vrot.lane.b32.xlu0 %v2546, 40
    %v2785 = vpop.permute.xlu0 %2784
    %2786 = vrot.lane.b32.xlu0 %v2547, 40
    %v2787 = vpop.permute.xlu0 %2786
    %2804 = vrot.lane.b32.xlu0 %v2532, 48
    %v2805 = vpop.permute.xlu0 %2804
    %2806 = vrot.lane.b32.xlu0 %v2533, 48
    %v2807 = vpop.permute.xlu0 %2806
    %2808 = vrot.lane.b32.xlu0 %v2534, 48
    %v2809 = vpop.permute.xlu0 %2808
    %2810 = vrot.lane.b32.xlu0 %v2535, 48
    %v2811 = vpop.permute.xlu0 %2810
    %2812 = vrot.lane.b32.xlu0 %v2536, 48
    %v2813 = vpop.permute.xlu0 %2812
    %2814 = vrot.lane.b32.xlu0 %v2537, 48
    %v2815 = vpop.permute.xlu0 %2814
    %2816 = vrot.lane.b32.xlu0 %v2538, 48
    %v2817 = vpop.permute.xlu0 %2816
    %2818 = vrot.lane.b32.xlu0 %v2539, 48
    %v2819 = vpop.permute.xlu0 %2818
    %2820 = vrot.lane.b32.xlu0 %v2540, 48
    %v2821 = vpop.permute.xlu0 %2820
    %2822 = vrot.lane.b32.xlu0 %v2541, 48
    %v2823 = vpop.permute.xlu0 %2822
    %2824 = vrot.lane.b32.xlu0 %v2542, 48
    %v2825 = vpop.permute.xlu0 %2824
    %2826 = vrot.lane.b32.xlu0 %v2543, 48
    %v2827 = vpop.permute.xlu0 %2826
    %2828 = vrot.lane.b32.xlu0 %v2544, 48
    %v2829 = vpop.permute.xlu0 %2828
    %2830 = vrot.lane.b32.xlu0 %v2545, 48
    %v2831 = vpop.permute.xlu0 %2830
    %2832 = vrot.lane.b32.xlu0 %v2546, 48
    %v2833 = vpop.permute.xlu0 %2832
    %2834 = vrot.lane.b32.xlu0 %v2547, 48
    %v2835 = vpop.permute.xlu0 %2834
    %2852 = vrot.lane.b32.xlu0 %v2532, 56
    %v2853 = vpop.permute.xlu0 %2852
    %2854 = vrot.lane.b32.xlu0 %v2533, 56
    %v2855 = vpop.permute.xlu0 %2854
    %2856 = vrot.lane.b32.xlu0 %v2534, 56
    %v2857 = vpop.permute.xlu0 %2856
    %2858 = vrot.lane.b32.xlu0 %v2535, 56
    %v2859 = vpop.permute.xlu0 %2858
    %2860 = vrot.lane.b32.xlu0 %v2536, 56
    %v2861 = vpop.permute.xlu0 %2860
    %2862 = vrot.lane.b32.xlu0 %v2537, 56
    %v2863 = vpop.permute.xlu0 %2862
    %2864 = vrot.lane.b32.xlu0 %v2538, 56
    %v2865 = vpop.permute.xlu0 %2864
    %2866 = vrot.lane.b32.xlu0 %v2539, 56
    %v2867 = vpop.permute.xlu0 %2866
    %2868 = vrot.lane.b32.xlu0 %v2540, 56
    %v2869 = vpop.permute.xlu0 %2868
    %2870 = vrot.lane.b32.xlu0 %v2541, 56
    %v2871 = vpop.permute.xlu0 %2870
    %2872 = vrot.lane.b32.xlu0 %v2542, 56
    %v2873 = vpop.permute.xlu0 %2872
    %2874 = vrot.lane.b32.xlu0 %v2543, 56
    %v2875 = vpop.permute.xlu0 %2874
    %2876 = vrot.lane.b32.xlu0 %v2544, 56
    %v2877 = vpop.permute.xlu0 %2876
    %2878 = vrot.lane.b32.xlu0 %v2545, 56
    %v2879 = vpop.permute.xlu0 %2878
    %2880 = vrot.lane.b32.xlu0 %v2546, 56
    %v2881 = vpop.permute.xlu0 %2880
    %2882 = vrot.lane.b32.xlu0 %v2547, 56
    %v2883 = vpop.permute.xlu0 %2882
    %2900 = vrot.lane.b32.xlu0 %v2532, 64
    %v2901 = vpop.permute.xlu0 %2900
    %2902 = vrot.lane.b32.xlu0 %v2533, 64
    %v2903 = vpop.permute.xlu0 %2902
    %2904 = vrot.lane.b32.xlu0 %v2534, 64
    %v2905 = vpop.permute.xlu0 %2904
    %2906 = vrot.lane.b32.xlu0 %v2535, 64
    %v2907 = vpop.permute.xlu0 %2906
    %2908 = vrot.lane.b32.xlu0 %v2536, 64
    %v2909 = vpop.permute.xlu0 %2908
    %2910 = vrot.lane.b32.xlu0 %v2537, 64
    %v2911 = vpop.permute.xlu0 %2910
    %2912 = vrot.lane.b32.xlu0 %v2538, 64
    %v2913 = vpop.permute.xlu0 %2912
    %2914 = vrot.lane.b32.xlu0 %v2539, 64
    %v2915 = vpop.permute.xlu0 %2914
    %2916 = vrot.lane.b32.xlu0 %v2540, 64
    %v2917 = vpop.permute.xlu0 %2916
    %2918 = vrot.lane.b32.xlu0 %v2541, 64
    %v2919 = vpop.permute.xlu0 %2918
    %2920 = vrot.lane.b32.xlu0 %v2542, 64
    %v2921 = vpop.permute.xlu0 %2920
    %2922 = vrot.lane.b32.xlu0 %v2543, 64
    %v2923 = vpop.permute.xlu0 %2922
    %2924 = vrot.lane.b32.xlu0 %v2544, 64
    %v2925 = vpop.permute.xlu0 %2924
    %2926 = vrot.lane.b32.xlu0 %v2545, 64
    %v2927 = vpop.permute.xlu0 %2926
    %2928 = vrot.lane.b32.xlu0 %v2546, 64
    %v2929 = vpop.permute.xlu0 %2928
    %2930 = vrot.lane.b32.xlu0 %v2547, 64
    %v2931 = vpop.permute.xlu0 %2930
    %2948 = vrot.lane.b32.xlu0 %v2532, 72
    %v2949 = vpop.permute.xlu0 %2948
    %2950 = vrot.lane.b32.xlu0 %v2533, 72
    %v2951 = vpop.permute.xlu0 %2950
    %2952 = vrot.lane.b32.xlu0 %v2534, 72
    %v2953 = vpop.permute.xlu0 %2952
    %2954 = vrot.lane.b32.xlu0 %v2535, 72
    %v2955 = vpop.permute.xlu0 %2954
    %2956 = vrot.lane.b32.xlu0 %v2536, 72
    %v2957 = vpop.permute.xlu0 %2956
    %2958 = vrot.lane.b32.xlu0 %v2537, 72
    %v2959 = vpop.permute.xlu0 %2958
    %2960 = vrot.lane.b32.xlu0 %v2538, 72
    %v2961 = vpop.permute.xlu0 %2960
    %2962 = vrot.lane.b32.xlu0 %v2539, 72
    %v2963 = vpop.permute.xlu0 %2962
    %2964 = vrot.lane.b32.xlu0 %v2540, 72
    %v2965 = vpop.permute.xlu0 %2964
    %2966 = vrot.lane.b32.xlu0 %v2541, 72
    %v2967 = vpop.permute.xlu0 %2966
    %2968 = vrot.lane.b32.xlu0 %v2542, 72
    %v2969 = vpop.permute.xlu0 %2968
    %2970 = vrot.lane.b32.xlu0 %v2543, 72
    %v2971 = vpop.permute.xlu0 %2970
    %2972 = vrot.lane.b32.xlu0 %v2544, 72
    %v2973 = vpop.permute.xlu0 %2972
    %2974 = vrot.lane.b32.xlu0 %v2545, 72
    %v2975 = vpop.permute.xlu0 %2974
    %2976 = vrot.lane.b32.xlu0 %v2546, 72
    %v2977 = vpop.permute.xlu0 %2976
    %2978 = vrot.lane.b32.xlu0 %v2547, 72
    %v2979 = vpop.permute.xlu0 %2978
    %2996 = vrot.lane.b32.xlu0 %v2532, 80
    %v2997 = vpop.permute.xlu0 %2996
    %2998 = vrot.lane.b32.xlu0 %v2533, 80
    %v2999 = vpop.permute.xlu0 %2998
    %3000 = vrot.lane.b32.xlu0 %v2534, 80
    %v3001 = vpop.permute.xlu0 %3000
    %3002 = vrot.lane.b32.xlu0 %v2535, 80
    %v3003 = vpop.permute.xlu0 %3002
    %3004 = vrot.lane.b32.xlu0 %v2536, 80
    %v3005 = vpop.permute.xlu0 %3004
    %3006 = vrot.lane.b32.xlu0 %v2537, 80
    %v3007 = vpop.permute.xlu0 %3006
    %3008 = vrot.lane.b32.xlu0 %v2538, 80
    %v3009 = vpop.permute.xlu0 %3008
    %3010 = vrot.lane.b32.xlu0 %v2539, 80
    %v3011 = vpop.permute.xlu0 %3010
    %3012 = vrot.lane.b32.xlu0 %v2540, 80
    %v3013 = vpop.permute.xlu0 %3012
    %3014 = vrot.lane.b32.xlu0 %v2541, 80
    %v3015 = vpop.permute.xlu0 %3014
    %3016 = vrot.lane.b32.xlu0 %v2542, 80
    %v3017 = vpop.permute.xlu0 %3016
    %3018 = vrot.lane.b32.xlu0 %v2543, 80
    %v3019 = vpop.permute.xlu0 %3018
    %3020 = vrot.lane.b32.xlu0 %v2544, 80
    %v3021 = vpop.permute.xlu0 %3020
    %3022 = vrot.lane.b32.xlu0 %v2545, 80
    %v3023 = vpop.permute.xlu0 %3022
    %3024 = vrot.lane.b32.xlu0 %v2546, 80
    %v3025 = vpop.permute.xlu0 %3024
    %3026 = vrot.lane.b32.xlu0 %v2547, 80
    %v3027 = vpop.permute.xlu0 %3026
    %3044 = vrot.lane.b32.xlu0 %v2532, 88
    %v3045 = vpop.permute.xlu0 %3044
    %3046 = vrot.lane.b32.xlu0 %v2533, 88
    %v3047 = vpop.permute.xlu0 %3046
    %3048 = vrot.lane.b32.xlu0 %v2534, 88
    %v3049 = vpop.permute.xlu0 %3048
    %3050 = vrot.lane.b32.xlu0 %v2535, 88
    %v3051 = vpop.permute.xlu0 %3050
    %3052 = vrot.lane.b32.xlu0 %v2536, 88
    %v3053 = vpop.permute.xlu0 %3052
    %3054 = vrot.lane.b32.xlu0 %v2537, 88
    %v3055 = vpop.permute.xlu0 %3054
    %3056 = vrot.lane.b32.xlu0 %v2538, 88
    %v3057 = vpop.permute.xlu0 %3056
    %3058 = vrot.lane.b32.xlu0 %v2539, 88
    %v3059 = vpop.permute.xlu0 %3058
    %3060 = vrot.lane.b32.xlu0 %v2540, 88
    %v3061 = vpop.permute.xlu0 %3060
    %3062 = vrot.lane.b32.xlu0 %v2541, 88
    %v3063 = vpop.permute.xlu0 %3062
    %3064 = vrot.lane.b32.xlu0 %v2542, 88
    %v3065 = vpop.permute.xlu0 %3064
    %3066 = vrot.lane.b32.xlu0 %v2543, 88
    %v3067 = vpop.permute.xlu0 %3066
    %3068 = vrot.lane.b32.xlu0 %v2544, 88
    %v3069 = vpop.permute.xlu0 %3068
    %3070 = vrot.lane.b32.xlu0 %v2545, 88
    %v3071 = vpop.permute.xlu0 %3070
    %3072 = vrot.lane.b32.xlu0 %v2546, 88
    %v3073 = vpop.permute.xlu0 %3072
    %3074 = vrot.lane.b32.xlu0 %v2547, 88
    %v3075 = vpop.permute.xlu0 %3074
    %3092 = vrot.lane.b32.xlu0 %v2532, 96
    %v3093 = vpop.permute.xlu0 %3092
    %3094 = vrot.lane.b32.xlu0 %v2533, 96
    %v3095 = vpop.permute.xlu0 %3094
    %3096 = vrot.lane.b32.xlu0 %v2534, 96
    %v3097 = vpop.permute.xlu0 %3096
    %3098 = vrot.lane.b32.xlu0 %v2535, 96
    %v3099 = vpop.permute.xlu0 %3098
    %3100 = vrot.lane.b32.xlu0 %v2536, 96
    %v3101 = vpop.permute.xlu0 %3100
    %3102 = vrot.lane.b32.xlu0 %v2537, 96
    %v3103 = vpop.permute.xlu0 %3102
    %3104 = vrot.lane.b32.xlu0 %v2538, 96
    %v3105 = vpop.permute.xlu0 %3104
    %3106 = vrot.lane.b32.xlu0 %v2539, 96
    %v3107 = vpop.permute.xlu0 %3106
    %3108 = vrot.lane.b32.xlu0 %v2540, 96
    %v3109 = vpop.permute.xlu0 %3108
    %3110 = vrot.lane.b32.xlu0 %v2541, 96
    %v3111 = vpop.permute.xlu0 %3110
    %3112 = vrot.lane.b32.xlu0 %v2542, 96
    %v3113 = vpop.permute.xlu0 %3112
    %3114 = vrot.lane.b32.xlu0 %v2543, 96
    %v3115 = vpop.permute.xlu0 %3114
    %3116 = vrot.lane.b32.xlu0 %v2544, 96
    %v3117 = vpop.permute.xlu0 %3116
    %3118 = vrot.lane.b32.xlu0 %v2545, 96
    %v3119 = vpop.permute.xlu0 %3118
    %3120 = vrot.lane.b32.xlu0 %v2546, 96
    %v3121 = vpop.permute.xlu0 %3120
    %3122 = vrot.lane.b32.xlu0 %v2547, 96
    %v3123 = vpop.permute.xlu0 %3122
    %3140 = vrot.lane.b32.xlu0 %v2532, 104
    %v3141 = vpop.permute.xlu0 %3140
    %3142 = vrot.lane.b32.xlu0 %v2533, 104
    %v3143 = vpop.permute.xlu0 %3142
    %3144 = vrot.lane.b32.xlu0 %v2534, 104
    %v3145 = vpop.permute.xlu0 %3144
    %3146 = vrot.lane.b32.xlu0 %v2535, 104
    %v3147 = vpop.permute.xlu0 %3146
    %3148 = vrot.lane.b32.xlu0 %v2536, 104
    %v3149 = vpop.permute.xlu0 %3148
    %3150 = vrot.lane.b32.xlu0 %v2537, 104
    %v3151 = vpop.permute.xlu0 %3150
    %3152 = vrot.lane.b32.xlu0 %v2538, 104
    %v3153 = vpop.permute.xlu0 %3152
    %3154 = vrot.lane.b32.xlu0 %v2539, 104
    %v3155 = vpop.permute.xlu0 %3154
    %3156 = vrot.lane.b32.xlu0 %v2540, 104
    %v3157 = vpop.permute.xlu0 %3156
    %3158 = vrot.lane.b32.xlu0 %v2541, 104
    %v3159 = vpop.permute.xlu0 %3158
    %3160 = vrot.lane.b32.xlu0 %v2542, 104
    %v3161 = vpop.permute.xlu0 %3160
    %3162 = vrot.lane.b32.xlu0 %v2543, 104
    %v3163 = vpop.permute.xlu0 %3162
    %3164 = vrot.lane.b32.xlu0 %v2544, 104
    %v3165 = vpop.permute.xlu0 %3164
    %3166 = vrot.lane.b32.xlu0 %v2545, 104
    %v3167 = vpop.permute.xlu0 %3166
    %3168 = vrot.lane.b32.xlu0 %v2546, 104
    %v3169 = vpop.permute.xlu0 %3168
    %3170 = vrot.lane.b32.xlu0 %v2547, 104
    %v3171 = vpop.permute.xlu0 %3170
    %3188 = vrot.lane.b32.xlu0 %v2532, 112
    %v3189 = vpop.permute.xlu0 %3188
    %3190 = vrot.lane.b32.xlu0 %v2533, 112
    %v3191 = vpop.permute.xlu0 %3190
    %3192 = vrot.lane.b32.xlu0 %v2534, 112
    %v3193 = vpop.permute.xlu0 %3192
    %3194 = vrot.lane.b32.xlu0 %v2535, 112
    %v3195 = vpop.permute.xlu0 %3194
    %3196 = vrot.lane.b32.xlu0 %v2536, 112
    %v3197 = vpop.permute.xlu0 %3196
    %3198 = vrot.lane.b32.xlu0 %v2537, 112
    %v3199 = vpop.permute.xlu0 %3198
    %3200 = vrot.lane.b32.xlu0 %v2538, 112
    %v3201 = vpop.permute.xlu0 %3200
    %3202 = vrot.lane.b32.xlu0 %v2539, 112
    %v3203 = vpop.permute.xlu0 %3202
    %3204 = vrot.lane.b32.xlu0 %v2540, 112
    %v3205 = vpop.permute.xlu0 %3204
    %3206 = vrot.lane.b32.xlu0 %v2541, 112
    %v3207 = vpop.permute.xlu0 %3206
    %3208 = vrot.lane.b32.xlu0 %v2542, 112
    %v3209 = vpop.permute.xlu0 %3208
    %3210 = vrot.lane.b32.xlu0 %v2543, 112
    %v3211 = vpop.permute.xlu0 %3210
    %3212 = vrot.lane.b32.xlu0 %v2544, 112
    %v3213 = vpop.permute.xlu0 %3212
    %3214 = vrot.lane.b32.xlu0 %v2545, 112
    %v3215 = vpop.permute.xlu0 %3214
    %3216 = vrot.lane.b32.xlu0 %v2546, 112
    %v3217 = vpop.permute.xlu0 %3216
    %3218 = vrot.lane.b32.xlu0 %v2547, 112
    %v3219 = vpop.permute.xlu0 %3218
    %3236 = vrot.lane.b32.xlu0 %v2532, 120
    %v3237 = vpop.permute.xlu0 %3236
    %3238 = vrot.lane.b32.xlu0 %v2533, 120
    %v3239 = vpop.permute.xlu0 %3238
    %3240 = vrot.lane.b32.xlu0 %v2534, 120
    %v3241 = vpop.permute.xlu0 %3240
    %3242 = vrot.lane.b32.xlu0 %v2535, 120
    %v3243 = vpop.permute.xlu0 %3242
    %3244 = vrot.lane.b32.xlu0 %v2536, 120
    %v3245 = vpop.permute.xlu0 %3244
    %3246 = vrot.lane.b32.xlu0 %v2537, 120
    %v3247 = vpop.permute.xlu0 %3246
    %3248 = vrot.lane.b32.xlu0 %v2538, 120
    %v3249 = vpop.permute.xlu0 %3248
    %3250 = vrot.lane.b32.xlu0 %v2539, 120
    %v3251 = vpop.permute.xlu0 %3250
    %3252 = vrot.lane.b32.xlu0 %v2540, 120
    %v3253 = vpop.permute.xlu0 %3252
    %3254 = vrot.lane.b32.xlu0 %v2541, 120
    %v3255 = vpop.permute.xlu0 %3254
    %3256 = vrot.lane.b32.xlu0 %v2542, 120
    %v3257 = vpop.permute.xlu0 %3256
    %3258 = vrot.lane.b32.xlu0 %v2543, 120
    %v3259 = vpop.permute.xlu0 %3258
    %3260 = vrot.lane.b32.xlu0 %v2544, 120
    %v3261 = vpop.permute.xlu0 %3260
    %3262 = vrot.lane.b32.xlu0 %v2545, 120
    %v3263 = vpop.permute.xlu0 %3262
    %3264 = vrot.lane.b32.xlu0 %v2546, 120
    %v3265 = vpop.permute.xlu0 %3264
    %3266 = vrot.lane.b32.xlu0 %v2547, 120
    %v3267 = vpop.permute.xlu0 %3266
    %v3284 = vsel %vm1170, %v2532, %v2565
    %v3285 = vsel %vm1170, %v2533, %v2567
    %v3286 = vsel %vm1170, %v2534, %v2569
    %v3287 = vsel %vm1170, %v2535, %v2571
    %v3288 = vsel %vm1170, %v2536, %v2573
    %v3289 = vsel %vm1170, %v2537, %v2575
    %v3290 = vsel %vm1170, %v2538, %v2577
    %v3291 = vsel %vm1170, %v2539, %v2579
    %v3292 = vsel %vm1170, %v2540, %v2581
    %v3293 = vsel %vm1170, %v2541, %v2583
    %v3294 = vsel %vm1170, %v2542, %v2585
    %v3295 = vsel %vm1170, %v2543, %v2587
    %v3296 = vsel %vm1170, %v2544, %v2589
    %v3297 = vsel %vm1170, %v2545, %v2591
    %v3298 = vsel %vm1170, %v2546, %v2593
    %v3299 = vsel %vm1170, %v2547, %v2595
    %v3300 = vsel %vm1187, %v3284, %v2613
    %v3301 = vsel %vm1187, %v3285, %v2615
    %v3302 = vsel %vm1187, %v3286, %v2617
    %v3303 = vsel %vm1187, %v3287, %v2619
    %v3304 = vsel %vm1187, %v3288, %v2621
    %v3305 = vsel %vm1187, %v3289, %v2623
    %v3306 = vsel %vm1187, %v3290, %v2625
    %v3307 = vsel %vm1187, %v3291, %v2627
    %v3308 = vsel %vm1187, %v3292, %v2629
    %v3309 = vsel %vm1187, %v3293, %v2631
    %v3310 = vsel %vm1187, %v3294, %v2633
    %v3311 = vsel %vm1187, %v3295, %v2635
    %v3312 = vsel %vm1187, %v3296, %v2637
    %v3313 = vsel %vm1187, %v3297, %v2639
    %v3314 = vsel %vm1187, %v3298, %v2641
    %v3315 = vsel %vm1187, %v3299, %v2643
    %v3316 = vsel %vm1204, %v3300, %v2661
    %v3317 = vsel %vm1204, %v3301, %v2663
    %v3318 = vsel %vm1204, %v3302, %v2665
    %v3319 = vsel %vm1204, %v3303, %v2667
    %v3320 = vsel %vm1204, %v3304, %v2669
    %v3321 = vsel %vm1204, %v3305, %v2671
    %v3322 = vsel %vm1204, %v3306, %v2673
    %v3323 = vsel %vm1204, %v3307, %v2675
    %v3324 = vsel %vm1204, %v3308, %v2677
    %v3325 = vsel %vm1204, %v3309, %v2679
    %v3326 = vsel %vm1204, %v3310, %v2681
    %v3327 = vsel %vm1204, %v3311, %v2683
    %v3328 = vsel %vm1204, %v3312, %v2685
    %v3329 = vsel %vm1204, %v3313, %v2687
    %v3330 = vsel %vm1204, %v3314, %v2689
    %v3331 = vsel %vm1204, %v3315, %v2691
    %v3332 = vsel %vm1221, %v3316, %v2709
    %v3333 = vsel %vm1221, %v3317, %v2711
    %v3334 = vsel %vm1221, %v3318, %v2713
    %v3335 = vsel %vm1221, %v3319, %v2715
    %v3336 = vsel %vm1221, %v3320, %v2717
    %v3337 = vsel %vm1221, %v3321, %v2719
    %v3338 = vsel %vm1221, %v3322, %v2721
    %v3339 = vsel %vm1221, %v3323, %v2723
    %v3340 = vsel %vm1221, %v3324, %v2725
    %v3341 = vsel %vm1221, %v3325, %v2727
    %v3342 = vsel %vm1221, %v3326, %v2729
    %v3343 = vsel %vm1221, %v3327, %v2731
    %v3344 = vsel %vm1221, %v3328, %v2733
    %v3345 = vsel %vm1221, %v3329, %v2735
    %v3346 = vsel %vm1221, %v3330, %v2737
    %v3347 = vsel %vm1221, %v3331, %v2739
    %v3348 = vsel %vm1238, %v3332, %v2757
    %v3349 = vsel %vm1238, %v3333, %v2759
    %v3350 = vsel %vm1238, %v3334, %v2761
    %v3351 = vsel %vm1238, %v3335, %v2763
    %v3352 = vsel %vm1238, %v3336, %v2765
    %v3353 = vsel %vm1238, %v3337, %v2767
    %v3354 = vsel %vm1238, %v3338, %v2769
    %v3355 = vsel %vm1238, %v3339, %v2771
    %v3356 = vsel %vm1238, %v3340, %v2773
    %v3357 = vsel %vm1238, %v3341, %v2775
    %v3358 = vsel %vm1238, %v3342, %v2777
    %v3359 = vsel %vm1238, %v3343, %v2779
    %v3360 = vsel %vm1238, %v3344, %v2781
    %v3361 = vsel %vm1238, %v3345, %v2783
    %v3362 = vsel %vm1238, %v3346, %v2785
    %v3363 = vsel %vm1238, %v3347, %v2787
    %v3364 = vsel %vm1255, %v3348, %v2805
    %v3365 = vsel %vm1255, %v3349, %v2807
    %v3366 = vsel %vm1255, %v3350, %v2809
    %v3367 = vsel %vm1255, %v3351, %v2811
    %v3368 = vsel %vm1255, %v3352, %v2813
    %v3369 = vsel %vm1255, %v3353, %v2815
    %v3370 = vsel %vm1255, %v3354, %v2817
    %v3371 = vsel %vm1255, %v3355, %v2819
    %v3372 = vsel %vm1255, %v3356, %v2821
    %v3373 = vsel %vm1255, %v3357, %v2823
    %v3374 = vsel %vm1255, %v3358, %v2825
    %v3375 = vsel %vm1255, %v3359, %v2827
    %v3376 = vsel %vm1255, %v3360, %v2829
    %v3377 = vsel %vm1255, %v3361, %v2831
    %v3378 = vsel %vm1255, %v3362, %v2833
    %v3379 = vsel %vm1255, %v3363, %v2835
    %v3380 = vsel %vm1272, %v3364, %v2853
    %v3381 = vsel %vm1272, %v3365, %v2855
    %v3382 = vsel %vm1272, %v3366, %v2857
    %v3383 = vsel %vm1272, %v3367, %v2859
    %v3384 = vsel %vm1272, %v3368, %v2861
    %v3385 = vsel %vm1272, %v3369, %v2863
    %v3386 = vsel %vm1272, %v3370, %v2865
    %v3387 = vsel %vm1272, %v3371, %v2867
    %v3388 = vsel %vm1272, %v3372, %v2869
    %v3389 = vsel %vm1272, %v3373, %v2871
    %v3390 = vsel %vm1272, %v3374, %v2873
    %v3391 = vsel %vm1272, %v3375, %v2875
    %v3392 = vsel %vm1272, %v3376, %v2877
    %v3393 = vsel %vm1272, %v3377, %v2879
    %v3394 = vsel %vm1272, %v3378, %v2881
    %v3395 = vsel %vm1272, %v3379, %v2883
    %v3396 = vsel %vm1289, %v3380, %v2901
    %v3397 = vsel %vm1289, %v3381, %v2903
    %v3398 = vsel %vm1289, %v3382, %v2905
    %v3399 = vsel %vm1289, %v3383, %v2907
    %v3400 = vsel %vm1289, %v3384, %v2909
    %v3401 = vsel %vm1289, %v3385, %v2911
    %v3402 = vsel %vm1289, %v3386, %v2913
    %v3403 = vsel %vm1289, %v3387, %v2915
    %v3404 = vsel %vm1289, %v3388, %v2917
    %v3405 = vsel %vm1289, %v3389, %v2919
    %v3406 = vsel %vm1289, %v3390, %v2921
    %v3407 = vsel %vm1289, %v3391, %v2923
    %v3408 = vsel %vm1289, %v3392, %v2925
    %v3409 = vsel %vm1289, %v3393, %v2927
    %v3410 = vsel %vm1289, %v3394, %v2929
    %v3411 = vsel %vm1289, %v3395, %v2931
    %v3412 = vsel %vm1306, %v3396, %v2949
    %v3413 = vsel %vm1306, %v3397, %v2951
    %v3414 = vsel %vm1306, %v3398, %v2953
    %v3415 = vsel %vm1306, %v3399, %v2955
    %v3416 = vsel %vm1306, %v3400, %v2957
    %v3417 = vsel %vm1306, %v3401, %v2959
    %v3418 = vsel %vm1306, %v3402, %v2961
    %v3419 = vsel %vm1306, %v3403, %v2963
    %v3420 = vsel %vm1306, %v3404, %v2965
    %v3421 = vsel %vm1306, %v3405, %v2967
    %v3422 = vsel %vm1306, %v3406, %v2969
    %v3423 = vsel %vm1306, %v3407, %v2971
    %v3424 = vsel %vm1306, %v3408, %v2973
    %v3425 = vsel %vm1306, %v3409, %v2975
    %v3426 = vsel %vm1306, %v3410, %v2977
    %v3427 = vsel %vm1306, %v3411, %v2979
    %v3428 = vsel %vm1323, %v3412, %v2997
    %v3429 = vsel %vm1323, %v3413, %v2999
    %v3430 = vsel %vm1323, %v3414, %v3001
    %v3431 = vsel %vm1323, %v3415, %v3003
    %v3432 = vsel %vm1323, %v3416, %v3005
    %v3433 = vsel %vm1323, %v3417, %v3007
    %v3434 = vsel %vm1323, %v3418, %v3009
    %v3435 = vsel %vm1323, %v3419, %v3011
    %v3436 = vsel %vm1323, %v3420, %v3013
    %v3437 = vsel %vm1323, %v3421, %v3015
    %v3438 = vsel %vm1323, %v3422, %v3017
    %v3439 = vsel %vm1323, %v3423, %v3019
    %v3440 = vsel %vm1323, %v3424, %v3021
    %v3441 = vsel %vm1323, %v3425, %v3023
    %v3442 = vsel %vm1323, %v3426, %v3025
    %v3443 = vsel %vm1323, %v3427, %v3027
    %v3444 = vsel %vm1340, %v3428, %v3045
    %v3445 = vsel %vm1340, %v3429, %v3047
    %v3446 = vsel %vm1340, %v3430, %v3049
    %v3447 = vsel %vm1340, %v3431, %v3051
    %v3448 = vsel %vm1340, %v3432, %v3053
    %v3449 = vsel %vm1340, %v3433, %v3055
    %v3450 = vsel %vm1340, %v3434, %v3057
    %v3451 = vsel %vm1340, %v3435, %v3059
    %v3452 = vsel %vm1340, %v3436, %v3061
    %v3453 = vsel %vm1340, %v3437, %v3063
    %v3454 = vsel %vm1340, %v3438, %v3065
    %v3455 = vsel %vm1340, %v3439, %v3067
    %v3456 = vsel %vm1340, %v3440, %v3069
    %v3457 = vsel %vm1340, %v3441, %v3071
    %v3458 = vsel %vm1340, %v3442, %v3073
    %v3459 = vsel %vm1340, %v3443, %v3075
    %v3460 = vsel %vm1357, %v3444, %v3093
    %v3461 = vsel %vm1357, %v3445, %v3095
    %v3462 = vsel %vm1357, %v3446, %v3097
    %v3463 = vsel %vm1357, %v3447, %v3099
    %v3464 = vsel %vm1357, %v3448, %v3101
    %v3465 = vsel %vm1357, %v3449, %v3103
    %v3466 = vsel %vm1357, %v3450, %v3105
    %v3467 = vsel %vm1357, %v3451, %v3107
    %v3468 = vsel %vm1357, %v3452, %v3109
    %v3469 = vsel %vm1357, %v3453, %v3111
    %v3470 = vsel %vm1357, %v3454, %v3113
    %v3471 = vsel %vm1357, %v3455, %v3115
    %v3472 = vsel %vm1357, %v3456, %v3117
    %v3473 = vsel %vm1357, %v3457, %v3119
    %v3474 = vsel %vm1357, %v3458, %v3121
    %v3475 = vsel %vm1357, %v3459, %v3123
    %v3476 = vsel %vm1374, %v3460, %v3141
    %v3477 = vsel %vm1374, %v3461, %v3143
    %v3478 = vsel %vm1374, %v3462, %v3145
    %v3479 = vsel %vm1374, %v3463, %v3147
    %v3480 = vsel %vm1374, %v3464, %v3149
    %v3481 = vsel %vm1374, %v3465, %v3151
    %v3482 = vsel %vm1374, %v3466, %v3153
    %v3483 = vsel %vm1374, %v3467, %v3155
    %v3484 = vsel %vm1374, %v3468, %v3157
    %v3485 = vsel %vm1374, %v3469, %v3159
    %v3486 = vsel %vm1374, %v3470, %v3161
    %v3487 = vsel %vm1374, %v3471, %v3163
    %v3488 = vsel %vm1374, %v3472, %v3165
    %v3489 = vsel %vm1374, %v3473, %v3167
    %v3490 = vsel %vm1374, %v3474, %v3169
    %v3491 = vsel %vm1374, %v3475, %v3171
    %v3492 = vsel %vm1391, %v3476, %v3189
    %v3493 = vsel %vm1391, %v3477, %v3191
    %v3494 = vsel %vm1391, %v3478, %v3193
    %v3495 = vsel %vm1391, %v3479, %v3195
    %v3496 = vsel %vm1391, %v3480, %v3197
    %v3497 = vsel %vm1391, %v3481, %v3199
    %v3498 = vsel %vm1391, %v3482, %v3201
    %v3499 = vsel %vm1391, %v3483, %v3203
    %v3500 = vsel %vm1391, %v3484, %v3205
    %v3501 = vsel %vm1391, %v3485, %v3207
    %v3502 = vsel %vm1391, %v3486, %v3209
    %v3503 = vsel %vm1391, %v3487, %v3211
    %v3504 = vsel %vm1391, %v3488, %v3213
    %v3505 = vsel %vm1391, %v3489, %v3215
    %v3506 = vsel %vm1391, %v3490, %v3217
    %v3507 = vsel %vm1391, %v3491, %v3219
    %v3508 = vsel %vm1408, %v3492, %v3237
    %v3509 = vsel %vm1408, %v3493, %v3239
    %v3510 = vsel %vm1408, %v3494, %v3241
    %v3511 = vsel %vm1408, %v3495, %v3243
    %v3512 = vsel %vm1408, %v3496, %v3245
    %v3513 = vsel %vm1408, %v3497, %v3247
    %v3514 = vsel %vm1408, %v3498, %v3249
    %v3515 = vsel %vm1408, %v3499, %v3251
    %v3516 = vsel %vm1408, %v3500, %v3253
    %v3517 = vsel %vm1408, %v3501, %v3255
    %v3518 = vsel %vm1408, %v3502, %v3257
    %v3519 = vsel %vm1408, %v3503, %v3259
    %v3520 = vsel %vm1408, %v3504, %v3261
    %v3521 = vsel %vm1408, %v3505, %v3263
    %v3522 = vsel %vm1408, %v3506, %v3265
    %v3523 = vsel %vm1408, %v3507, %v3267
    %v3524 = vmul.f32 %v3508, %v352
    %v3525 = vmul.f32 %v3509, %v353
    %v3526 = vmul.f32 %v3510, %v354
    %v3527 = vmul.f32 %v3511, %v355
    %v3528 = vmul.f32 %v3512, %v356
    %v3529 = vmul.f32 %v3513, %v357
    %v3530 = vmul.f32 %v3514, %v358
    %v3531 = vmul.f32 %v3515, %v359
    %v3532 = vmul.f32 %v3516, %v360
    %v3533 = vmul.f32 %v3517, %v361
    %v3534 = vmul.f32 %v3518, %v362
    %v3535 = vmul.f32 %v3519, %v363
    %v3536 = vmul.f32 %v3520, %v364
    %v3537 = vmul.f32 %v3521, %v365
    %v3538 = vmul.f32 %v3522, %v366
    %v3539 = vmul.f32 %v3523, %v367
    %v3540 = vmul.f32 %v349, %v368
    %v3541 = vmul.f32 %v349, %v369
    %v3542 = vmul.f32 %v349, %v370
    %v3543 = vmul.f32 %v349, %v371
    %v3544 = vmul.f32 %v349, %v372
    %v3545 = vmul.f32 %v349, %v373
    %v3546 = vmul.f32 %v349, %v374
    %v3547 = vmul.f32 %v349, %v375
    %v3548 = vmul.f32 %v349, %v376
    %v3549 = vmul.f32 %v349, %v377
    %v3550 = vmul.f32 %v349, %v378
    %v3551 = vmul.f32 %v349, %v379
    %v3552 = vmul.f32 %v349, %v380
    %v3553 = vmul.f32 %v349, %v381
    %v3554 = vmul.f32 %v349, %v382
    %v3555 = vmul.f32 %v349, %v383
    %3556 = vmatprep.subr.mxu0 0.0
    %3557 = vmatpush1.msra.mxu0 %v3539
    %3558 = vmatprep.subr.mxu0 0.0
    %3559 = vmatpush1.msra.mxu0 %v3538
    %3560 = vmatprep.subr.mxu0 0.0
    %3561 = vmatpush1.msra.mxu0 %v3537
    %3562 = vmatprep.subr.mxu0 0.0
    %3563 = vmatpush1.msra.mxu0 %v3536
    %3564 = vmatprep.subr.mxu0 0.0
    %3565 = vmatpush1.msra.mxu0 %v3535
    %3566 = vmatprep.subr.mxu0 0.0
    %3567 = vmatpush1.msra.mxu0 %v3534
    %3568 = vmatprep.subr.mxu0 0.0
    %3569 = vmatpush1.msra.mxu0 %v3533
    %3570 = vmatprep.subr.mxu0 0.0
    %3571 = vmatpush1.msra.mxu0 %v3532
    %3572 = vmatprep.subr.mxu0 0.0
    %3573 = vmatpush1.msra.mxu0 %v3531
    %3574 = vmatprep.subr.mxu0 0.0
    %3575 = vmatpush1.msra.mxu0 %v3530
    %3576 = vmatprep.subr.mxu0 0.0
    %3577 = vmatpush1.msra.mxu0 %v3529
    %3578 = vmatprep.subr.mxu0 0.0
    %3579 = vmatpush1.msra.mxu0 %v3528
    %3580 = vmatprep.subr.mxu0 0.0
    %3581 = vmatpush1.msra.mxu0 %v3527
    %3582 = vmatprep.subr.mxu0 0.0
    %3583 = vmatpush1.msra.mxu0 %v3526
    %3584 = vmatprep.subr.mxu0 0.0
    %3585 = vmatpush1.msra.mxu0 %v3525
    %3586 = vmatprep.subr.mxu0 0.0
    %3587 = vmatpush1.msra.mxu0 %v3524
    %3588 = vmatprep.subr.mxu0 0.0
    %3589 = vmatpush2.msra.mxu0 0.0
    %3590 = vmatprep.subr.mxu0 0.0
    %3591 = vmatpush2.msra.mxu0 0.0
    %3592 = vmatprep.subr.mxu0 0.0
    %3593 = vmatpush2.msra.mxu0 0.0
    %3594 = vmatprep.subr.mxu0 0.0
    %3595 = vmatpush2.msra.mxu0 0.0
    %3596 = vmatprep.subr.mxu0 0.0
    %3597 = vmatpush2.msra.mxu0 0.0
    %3598 = vmatprep.subr.mxu0 0.0
    %3599 = vmatpush2.msra.mxu0 0.0
    %3600 = vmatprep.subr.mxu0 0.0
    %3601 = vmatpush2.msra.mxu0 0.0
    %3602 = vmatprep.subr.mxu0 0.0
    %3603 = vmatpush2.msra.mxu0 0.0
    %3604 = vmatprep.subr.mxu0 0.0
    %3605 = vmatpush2.msra.mxu0 0.0
    %3606 = vmatprep.subr.mxu0 0.0
    %3607 = vmatpush2.msra.mxu0 0.0
    %3608 = vmatprep.subr.mxu0 0.0
    %3609 = vmatpush2.msra.mxu0 0.0
    %3610 = vmatprep.subr.mxu0 0.0
    %3611 = vmatpush2.msra.mxu0 0.0
    %3612 = vmatprep.subr.mxu0 0.0
    %3613 = vmatpush2.msra.mxu0 0.0
    %3614 = vmatprep.subr.mxu0 0.0
    %3615 = vmatpush2.msra.mxu0 0.0
    %3616 = vmatprep.subr.mxu0 0.0
    %3617 = vmatpush2.msra.mxu0 0.0
    %3618 = vmatprep.subr.mxu0 0.0
    %3619 = vmatpush2.msra.mxu0 0.0
    %3620 = vmatprep.mubr.f32.mxu0 0.0
    %3621 = vmatmul.mubr.f32.gmra.mxu0 %v273
    %v3622 = vpop.f32.mrf.mxu0
    %v3623 = vadd.f32 %v384, %v3622
    %v3624 = vpop.f32.mrf.mxu0
    %3625 = vdwg.mxu0
    %3627 = vrot.lane.b32.xlu0 %v3623, 120
    %v3628 = vpop.permute.xlu0 %3627
    %3630 = vrot.lane.b32.xlu0 %v3623, 112
    %v3631 = vpop.permute.xlu0 %3630
    %3633 = vrot.lane.b32.xlu0 %v3623, 104
    %v3634 = vpop.permute.xlu0 %3633
    %3636 = vrot.lane.b32.xlu0 %v3623, 96
    %v3637 = vpop.permute.xlu0 %3636
    %3639 = vrot.lane.b32.xlu0 %v3623, 88
    %v3640 = vpop.permute.xlu0 %3639
    %3642 = vrot.lane.b32.xlu0 %v3623, 80
    %v3643 = vpop.permute.xlu0 %3642
    %3645 = vrot.lane.b32.xlu0 %v3623, 72
    %v3646 = vpop.permute.xlu0 %3645
    %3648 = vrot.lane.b32.xlu0 %v3623, 64
    %v3649 = vpop.permute.xlu0 %3648
    %3651 = vrot.lane.b32.xlu0 %v3623, 56
    %v3652 = vpop.permute.xlu0 %3651
    %3654 = vrot.lane.b32.xlu0 %v3623, 48
    %v3655 = vpop.permute.xlu0 %3654
    %3657 = vrot.lane.b32.xlu0 %v3623, 40
    %v3658 = vpop.permute.xlu0 %3657
    %3660 = vrot.lane.b32.xlu0 %v3623, 32
    %v3661 = vpop.permute.xlu0 %3660
    %3663 = vrot.lane.b32.xlu0 %v3623, 24
    %v3664 = vpop.permute.xlu0 %3663
    %3666 = vrot.lane.b32.xlu0 %v3623, 16
    %v3667 = vpop.permute.xlu0 %3666
    %3669 = vrot.lane.b32.xlu0 %v3623, 8
    %v3670 = vpop.permute.xlu0 %3669
    %v3672 = vcombine.low %v3623, %v3631
    %v3673 = vcombine.high %v3623, %v3631
    %v3675 = vunpack.c.l.s4 1983009808
    %v3676 = vunpack.c.0.s8 %v3675
    %v3677 = vlaneseq
    %v3678 = vshrl.u32 %v3677, 7
    %v3679 = vsub.s32 %v3676, %v3678
    %v3680 = vrot.slane %v3672, %v3679
    %v3682 = vunpack.c.l.s4 1983009808
    %v3683 = vunpack.c.0.s8 %v3682
    %v3684 = vlaneseq
    %v3685 = vshrl.u32 %v3684, 7
    %v3686 = vsub.s32 %v3683, %v3685
    %v3687 = vrot.slane %v3673, %v3686
    %v3688 = vcombine.low %v3628, %v3634
    %v3689 = vcombine.high %v3628, %v3634
    %v3691 = vunpack.c.l.s4 1983009808
    %v3692 = vunpack.c.0.s8 %v3691
    %v3693 = vlaneseq
    %v3694 = vshrl.u32 %v3693, 7
    %v3695 = vsub.s32 %v3692, %v3694
    %v3696 = vrot.slane %v3688, %v3695
    %v3698 = vunpack.c.l.s4 1983009808
    %v3699 = vunpack.c.0.s8 %v3698
    %v3700 = vlaneseq
    %v3701 = vshrl.u32 %v3700, 7
    %v3702 = vsub.s32 %v3699, %v3701
    %v3703 = vrot.slane %v3689, %v3702
    %v3704 = vcombine.low %v3637, %v3643
    %v3705 = vcombine.high %v3637, %v3643
    %v3707 = vunpack.c.l.s4 1983009808
    %v3708 = vunpack.c.0.s8 %v3707
    %v3709 = vlaneseq
    %v3710 = vshrl.u32 %v3709, 7
    %v3711 = vsub.s32 %v3708, %v3710
    %v3712 = vrot.slane %v3704, %v3711
    %v3714 = vunpack.c.l.s4 1983009808
    %v3715 = vunpack.c.0.s8 %v3714
    %v3716 = vlaneseq
    %v3717 = vshrl.u32 %v3716, 7
    %v3718 = vsub.s32 %v3715, %v3717
    %v3719 = vrot.slane %v3705, %v3718
    %v3720 = vcombine.low %v3640, %v3646
    %v3721 = vcombine.high %v3640, %v3646
    %v3723 = vunpack.c.l.s4 1983009808
    %v3724 = vunpack.c.0.s8 %v3723
    %v3725 = vlaneseq
    %v3726 = vshrl.u32 %v3725, 7
    %v3727 = vsub.s32 %v3724, %v3726
    %v3728 = vrot.slane %v3720, %v3727
    %v3730 = vunpack.c.l.s4 1983009808
    %v3731 = vunpack.c.0.s8 %v3730
    %v3732 = vlaneseq
    %v3733 = vshrl.u32 %v3732, 7
    %v3734 = vsub.s32 %v3731, %v3733
    %v3735 = vrot.slane %v3721, %v3734
    %v3736 = vcombine.low %v3680, %v3696
    %v3737 = vcombine.high %v3680, %v3696
    %v3739 = vunpack.c.l.s4 1934713408
    %v3740 = vunpack.c.0.s8 %v3739
    %v3741 = vlaneseq
    %v3742 = vshrl.u32 %v3741, 7
    %v3743 = vsub.s32 %v3740, %v3742
    %v3744 = vrot.slane %v3736, %v3743
    %v3746 = vunpack.c.l.s4 1934713408
    %v3747 = vunpack.c.0.s8 %v3746
    %v3748 = vlaneseq
    %v3749 = vshrl.u32 %v3748, 7
    %v3750 = vsub.s32 %v3747, %v3749
    %v3751 = vrot.slane %v3737, %v3750
    %v3752 = vcombine.low %v3687, %v3703
    %v3753 = vcombine.high %v3687, %v3703
    %v3755 = vunpack.c.l.s4 1934713408
    %v3756 = vunpack.c.0.s8 %v3755
    %v3757 = vlaneseq
    %v3758 = vshrl.u32 %v3757, 7
    %v3759 = vsub.s32 %v3756, %v3758
    %v3760 = vrot.slane %v3752, %v3759
    %v3762 = vunpack.c.l.s4 1934713408
    %v3763 = vunpack.c.0.s8 %v3762
    %v3764 = vlaneseq
    %v3765 = vshrl.u32 %v3764, 7
    %v3766 = vsub.s32 %v3763, %v3765
    %v3767 = vrot.slane %v3753, %v3766
    %v3768 = vcombine.low %v3712, %v3728
    %v3769 = vcombine.high %v3712, %v3728
    %v3771 = vunpack.c.l.s4 1934713408
    %v3772 = vunpack.c.0.s8 %v3771
    %v3773 = vlaneseq
    %v3774 = vshrl.u32 %v3773, 7
    %v3775 = vsub.s32 %v3772, %v3774
    %v3776 = vrot.slane %v3768, %v3775
    %v3778 = vunpack.c.l.s4 1934713408
    %v3779 = vunpack.c.0.s8 %v3778
    %v3780 = vlaneseq
    %v3781 = vshrl.u32 %v3780, 7
    %v3782 = vsub.s32 %v3779, %v3781
    %v3783 = vrot.slane %v3769, %v3782
    %v3784 = vcombine.low %v3719, %v3735
    %v3785 = vcombine.high %v3719, %v3735
    %v3787 = vunpack.c.l.s4 1934713408
    %v3788 = vunpack.c.0.s8 %v3787
    %v3789 = vlaneseq
    %v3790 = vshrl.u32 %v3789, 7
    %v3791 = vsub.s32 %v3788, %v3790
    %v3792 = vrot.slane %v3784, %v3791
    %v3794 = vunpack.c.l.s4 1934713408
    %v3795 = vunpack.c.0.s8 %v3794
    %v3796 = vlaneseq
    %v3797 = vshrl.u32 %v3796, 7
    %v3798 = vsub.s32 %v3795, %v3797
    %v3799 = vrot.slane %v3785, %v3798
    %v3800 = vcombine.low %v3744, %v3776
    %v3801 = vcombine.high %v3744, %v3776
    %v3802 = vcombine.low %v3751, %v3783
    %v3803 = vcombine.high %v3751, %v3783
    %v3804 = vcombine.low %v3760, %v3792
    %v3805 = vcombine.high %v3760, %v3792
    %v3806 = vcombine.low %v3767, %v3799
    %v3807 = vcombine.high %v3767, %v3799
    %v3808 = vcombine.low %v3649, %v3655
    %v3809 = vcombine.high %v3649, %v3655
    %v3811 = vunpack.c.l.s4 1983009808
    %v3812 = vunpack.c.0.s8 %v3811
    %v3813 = vlaneseq
    %v3814 = vshrl.u32 %v3813, 7
    %v3815 = vsub.s32 %v3812, %v3814
    %v3816 = vrot.slane %v3808, %v3815
    %v3818 = vunpack.c.l.s4 1983009808
    %v3819 = vunpack.c.0.s8 %v3818
    %v3820 = vlaneseq
    %v3821 = vshrl.u32 %v3820, 7
    %v3822 = vsub.s32 %v3819, %v3821
    %v3823 = vrot.slane %v3809, %v3822
    %v3824 = vcombine.low %v3652, %v3658
    %v3825 = vcombine.high %v3652, %v3658
    %v3827 = vunpack.c.l.s4 1983009808
    %v3828 = vunpack.c.0.s8 %v3827
    %v3829 = vlaneseq
    %v3830 = vshrl.u32 %v3829, 7
    %v3831 = vsub.s32 %v3828, %v3830
    %v3832 = vrot.slane %v3824, %v3831
    %v3834 = vunpack.c.l.s4 1983009808
    %v3835 = vunpack.c.0.s8 %v3834
    %v3836 = vlaneseq
    %v3837 = vshrl.u32 %v3836, 7
    %v3838 = vsub.s32 %v3835, %v3837
    %v3839 = vrot.slane %v3825, %v3838
    %v3840 = vcombine.low %v3661, %v3667
    %v3841 = vcombine.high %v3661, %v3667
    %v3843 = vunpack.c.l.s4 1983009808
    %v3844 = vunpack.c.0.s8 %v3843
    %v3845 = vlaneseq
    %v3846 = vshrl.u32 %v3845, 7
    %v3847 = vsub.s32 %v3844, %v3846
    %v3848 = vrot.slane %v3840, %v3847
    %v3850 = vunpack.c.l.s4 1983009808
    %v3851 = vunpack.c.0.s8 %v3850
    %v3852 = vlaneseq
    %v3853 = vshrl.u32 %v3852, 7
    %v3854 = vsub.s32 %v3851, %v3853
    %v3855 = vrot.slane %v3841, %v3854
    %v3856 = vcombine.low %v3664, %v3670
    %v3857 = vcombine.high %v3664, %v3670
    %v3859 = vunpack.c.l.s4 1983009808
    %v3860 = vunpack.c.0.s8 %v3859
    %v3861 = vlaneseq
    %v3862 = vshrl.u32 %v3861, 7
    %v3863 = vsub.s32 %v3860, %v3862
    %v3864 = vrot.slane %v3856, %v3863
    %v3866 = vunpack.c.l.s4 1983009808
    %v3867 = vunpack.c.0.s8 %v3866
    %v3868 = vlaneseq
    %v3869 = vshrl.u32 %v3868, 7
    %v3870 = vsub.s32 %v3867, %v3869
    %v3871 = vrot.slane %v3857, %v3870
    %v3872 = vcombine.low %v3816, %v3832
    %v3873 = vcombine.high %v3816, %v3832
    %v3875 = vunpack.c.l.s4 1934713408
    %v3876 = vunpack.c.0.s8 %v3875
    %v3877 = vlaneseq
    %v3878 = vshrl.u32 %v3877, 7
    %v3879 = vsub.s32 %v3876, %v3878
    %v3880 = vrot.slane %v3872, %v3879
    %v3882 = vunpack.c.l.s4 1934713408
    %v3883 = vunpack.c.0.s8 %v3882
    %v3884 = vlaneseq
    %v3885 = vshrl.u32 %v3884, 7
    %v3886 = vsub.s32 %v3883, %v3885
    %v3887 = vrot.slane %v3873, %v3886
    %v3888 = vcombine.low %v3823, %v3839
    %v3889 = vcombine.high %v3823, %v3839
    %v3891 = vunpack.c.l.s4 1934713408
    %v3892 = vunpack.c.0.s8 %v3891
    %v3893 = vlaneseq
    %v3894 = vshrl.u32 %v3893, 7
    %v3895 = vsub.s32 %v3892, %v3894
    %v3896 = vrot.slane %v3888, %v3895
    %v3898 = vunpack.c.l.s4 1934713408
    %v3899 = vunpack.c.0.s8 %v3898
    %v3900 = vlaneseq
    %v3901 = vshrl.u32 %v3900, 7
    %v3902 = vsub.s32 %v3899, %v3901
    %v3903 = vrot.slane %v3889, %v3902
    %v3904 = vcombine.low %v3848, %v3864
    %v3905 = vcombine.high %v3848, %v3864
    %v3907 = vunpack.c.l.s4 1934713408
    %v3908 = vunpack.c.0.s8 %v3907
    %v3909 = vlaneseq
    %v3910 = vshrl.u32 %v3909, 7
    %v3911 = vsub.s32 %v3908, %v3910
    %v3912 = vrot.slane %v3904, %v3911
    %v3914 = vunpack.c.l.s4 1934713408
    %v3915 = vunpack.c.0.s8 %v3914
    %v3916 = vlaneseq
    %v3917 = vshrl.u32 %v3916, 7
    %v3918 = vsub.s32 %v3915, %v3917
    %v3919 = vrot.slane %v3905, %v3918
    %v3920 = vcombine.low %v3855, %v3871
    %v3921 = vcombine.high %v3855, %v3871
    %v3923 = vunpack.c.l.s4 1934713408
    %v3924 = vunpack.c.0.s8 %v3923
    %v3925 = vlaneseq
    %v3926 = vshrl.u32 %v3925, 7
    %v3927 = vsub.s32 %v3924, %v3926
    %v3928 = vrot.slane %v3920, %v3927
    %v3930 = vunpack.c.l.s4 1934713408
    %v3931 = vunpack.c.0.s8 %v3930
    %v3932 = vlaneseq
    %v3933 = vshrl.u32 %v3932, 7
    %v3934 = vsub.s32 %v3931, %v3933
    %v3935 = vrot.slane %v3921, %v3934
    %v3936 = vcombine.low %v3880, %v3912
    %v3937 = vcombine.high %v3880, %v3912
    %v3938 = vcombine.low %v3887, %v3919
    %v3939 = vcombine.high %v3887, %v3919
    %v3940 = vcombine.low %v3896, %v3928
    %v3941 = vcombine.high %v3896, %v3928
    %v3942 = vcombine.low %v3903, %v3935
    %v3943 = vcombine.high %v3903, %v3935
    %v3944 = vsel %vm1170, %v3800, -inf
    %3945 = vmax.xlane.f32.xlu0 %v3944
    %v3946 = vpop.xlane.xlu0 %3945
    %v3947 = vsel %vm1170, %v3936, -inf
    %3948 = vmax.xlane.f32.xlu0 %v3947
    %v3949 = vpop.xlane.xlu0 %3948
    %v3950 = vsel %vm1170, %v3801, -inf
    %3951 = vmax.xlane.f32.xlu0 %v3950
    %v3952 = vpop.xlane.xlu0 %3951
    %v3953 = vsel %vm1170, %v3937, -inf
    %3954 = vmax.xlane.f32.xlu0 %v3953
    %v3955 = vpop.xlane.xlu0 %3954
    %v3956 = vsel %vm1170, %v3802, -inf
    %3957 = vmax.xlane.f32.xlu0 %v3956
    %v3958 = vpop.xlane.xlu0 %3957
    %v3959 = vsel %vm1170, %v3938, -inf
    %3960 = vmax.xlane.f32.xlu0 %v3959
    %v3961 = vpop.xlane.xlu0 %3960
    %v3962 = vsel %vm1170, %v3803, -inf
    %3963 = vmax.xlane.f32.xlu0 %v3962
    %v3964 = vpop.xlane.xlu0 %3963
    %v3965 = vsel %vm1170, %v3939, -inf
    %3966 = vmax.xlane.f32.xlu0 %v3965
    %v3967 = vpop.xlane.xlu0 %3966
    %v3968 = vsel %vm1170, %v3804, -inf
    %3969 = vmax.xlane.f32.xlu0 %v3968
    %v3970 = vpop.xlane.xlu0 %3969
    %v3971 = vsel %vm1170, %v3940, -inf
    %3972 = vmax.xlane.f32.xlu0 %v3971
    %v3973 = vpop.xlane.xlu0 %3972
    %v3974 = vsel %vm1170, %v3805, -inf
    %3975 = vmax.xlane.f32.xlu0 %v3974
    %v3976 = vpop.xlane.xlu0 %3975
    %v3977 = vsel %vm1170, %v3941, -inf
    %3978 = vmax.xlane.f32.xlu0 %v3977
    %v3979 = vpop.xlane.xlu0 %3978
    %v3980 = vsel %vm1170, %v3806, -inf
    %3981 = vmax.xlane.f32.xlu0 %v3980
    %v3982 = vpop.xlane.xlu0 %3981
    %v3983 = vsel %vm1170, %v3942, -inf
    %3984 = vmax.xlane.f32.xlu0 %v3983
    %v3985 = vpop.xlane.xlu0 %3984
    %v3986 = vsel %vm1170, %v3807, -inf
    %3987 = vmax.xlane.f32.xlu0 %v3986
    %v3988 = vpop.xlane.xlu0 %3987
    %v3989 = vsel %vm1170, %v3943, -inf
    %3990 = vmax.xlane.f32.xlu0 %v3989
    %v3991 = vpop.xlane.xlu0 %3990
    %v3992 = vsub.f32 %v3800, %v3946
    %v3993 = vsub.f32 %v3936, %v3949
    %v3994 = vsub.f32 %v3801, %v3952
    %v3995 = vsub.f32 %v3937, %v3955
    %v3996 = vsub.f32 %v3802, %v3958
    %v3997 = vsub.f32 %v3938, %v3961
    %v3998 = vsub.f32 %v3803, %v3964
    %v3999 = vsub.f32 %v3939, %v3967
    %v4000 = vsub.f32 %v3804, %v3970
    %v4001 = vsub.f32 %v3940, %v3973
    %v4002 = vsub.f32 %v3805, %v3976
    %v4003 = vsub.f32 %v3941, %v3979
    %v4004 = vsub.f32 %v3806, %v3982
    %v4005 = vsub.f32 %v3942, %v3985
    %v4006 = vsub.f32 %v3807, %v3988
    %v4007 = vsub.f32 %v3943, %v3991
    %v4008 = vmul.f32 %v3992, 1.442695
    %v4009 = vpow.pop %v4008
    %v4010 = vmul.f32 %v3993, 1.442695
    %v4011 = vpow.pop %v4010
    %v4012 = vmul.f32 %v3994, 1.442695
    %v4013 = vpow.pop %v4012
    %v4014 = vmul.f32 %v3995, 1.442695
    %v4015 = vpow.pop %v4014
    %v4016 = vmul.f32 %v3996, 1.442695
    %v4017 = vpow.pop %v4016
    %v4018 = vmul.f32 %v3997, 1.442695
    %v4019 = vpow.pop %v4018
    %v4020 = vmul.f32 %v3998, 1.442695
    %v4021 = vpow.pop %v4020
    %v4022 = vmul.f32 %v3999, 1.442695
    %v4023 = vpow.pop %v4022
    %v4024 = vmul.f32 %v4000, 1.442695
    %v4025 = vpow.pop %v4024
    %v4026 = vmul.f32 %v4001, 1.442695
    %v4027 = vpow.pop %v4026
    %v4028 = vmul.f32 %v4002, 1.442695
    %v4029 = vpow.pop %v4028
    %v4030 = vmul.f32 %v4003, 1.442695
    %v4031 = vpow.pop %v4030
    %v4032 = vmul.f32 %v4004, 1.442695
    %v4033 = vpow.pop %v4032
    %v4034 = vmul.f32 %v4005, 1.442695
    %v4035 = vpow.pop %v4034
    %v4036 = vmul.f32 %v4006, 1.442695
    %v4037 = vpow.pop %v4036
    %v4038 = vmul.f32 %v4007, 1.442695
    %v4039 = vpow.pop %v4038
    %v4040 = vsel %vm1170, %v4009, 0.0
    %4041 = vadd.xlane.f32.xlu0 %v4040
    %v4042 = vpop.xlane.xlu0 %4041
    %v4043 = vsel %vm1170, %v4011, 0.0
    %4044 = vadd.xlane.f32.xlu0 %v4043
    %v4045 = vpop.xlane.xlu0 %4044
    %v4046 = vsel %vm1170, %v4013, 0.0
    %4047 = vadd.xlane.f32.xlu0 %v4046
    %v4048 = vpop.xlane.xlu0 %4047
    %v4049 = vsel %vm1170, %v4015, 0.0
    %4050 = vadd.xlane.f32.xlu0 %v4049
    %v4051 = vpop.xlane.xlu0 %4050
    %v4052 = vsel %vm1170, %v4017, 0.0
    %4053 = vadd.xlane.f32.xlu0 %v4052
    %v4054 = vpop.xlane.xlu0 %4053
    %v4055 = vsel %vm1170, %v4019, 0.0
    %4056 = vadd.xlane.f32.xlu0 %v4055
    %v4057 = vpop.xlane.xlu0 %4056
    %v4058 = vsel %vm1170, %v4021, 0.0
    %4059 = vadd.xlane.f32.xlu0 %v4058
    %v4060 = vpop.xlane.xlu0 %4059
    %v4061 = vsel %vm1170, %v4023, 0.0
    %4062 = vadd.xlane.f32.xlu0 %v4061
    %v4063 = vpop.xlane.xlu0 %4062
    %v4064 = vsel %vm1170, %v4025, 0.0
    %4065 = vadd.xlane.f32.xlu0 %v4064
    %v4066 = vpop.xlane.xlu0 %4065
    %v4067 = vsel %vm1170, %v4027, 0.0
    %4068 = vadd.xlane.f32.xlu0 %v4067
    %v4069 = vpop.xlane.xlu0 %4068
    %v4070 = vsel %vm1170, %v4029, 0.0
    %4071 = vadd.xlane.f32.xlu0 %v4070
    %v4072 = vpop.xlane.xlu0 %4071
    %v4073 = vsel %vm1170, %v4031, 0.0
    %4074 = vadd.xlane.f32.xlu0 %v4073
    %v4075 = vpop.xlane.xlu0 %4074
    %v4076 = vsel %vm1170, %v4033, 0.0
    %4077 = vadd.xlane.f32.xlu0 %v4076
    %v4078 = vpop.xlane.xlu0 %4077
    %v4079 = vsel %vm1170, %v4035, 0.0
    %4080 = vadd.xlane.f32.xlu0 %v4079
    %v4081 = vpop.xlane.xlu0 %4080
    %v4082 = vsel %vm1170, %v4037, 0.0
    %4083 = vadd.xlane.f32.xlu0 %v4082
    %v4084 = vpop.xlane.xlu0 %4083
    %v4085 = vsel %vm1170, %v4039, 0.0
    %4086 = vadd.xlane.f32.xlu0 %v4085
    %v4087 = vpop.xlane.xlu0 %4086
    %v4088 = vrcp.pop %v4042
    %v4089 = vmul.f32 %v4009, %v4088
    %v4090 = vrcp.pop %v4045
    %v4091 = vmul.f32 %v4011, %v4090
    %v4092 = vrcp.pop %v4048
    %v4093 = vmul.f32 %v4013, %v4092
    %v4094 = vrcp.pop %v4051
    %v4095 = vmul.f32 %v4015, %v4094
    %v4096 = vrcp.pop %v4054
    %v4097 = vmul.f32 %v4017, %v4096
    %v4098 = vrcp.pop %v4057
    %v4099 = vmul.f32 %v4019, %v4098
    %v4100 = vrcp.pop %v4060
    %v4101 = vmul.f32 %v4021, %v4100
    %v4102 = vrcp.pop %v4063
    %v4103 = vmul.f32 %v4023, %v4102
    %v4104 = vrcp.pop %v4066
    %v4105 = vmul.f32 %v4025, %v4104
    %v4106 = vrcp.pop %v4069
    %v4107 = vmul.f32 %v4027, %v4106
    %v4108 = vrcp.pop %v4072
    %v4109 = vmul.f32 %v4029, %v4108
    %v4110 = vrcp.pop %v4075
    %v4111 = vmul.f32 %v4031, %v4110
    %v4112 = vrcp.pop %v4078
    %v4113 = vmul.f32 %v4033, %v4112
    %v4114 = vrcp.pop %v4081
    %v4115 = vmul.f32 %v4035, %v4114
    %v4116 = vrcp.pop %v4084
    %v4117 = vmul.f32 %v4037, %v4116
    %v4118 = vrcp.pop %v4087
    %v4119 = vmul.f32 %v4039, %v4118
    %v4120 = vcombine.low %v4089, %v4097
    %v4121 = vcombine.high %v4089, %v4097
    %v4123 = vunpack.c.l.s4 1983009808
    %v4124 = vunpack.c.0.s8 %v4123
    %v4125 = vlaneseq
    %v4126 = vshrl.u32 %v4125, 7
    %v4127 = vsub.s32 %v4124, %v4126
    %v4128 = vrot.slane %v4120, %v4127
    %v4130 = vunpack.c.l.s4 1983009808
    %v4131 = vunpack.c.0.s8 %v4130
    %v4132 = vlaneseq
    %v4133 = vshrl.u32 %v4132, 7
    %v4134 = vsub.s32 %v4131, %v4133
    %v4135 = vrot.slane %v4121, %v4134
    %v4136 = vcombine.low %v4093, %v4101
    %v4137 = vcombine.high %v4093, %v4101
    %v4139 = vunpack.c.l.s4 1983009808
    %v4140 = vunpack.c.0.s8 %v4139
    %v4141 = vlaneseq
    %v4142 = vshrl.u32 %v4141, 7
    %v4143 = vsub.s32 %v4140, %v4142
    %v4144 = vrot.slane %v4136, %v4143
    %v4146 = vunpack.c.l.s4 1983009808
    %v4147 = vunpack.c.0.s8 %v4146
    %v4148 = vlaneseq
    %v4149 = vshrl.u32 %v4148, 7
    %v4150 = vsub.s32 %v4147, %v4149
    %v4151 = vrot.slane %v4137, %v4150
    %v4152 = vcombine.low %v4105, %v4113
    %v4153 = vcombine.high %v4105, %v4113
    %v4155 = vunpack.c.l.s4 1983009808
    %v4156 = vunpack.c.0.s8 %v4155
    %v4157 = vlaneseq
    %v4158 = vshrl.u32 %v4157, 7
    %v4159 = vsub.s32 %v4156, %v4158
    %v4160 = vrot.slane %v4152, %v4159
    %v4162 = vunpack.c.l.s4 1983009808
    %v4163 = vunpack.c.0.s8 %v4162
    %v4164 = vlaneseq
    %v4165 = vshrl.u32 %v4164, 7
    %v4166 = vsub.s32 %v4163, %v4165
    %v4167 = vrot.slane %v4153, %v4166
    %v4168 = vcombine.low %v4109, %v4117
    %v4169 = vcombine.high %v4109, %v4117
    %v4171 = vunpack.c.l.s4 1983009808
    %v4172 = vunpack.c.0.s8 %v4171
    %v4173 = vlaneseq
    %v4174 = vshrl.u32 %v4173, 7
    %v4175 = vsub.s32 %v4172, %v4174
    %v4176 = vrot.slane %v4168, %v4175
    %v4178 = vunpack.c.l.s4 1983009808
    %v4179 = vunpack.c.0.s8 %v4178
    %v4180 = vlaneseq
    %v4181 = vshrl.u32 %v4180, 7
    %v4182 = vsub.s32 %v4179, %v4181
    %v4183 = vrot.slane %v4169, %v4182
    %v4184 = vcombine.low %v4128, %v4144
    %v4185 = vcombine.high %v4128, %v4144
    %v4187 = vunpack.c.l.s4 1934713408
    %v4188 = vunpack.c.0.s8 %v4187
    %v4189 = vlaneseq
    %v4190 = vshrl.u32 %v4189, 7
    %v4191 = vsub.s32 %v4188, %v4190
    %v4192 = vrot.slane %v4184, %v4191
    %v4194 = vunpack.c.l.s4 1934713408
    %v4195 = vunpack.c.0.s8 %v4194
    %v4196 = vlaneseq
    %v4197 = vshrl.u32 %v4196, 7
    %v4198 = vsub.s32 %v4195, %v4197
    %v4199 = vrot.slane %v4185, %v4198
    %v4200 = vcombine.low %v4135, %v4151
    %v4201 = vcombine.high %v4135, %v4151
    %v4203 = vunpack.c.l.s4 1934713408
    %v4204 = vunpack.c.0.s8 %v4203
    %v4205 = vlaneseq
    %v4206 = vshrl.u32 %v4205, 7
    %v4207 = vsub.s32 %v4204, %v4206
    %v4208 = vrot.slane %v4200, %v4207
    %v4210 = vunpack.c.l.s4 1934713408
    %v4211 = vunpack.c.0.s8 %v4210
    %v4212 = vlaneseq
    %v4213 = vshrl.u32 %v4212, 7
    %v4214 = vsub.s32 %v4211, %v4213
    %v4215 = vrot.slane %v4201, %v4214
    %v4216 = vcombine.low %v4160, %v4176
    %v4217 = vcombine.high %v4160, %v4176
    %v4219 = vunpack.c.l.s4 1934713408
    %v4220 = vunpack.c.0.s8 %v4219
    %v4221 = vlaneseq
    %v4222 = vshrl.u32 %v4221, 7
    %v4223 = vsub.s32 %v4220, %v4222
    %v4224 = vrot.slane %v4216, %v4223
    %v4226 = vunpack.c.l.s4 1934713408
    %v4227 = vunpack.c.0.s8 %v4226
    %v4228 = vlaneseq
    %v4229 = vshrl.u32 %v4228, 7
    %v4230 = vsub.s32 %v4227, %v4229
    %v4231 = vrot.slane %v4217, %v4230
    %v4232 = vcombine.low %v4167, %v4183
    %v4233 = vcombine.high %v4167, %v4183
    %v4235 = vunpack.c.l.s4 1934713408
    %v4236 = vunpack.c.0.s8 %v4235
    %v4237 = vlaneseq
    %v4238 = vshrl.u32 %v4237, 7
    %v4239 = vsub.s32 %v4236, %v4238
    %v4240 = vrot.slane %v4232, %v4239
    %v4242 = vunpack.c.l.s4 1934713408
    %v4243 = vunpack.c.0.s8 %v4242
    %v4244 = vlaneseq
    %v4245 = vshrl.u32 %v4244, 7
    %v4246 = vsub.s32 %v4243, %v4245
    %v4247 = vrot.slane %v4233, %v4246
    %v4248 = vcombine.low %v4192, %v4224
    %v4249 = vcombine.high %v4192, %v4224
    %v4250 = vcombine.low %v4199, %v4231
    %v4251 = vcombine.high %v4199, %v4231
    %v4252 = vcombine.low %v4208, %v4240
    %v4253 = vcombine.high %v4208, %v4240
    %v4254 = vcombine.low %v4215, %v4247
    %v4255 = vcombine.high %v4215, %v4247
    %v4256 = vcombine.low %v4091, %v4099
    %v4257 = vcombine.high %v4091, %v4099
    %v4259 = vunpack.c.l.s4 1983009808
    %v4260 = vunpack.c.0.s8 %v4259
    %v4261 = vlaneseq
    %v4262 = vshrl.u32 %v4261, 7
    %v4263 = vsub.s32 %v4260, %v4262
    %v4264 = vrot.slane %v4256, %v4263
    %v4266 = vunpack.c.l.s4 1983009808
    %v4267 = vunpack.c.0.s8 %v4266
    %v4268 = vlaneseq
    %v4269 = vshrl.u32 %v4268, 7
    %v4270 = vsub.s32 %v4267, %v4269
    %v4271 = vrot.slane %v4257, %v4270
    %v4272 = vcombine.low %v4095, %v4103
    %v4273 = vcombine.high %v4095, %v4103
    %v4275 = vunpack.c.l.s4 1983009808
    %v4276 = vunpack.c.0.s8 %v4275
    %v4277 = vlaneseq
    %v4278 = vshrl.u32 %v4277, 7
    %v4279 = vsub.s32 %v4276, %v4278
    %v4280 = vrot.slane %v4272, %v4279
    %v4282 = vunpack.c.l.s4 1983009808
    %v4283 = vunpack.c.0.s8 %v4282
    %v4284 = vlaneseq
    %v4285 = vshrl.u32 %v4284, 7
    %v4286 = vsub.s32 %v4283, %v4285
    %v4287 = vrot.slane %v4273, %v4286
    %v4288 = vcombine.low %v4107, %v4115
    %v4289 = vcombine.high %v4107, %v4115
    %v4291 = vunpack.c.l.s4 1983009808
    %v4292 = vunpack.c.0.s8 %v4291
    %v4293 = vlaneseq
    %v4294 = vshrl.u32 %v4293, 7
    %v4295 = vsub.s32 %v4292, %v4294
    %v4296 = vrot.slane %v4288, %v4295
    %v4298 = vunpack.c.l.s4 1983009808
    %v4299 = vunpack.c.0.s8 %v4298
    %v4300 = vlaneseq
    %v4301 = vshrl.u32 %v4300, 7
    %v4302 = vsub.s32 %v4299, %v4301
    %v4303 = vrot.slane %v4289, %v4302
    %v4304 = vcombine.low %v4111, %v4119
    %v4305 = vcombine.high %v4111, %v4119
    %v4307 = vunpack.c.l.s4 1983009808
    %v4308 = vunpack.c.0.s8 %v4307
    %v4309 = vlaneseq
    %v4310 = vshrl.u32 %v4309, 7
    %v4311 = vsub.s32 %v4308, %v4310
    %v4312 = vrot.slane %v4304, %v4311
    %v4314 = vunpack.c.l.s4 1983009808
    %v4315 = vunpack.c.0.s8 %v4314
    %v4316 = vlaneseq
    %v4317 = vshrl.u32 %v4316, 7
    %v4318 = vsub.s32 %v4315, %v4317
    %v4319 = vrot.slane %v4305, %v4318
    %v4320 = vcombine.low %v4264, %v4280
    %v4321 = vcombine.high %v4264, %v4280
    %v4323 = vunpack.c.l.s4 1934713408
    %v4324 = vunpack.c.0.s8 %v4323
    %v4325 = vlaneseq
    %v4326 = vshrl.u32 %v4325, 7
    %v4327 = vsub.s32 %v4324, %v4326
    %v4328 = vrot.slane %v4320, %v4327
    %v4330 = vunpack.c.l.s4 1934713408
    %v4331 = vunpack.c.0.s8 %v4330
    %v4332 = vlaneseq
    %v4333 = vshrl.u32 %v4332, 7
    %v4334 = vsub.s32 %v4331, %v4333
    %v4335 = vrot.slane %v4321, %v4334
    %v4336 = vcombine.low %v4271, %v4287
    %v4337 = vcombine.high %v4271, %v4287
    %v4339 = vunpack.c.l.s4 1934713408
    %v4340 = vunpack.c.0.s8 %v4339
    %v4341 = vlaneseq
    %v4342 = vshrl.u32 %v4341, 7
    %v4343 = vsub.s32 %v4340, %v4342
    %v4344 = vrot.slane %v4336, %v4343
    %v4346 = vunpack.c.l.s4 1934713408
    %v4347 = vunpack.c.0.s8 %v4346
    %v4348 = vlaneseq
    %v4349 = vshrl.u32 %v4348, 7
    %v4350 = vsub.s32 %v4347, %v4349
    %v4351 = vrot.slane %v4337, %v4350
    %v4352 = vcombine.low %v4296, %v4312
    %v4353 = vcombine.high %v4296, %v4312
    %v4355 = vunpack.c.l.s4 1934713408
    %v4356 = vunpack.c.0.s8 %v4355
    %v4357 = vlaneseq
    %v4358 = vshrl.u32 %v4357, 7
    %v4359 = vsub.s32 %v4356, %v4358
    %v4360 = vrot.slane %v4352, %v4359
    %v4362 = vunpack.c.l.s4 1934713408
    %v4363 = vunpack.c.0.s8 %v4362
    %v4364 = vlaneseq
    %v4365 = vshrl.u32 %v4364, 7
    %v4366 = vsub.s32 %v4363, %v4365
    %v4367 = vrot.slane %v4353, %v4366
    %v4368 = vcombine.low %v4303, %v4319
    %v4369 = vcombine.high %v4303, %v4319
    %v4371 = vunpack.c.l.s4 1934713408
    %v4372 = vunpack.c.0.s8 %v4371
    %v4373 = vlaneseq
    %v4374 = vshrl.u32 %v4373, 7
    %v4375 = vsub.s32 %v4372, %v4374
    %v4376 = vrot.slane %v4368, %v4375
    %v4378 = vunpack.c.l.s4 1934713408
    %v4379 = vunpack.c.0.s8 %v4378
    %v4380 = vlaneseq
    %v4381 = vshrl.u32 %v4380, 7
    %v4382 = vsub.s32 %v4379, %v4381
    %v4383 = vrot.slane %v4369, %v4382
    %v4384 = vcombine.low %v4328, %v4360
    %v4385 = vcombine.high %v4328, %v4360
    %v4386 = vcombine.low %v4335, %v4367
    %v4387 = vcombine.high %v4335, %v4367
    %v4388 = vcombine.low %v4344, %v4376
    %v4389 = vcombine.high %v4344, %v4376
    %v4390 = vcombine.low %v4351, %v4383
    %v4391 = vcombine.high %v4351, %v4383
    %4393 = vrot.lane.b32.xlu0 %v4249, 8
    %v4394 = vpop.permute.xlu0 %4393
    %4397 = vrot.lane.b32.xlu0 %v4250, 16
    %v4398 = vpop.permute.xlu0 %4397
    %4401 = vrot.lane.b32.xlu0 %v4251, 24
    %v4402 = vpop.permute.xlu0 %4401
    %4405 = vrot.lane.b32.xlu0 %v4252, 32
    %v4406 = vpop.permute.xlu0 %4405
    %4409 = vrot.lane.b32.xlu0 %v4253, 40
    %v4410 = vpop.permute.xlu0 %4409
    %4413 = vrot.lane.b32.xlu0 %v4254, 48
    %v4414 = vpop.permute.xlu0 %4413
    %4417 = vrot.lane.b32.xlu0 %v4255, 56
    %v4418 = vpop.permute.xlu0 %4417
    %4421 = vrot.lane.b32.xlu0 %v4384, 64
    %v4422 = vpop.permute.xlu0 %4421
    %4425 = vrot.lane.b32.xlu0 %v4385, 72
    %v4426 = vpop.permute.xlu0 %4425
    %4429 = vrot.lane.b32.xlu0 %v4386, 80
    %v4430 = vpop.permute.xlu0 %4429
    %4433 = vrot.lane.b32.xlu0 %v4387, 88
    %v4434 = vpop.permute.xlu0 %4433
    %4437 = vrot.lane.b32.xlu0 %v4388, 96
    %v4438 = vpop.permute.xlu0 %4437
    %4441 = vrot.lane.b32.xlu0 %v4389, 104
    %v4442 = vpop.permute.xlu0 %4441
    %4445 = vrot.lane.b32.xlu0 %v4390, 112
    %v4446 = vpop.permute.xlu0 %4445
    %4449 = vrot.lane.b32.xlu0 %v4391, 120
    %v4450 = vpop.permute.xlu0 %4449
    %v4452 = vsel %vm1170, %v4248, %v4394
    %v4453 = vsel %vm1187, %v4452, %v4398
    %v4454 = vsel %vm1204, %v4453, %v4402
    %v4455 = vsel %vm1221, %v4454, %v4406
    %v4456 = vsel %vm1238, %v4455, %v4410
    %v4457 = vsel %vm1255, %v4456, %v4414
    %v4458 = vsel %vm1272, %v4457, %v4418
    %v4459 = vsel %vm1289, %v4458, %v4422
    %v4460 = vsel %vm1306, %v4459, %v4426
    %v4461 = vsel %vm1323, %v4460, %v4430
    %v4462 = vsel %vm1340, %v4461, %v4434
    %v4463 = vsel %vm1357, %v4462, %v4438
    %v4464 = vsel %vm1374, %v4463, %v4442
    %v4465 = vsel %vm1391, %v4464, %v4446
    %v4466 = vsel %vm1408, %v4465, %v4450
    %4467 = vmatprep.subr.mxu0 0.0
    %4468 = vmatpush1.msra.mxu0 %v3555
    %4469 = vmatprep.subr.mxu0 0.0
    %4470 = vmatpush1.msra.mxu0 %v3554
    %4471 = vmatprep.subr.mxu0 0.0
    %4472 = vmatpush1.msra.mxu0 %v3553
    %4473 = vmatprep.subr.mxu0 0.0
    %4474 = vmatpush1.msra.mxu0 %v3552
    %4475 = vmatprep.subr.mxu0 0.0
    %4476 = vmatpush1.msra.mxu0 %v3551
    %4477 = vmatprep.subr.mxu0 0.0
    %4478 = vmatpush1.msra.mxu0 %v3550
    %4479 = vmatprep.subr.mxu0 0.0
    %4480 = vmatpush1.msra.mxu0 %v3549
    %4481 = vmatprep.subr.mxu0 0.0
    %4482 = vmatpush1.msra.mxu0 %v3548
    %4483 = vmatprep.subr.mxu0 0.0
    %4484 = vmatpush1.msra.mxu0 %v3547
    %4485 = vmatprep.subr.mxu0 0.0
    %4486 = vmatpush1.msra.mxu0 %v3546
    %4487 = vmatprep.subr.mxu0 0.0
    %4488 = vmatpush1.msra.mxu0 %v3545
    %4489 = vmatprep.subr.mxu0 0.0
    %4490 = vmatpush1.msra.mxu0 %v3544
    %4491 = vmatprep.subr.mxu0 0.0
    %4492 = vmatpush1.msra.mxu0 %v3543
    %4493 = vmatprep.subr.mxu0 0.0
    %4494 = vmatpush1.msra.mxu0 %v3542
    %4495 = vmatprep.subr.mxu0 0.0
    %4496 = vmatpush1.msra.mxu0 %v3541
    %4497 = vmatprep.subr.mxu0 0.0
    %4498 = vmatpush1.msra.mxu0 %v3540
    %4499 = vmatprep.subr.mxu0 0.0
    %4500 = vmatpush2.msra.mxu0 0.0
    %4501 = vmatprep.subr.mxu0 0.0
    %4502 = vmatpush2.msra.mxu0 0.0
    %4503 = vmatprep.subr.mxu0 0.0
    %4504 = vmatpush2.msra.mxu0 0.0
    %4505 = vmatprep.subr.mxu0 0.0
    %4506 = vmatpush2.msra.mxu0 0.0
    %4507 = vmatprep.subr.mxu0 0.0
    %4508 = vmatpush2.msra.mxu0 0.0
    %4509 = vmatprep.subr.mxu0 0.0
    %4510 = vmatpush2.msra.mxu0 0.0
    %4511 = vmatprep.subr.mxu0 0.0
    %4512 = vmatpush2.msra.mxu0 0.0
    %4513 = vmatprep.subr.mxu0 0.0
    %4514 = vmatpush2.msra.mxu0 0.0
    %4515 = vmatprep.subr.mxu0 0.0
    %4516 = vmatpush2.msra.mxu0 0.0
    %4517 = vmatprep.subr.mxu0 0.0
    %4518 = vmatpush2.msra.mxu0 0.0
    %4519 = vmatprep.subr.mxu0 0.0
    %4520 = vmatpush2.msra.mxu0 0.0
    %4521 = vmatprep.subr.mxu0 0.0
    %4522 = vmatpush2.msra.mxu0 0.0
    %4523 = vmatprep.subr.mxu0 0.0
    %4524 = vmatpush2.msra.mxu0 0.0
    %4525 = vmatprep.subr.mxu0 0.0
    %4526 = vmatpush2.msra.mxu0 0.0
    %4527 = vmatprep.subr.mxu0 0.0
    %4528 = vmatpush2.msra.mxu0 0.0
    %4529 = vmatprep.subr.mxu0 0.0
    %4530 = vmatpush2.msra.mxu0 0.0
    %4531 = vmatprep.mubr.f32.mxu0 0.0
    %4532 = vmatmul.mubr.f32.gmra.mxu0 %v4466
    %v4533 = vpop.f32.mrf.mxu0
    %v4534 = vadd.f32 0.0, %v4533
    %v4535 = vpop.f32.mrf.mxu0
    %4536 = vdwg.mxu0
    %4537 = vmatprep.subr.mxu0 0.0
    %4538 = vmatpush1.msra.mxu0 %v400
    %4539 = vmatprep.subr.mxu0 0.0
    %4540 = vmatpush1.msra.mxu0 %v399
    %4541 = vmatprep.subr.mxu0 0.0
    %4542 = vmatpush1.msra.mxu0 %v398
    %4543 = vmatprep.subr.mxu0 0.0
    %4544 = vmatpush1.msra.mxu0 %v397
    %4545 = vmatprep.subr.mxu0 0.0
    %4546 = vmatpush1.msra.mxu0 %v396
    %4547 = vmatprep.subr.mxu0 0.0
    %4548 = vmatpush1.msra.mxu0 %v395
    %4549 = vmatprep.subr.mxu0 0.0
    %4550 = vmatpush1.msra.mxu0 %v394
    %4551 = vmatprep.subr.mxu0 0.0
    %4552 = vmatpush1.msra.mxu0 %v393
    %4553 = vmatprep.subr.mxu0 0.0
    %4554 = vmatpush1.msra.mxu0 %v392
    %4555 = vmatprep.subr.mxu0 0.0
    %4556 = vmatpush1.msra.mxu0 %v391
    %4557 = vmatprep.subr.mxu0 0.0
    %4558 = vmatpush1.msra.mxu0 %v390
    %4559 = vmatprep.subr.mxu0 0.0
    %4560 = vmatpush1.msra.mxu0 %v389
    %4561 = vmatprep.subr.mxu0 0.0
    %4562 = vmatpush1.msra.mxu0 %v388
    %4563 = vmatprep.subr.mxu0 0.0
    %4564 = vmatpush1.msra.mxu0 %v387
    %4565 = vmatprep.subr.mxu0 0.0
    %4566 = vmatpush1.msra.mxu0 %v386
    %4567 = vmatprep.subr.mxu0 0.0
    %4568 = vmatpush1.msra.mxu0 %v385
    %4569 = vmatprep.subr.mxu0 0.0
    %4570 = vmatpush2.msra.mxu0 0.0
    %4571 = vmatprep.subr.mxu0 0.0
    %4572 = vmatpush2.msra.mxu0 0.0
    %4573 = vmatprep.subr.mxu0 0.0
    %4574 = vmatpush2.msra.mxu0 0.0
    %4575 = vmatprep.subr.mxu0 0.0
    %4576 = vmatpush2.msra.mxu0 0.0
    %4577 = vmatprep.subr.mxu0 0.0
    %4578 = vmatpush2.msra.mxu0 0.0
    %4579 = vmatprep.subr.mxu0 0.0
    %4580 = vmatpush2.msra.mxu0 0.0
    %4581 = vmatprep.subr.mxu0 0.0
    %4582 = vmatpush2.msra.mxu0 0.0
    %4583 = vmatprep.subr.mxu0 0.0
    %4584 = vmatpush2.msra.mxu0 0.0
    %4585 = vmatprep.subr.mxu0 0.0
    %4586 = vmatpush2.msra.mxu0 0.0
    %4587 = vmatprep.subr.mxu0 0.0
    %4588 = vmatpush2.msra.mxu0 0.0
    %4589 = vmatprep.subr.mxu0 0.0
    %4590 = vmatpush2.msra.mxu0 0.0
    %4591 = vmatprep.subr.mxu0 0.0
    %4592 = vmatpush2.msra.mxu0 0.0
    %4593 = vmatprep.subr.mxu0 0.0
    %4594 = vmatpush2.msra.mxu0 0.0
    %4595 = vmatprep.subr.mxu0 0.0
    %4596 = vmatpush2.msra.mxu0 0.0
    %4597 = vmatprep.subr.mxu0 0.0
    %4598 = vmatpush2.msra.mxu0 0.0
    %4599 = vmatprep.subr.mxu0 0.0
    %4600 = vmatpush2.msra.mxu0 0.0
    %4601 = vmatprep.mubr.f32.mxu0 0.0
    %4602 = vmatmul.mubr.f32.gmra.mxu0 %v4534
    %v4603 = vpop.f32.mrf.mxu0
    %v4604 = vadd.f32 %v2442, %v4603
    %v4605 = vpop.f32.mrf.mxu0
    %4606 = vdwg.mxu0
    %4607 = vst [vmem:[#allocation14 + $0x8] sm:$0xff] %v4604
    %4608 = vst [vmem:[#allocation15 - $0x6] sm:$0x80] %v4466
    // Predicated region
    $region66: #{tpu_custom_call.1} parent=1 // pred_check
      _
    $region67: #{tpu_custom_call.1} parent=1 // pred_check_branch
      %4610 = sbr.rel (0) target = $region69
    $region68: #{tpu_custom_call.1} parent=1 // pred_region
      %s4612 = ssub.s32 256, 256
      %4613 = vsyncadd [#allocation4], %s4612
      %s4614 = sshll.u32 [#allocation14], 4
      %s4615 = int_to_ptr.vmem [resolvable:$true] %s4614
      %4620 = dma.vmem_to_hbm [thread:$0]  %s4615, 256, %s9, [#allocation4], 128, 128, 8
    $region69: #{tpu_custom_call.1} parent=1 // pred_fallthru
      _
    // Predicated region
    $region70: #{tpu_custom_call.1} parent=1 // pred_check
      _
    $region71: #{tpu_custom_call.1} parent=1 // pred_check_branch
      %4622 = sbr.rel (0) target = $region73
    $region72: #{tpu_custom_call.1} parent=1 // pred_region
      %s4624 = ssub.s32 32, 32
      %4625 = vsyncadd [#allocation16], %s4624
      %s4627 = sshll.u32 [#allocation15], 4
      %s4628 = int_to_ptr.vmem [resolvable:$true] %s4627
      %4630 = dma.vmem_to_hbm [thread:$0]  %s4628, 32, %s10, [#allocation16]
    $region73: #{tpu_custom_call.1} parent=1 // pred_fallthru
      _
    // Predicated region
    $region74: #{tpu_custom_call.1} parent=1 // pred_check
      _
    $region75: #{tpu_custom_call.1} parent=1 // pred_check_branch
      %4632 = sbr.rel (0) target = $region77
    $region76: #{tpu_custom_call.1} parent=1 // pred_region
      %4633 = dma.done [#allocation4], 256
    $region77: #{tpu_custom_call.1} parent=1 // pred_fallthru
      _
    // Predicated region
    $region78: #{tpu_custom_call.1} parent=1 // pred_check
      _
    $region79: #{tpu_custom_call.1} parent=1 // pred_check_branch
      %4635 = sbr.rel (0) target = $region81
    $region80: #{tpu_custom_call.1} parent=1 // pred_region
      %4636 = dma.done [#allocation16], 32
    $region81: #{tpu_custom_call.1} parent=1 // pred_fallthru
      _
    %4637 = vsyncpa [#allocation3], 1
    %4638 = vsyncpa [#allocation6], 1
    %4639 = vsyncpa [#allocation9], 1
    %4640 = vsyncpa [#allocation12], 1
    %4641 = vsyncpa [#allocation4], 1
    %4642 = vsyncpa [#allocation16], 1

</llo_original>
